<compile_context>
chip_gen: v7x
topology: tpu7x:2x2x1
jax: 0.10.0
libtpu: 0.0.40
codegen_flags: <defaults>
</compile_context>

<pallas_src>
import numpy as np
import jax
import jax.numpy as jnp
from jax.experimental import pallas as pl
from jax.experimental.pallas import tpu as pltpu


# --------------------------------------------------------------------------
# Pallas kernel: SH direction encoding + dynamic MLP + TruncExp + rgb MLP
# All point-batched tensors are (C, N): channels on sublanes, points on lanes.
# --------------------------------------------------------------------------
def dct_ngp_kernel(d_ref, feat_ref, w1_ref, w2_ref, rw1_ref, rw2_ref, rw3_ref,
                   out_ref, in32_ref):
    # Shapes (TN = tile_n):
    #   d_ref    (3,  TN) f32   raw ray directions (transposed)
    #   feat_ref (32, TN) bf16  hash-grid features (transposed)
    #   w1_ref   (64, 32) bf16  dynamic MLP layer-1 weight^T
    #   w2_ref   (16, 64) bf16  dynamic MLP layer-2 weight^T
    #   rw1_ref  (64, 32) bf16  rgb MLP layer-1 weight^T (input = cat(sh, h))
    #   rw2_ref  (64, 64) bf16  rgb MLP layer-2 weight^T
    #   rw3_ref  (8,  64) bf16  rgb MLP output weight^T, zero-padded 3->8 rows
    #   out_ref  (4,  TN) f32   row 0 = sigma_dynamic, rows 1:4 = rgb_dynamic
    #   in32_ref (32, TN) f32   scratch: rows 0:16 = SH basis, rows 16:32 = h
    d = d_ref[...]                                   # (3, TN) f32
    x = d[0:1, :]
    y = d[1:2, :]
    z = d[2:3, :]

    # d = d / ||d||  (no eps; identical to torch.norm(d, dim=1, keepdim=True))
    inv_n = jax.lax.rsqrt(x * x + y * y + z * z)     # EUP rsqrt
    x = x * inv_n
    y = y * inv_n
    z = z * inv_n

    xy, xz, yz = x * y, x * z, y * z
    x2, y2, z2 = x * x, y * y, z * z

    # SphericalHarmonics degree 4 (tcnn remaps (d+1)/2 back to d internally).
    # Rows are written straight into the merged rgb-layer-1 input scratch —
    # no 16-way sublane concatenate and no separate materialized SH temp.
    in32_ref[0:1, :] = jnp.full_like(x, 0.28209479177387814)
    in32_ref[1:2, :] = -0.48860251190291987 * y
    in32_ref[2:3, :] = 0.48860251190291987 * z
    in32_ref[3:4, :] = -0.48860251190291987 * x
    in32_ref[4:5, :] = 1.0925484305920792 * xy
    in32_ref[5:6, :] = -1.0925484305920792 * yz
    in32_ref[6:7, :] = 0.94617469575755997 * z2 - 0.31539156525251999
    in32_ref[7:8, :] = -1.0925484305920792 * xz
    in32_ref[8:9, :] = 0.54627421529603959 * (x2 - y2)
    in32_ref[9:10, :] = 0.59004358992664352 * y * (-3.0 * x2 + y2)
    in32_ref[10:11, :] = 2.8906114426405538 * xy * z
    in32_ref[11:12, :] = 0.45704579946446572 * y * (1.0 - 5.0 * z2)
    in32_ref[12:13, :] = 0.3731763325901154 * z * (5.0 * z2 - 3.0)
    in32_ref[13:14, :] = 0.45704579946446572 * x * (1.0 - 5.0 * z2)
    in32_ref[14:15, :] = 1.4453057213202769 * z * (x2 - y2)
    in32_ref[15:16, :] = 0.59004358992664352 * x * (-x2 + 3.0 * y2)

    # dynamic feature MLP: 32 -> 64 (ReLU) -> 16   (tcnn FullyFusedMLP, no bias)
    f = feat_ref[...]                                # (32, TN) bf16
    h1 = jnp.maximum(
        jnp.dot(w1_ref[...], f, preferred_element_type=jnp.float32), 0.0)
    h = jnp.dot(w2_ref[...], h1.astype(jnp.bfloat16),
                preferred_element_type=jnp.float32)  # (16, TN) f32

    # sigma_dynamic = TruncExp(h[:, 0])  (forward of TruncExp is plain exp)
    out_ref[0:1, :] = jnp.exp(h[0:1, :])

    # second half of the merged rgb-layer-1 input
    in32_ref[16:32, :] = h

    # rgb MLP on cat(sh, h): 32 -> 64 (ReLU) -> 64 (ReLU) -> 3 (Sigmoid)
    sh_h = in32_ref[...].astype(jnp.bfloat16)        # (32, TN), single cast pass
    r = jnp.maximum(
        jnp.dot(rw1_ref[...], sh_h, preferred_element_type=jnp.float32), 0.0)
    r = jnp.maximum(
        jnp.dot(rw2_ref[...], r.astype(jnp.bfloat16),
                preferred_element_type=jnp.float32), 0.0)
    rgb8 = jnp.dot(rw3_ref[...], r.astype(jnp.bfloat16),
                   preferred_element_type=jnp.float32)      # (8, TN)
    out_ref[1:4, :] = jax.nn.sigmoid(rgb8[0:3, :])          # (3, TN)


# --------------------------------------------------------------------------
# Plain-JAX glue: multi-resolution 4D hash-grid encoding (L=16, F=2, 2^19).
# Produces features directly in the kernel's transposed (32, N) layout and
# uses ONE batched gather per level (16 corners at once).
# --------------------------------------------------------------------------
_HASH_PRIMES = np.array([1, 2654435761, 805459861, 3674653429], dtype=np.uint32)
_CORNER_BITS = np.array([[(c >> k) & 1 for k in range(4)] for c in range(16)],
                        dtype=np.uint32)                       # (16, 4)


def hash_encode_4d(xt, tables, level_scales):
    """xt: (N, 4) in [0, 1]; tables: (L, F, T); returns (L*F, N) features."""
    n = xt.shape[0]
    L, F, T = tables.shape
    primes = jnp.asarray(_HASH_PRIMES)                 # (4,) uint32
    bits = jnp.asarray(_CORNER_BITS)                   # (16, 4) uint32
    bits_f = bits.astype(jnp.float32)
    feats = []
    for lvl in range(L):
        s = float(level_scales[lvl])
        pos = xt * s + 0.5
        grid = jnp.floor(pos)
        frac = pos - grid                              # (N, 4)
        grid_u = grid.astype(jnp.uint32)               # (N, 4)

        cg = grid_u[None, :, :] + bits[:, None, :]     # (16, N, 4)
        prod = cg * primes[None, None, :]              # (16, N, 4) uint32 wrap
        hidx = prod[..., 0] ^ prod[..., 1] ^ prod[..., 2] ^ prod[..., 3]
        hidx = (hidx % jnp.uint32(T)).astype(jnp.int32)        # (16, N)

        w = jnp.prod(
            jnp.where(bits_f[:, None, :] == 1.0,
                      frac[None, :, :], 1.0 - frac[None, :, :]),
            axis=-1)                                   # (16, N) quadrilinear wts

        gathered = jnp.take(tables[lvl], hidx.reshape(-1), axis=1)
        gathered = gathered.reshape(F, 16, n)          # (F, 16, N)
        feats.append(jnp.sum(w[None, :, :] * gathered, axis=1))  # (F, N)
    return jnp.concatenate(feats, axis=0)              # (32, N)


# --------------------------------------------------------------------------
# Model wrapper
# --------------------------------------------------------------------------
def init_params(key, scale=0.5):
    L, F, log2_T, N_min = 16, 2, 19, 16
    b = np.exp(np.log(2048 * scale / N_min) / (L - 1))
    level_scales = [N_min * (b ** l) - 1.0 for l in range(L)]

    ks = jax.random.split(key, 6)

    def lin(k, fan_in, fan_out):
        return (jax.random.normal(k, (fan_in, fan_out), jnp.float32)
                / np.sqrt(fan_in))

    w1 = lin(ks[1], 32, 64)      # dynamic MLP layer 1
    rw1 = lin(ks[2], 32, 64)     # rgb MLP layer 1 (input = cat(sh, h))
    w2 = lin(ks[3], 64, 16)      # dynamic MLP layer 2
    rw2 = lin(ks[4], 64, 64)     # rgb MLP layer 2
    rw3 = lin(ks[5], 64, 3)      # rgb MLP output layer

    # zero-pad rgb output weight to 8 rows for an aligned sublane extent;
    # the padded rows are sliced away in-kernel.
    rw3_t = jnp.zeros((8, 64), jnp.float32).at[:3].set(rw3.T)

    params = {
        "scale": scale,
        # tables stored (L, F, T): per-level gather yields (F, N) directly.
        "hash_tables": (jax.random.uniform(ks[0], (L, F, 2 ** log2_T),
                                           jnp.float32, -1.0, 1.0) * 1e-2),
        "hash_scales": level_scales,
        # kernel-ready transposed bf16 weights (batch-in-lanes layout)
        "w1_t": w1.T.astype(jnp.bfloat16),             # (64, 32)
        "w2_t": w2.T.astype(jnp.bfloat16),             # (16, 64)
        "rw1_t": rw1.T.astype(jnp.bfloat16),           # (64, 32) merged layer 1
        "rw2_t": rw2.T.astype(jnp.bfloat16),           # (64, 64)
        "rw3_t": rw3_t.astype(jnp.bfloat16),           # (8, 64)
    }
    return params


def _round_up(v, m):
    return ((v + m - 1) // m) * m


def _pick_tile_n(n, preferred=4096):
    # Large tiles amortize the ~0.35 us/grid-step pipeline overhead, but keep
    # the grid at >=2 steps whenever possible so v7x's two TensorCores both
    # get work under dimension_semantics=("parallel",).
    half = _round_up(max(1, (n + 1) // 2), 128)
    return max(128, min(preferred, half))


def dct_ngp_forward(params, x, d, times, tile_n=None):
    """x: (N,3) in [-scale, scale]; d: (N,3); times: (N,1) or (1,1) in [-1,1]."""
    n = x.shape[0]
    if times.shape[0] == 1:
        times = jnp.broadcast_to(times, (n, 1))
    scale = params["scale"]

    # normalize inputs exactly as dynamic_density does
    x_norm = (x - (-scale)) / (scale - (-scale))
    t_norm = (times - (-1.0)) / (1.0 - (-1.0))
    xt = jnp.concatenate([x_norm, t_norm], axis=-1)

    # hash-grid features, produced directly in (32, N) kernel layout, bf16
    feat_t = hash_encode_4d(xt, params["hash_tables"],
                            params["hash_scales"]).astype(jnp.bfloat16)

    if tile_n is None:
        tile_n = _pick_tile_n(n)
    n_pad = _round_up(n, tile_n)
    pad = n_pad - n

    d_t = d.astype(jnp.float32).T                      # (3, N)
    if pad:
        # pad directions with ones so rsqrt stays finite on padded lanes
        d_t = jnp.pad(d_t, ((0, 0), (0, pad)), constant_values=1.0)
        feat_t = jnp.pad(feat_t, ((0, 0), (0, pad)))

    grid = (n_pad // tile_n,)
    out = pl.pallas_call(
        dct_ngp_kernel,
        out_shape=jax.ShapeDtypeStruct((4, n_pad), jnp.float32),
        grid=grid,
        in_specs=[
            pl.BlockSpec((3, tile_n), lambda i: (0, i)),     # d^T
            pl.BlockSpec((32, tile_n), lambda i: (0, i)),    # feat^T
            pl.BlockSpec((64, 32), lambda i: (0, 0)),        # w1^T
            pl.BlockSpec((16, 64), lambda i: (0, 0)),        # w2^T
            pl.BlockSpec((64, 32), lambda i: (0, 0)),        # rw1^T (merged)
            pl.BlockSpec((64, 64), lambda i: (0, 0)),        # rw2^T
            pl.BlockSpec((8, 64), lambda i: (0, 0)),         # rw3^T (padded)
        ],
        out_specs=pl.BlockSpec((4, tile_n), lambda i: (0, i)),
        scratch_shapes=[pltpu.VMEM((32, tile_n), jnp.float32)],
        compiler_params=pltpu.CompilerParams(
            dimension_semantics=("parallel",)),
    )(d_t, feat_t, params["w1_t"], params["w2_t"], params["rw1_t"],
      params["rw2_t"], params["rw3_t"])

    sigma = out[0, :n]                                 # (N,)
    rgb = out[1:4, :n].T                               # (N, 3)
    extra = {
        "rgb_dynamic": rgb[:, :3],
        "sigma_dynamic": sigma,
        "static_weight": jnp.zeros((1,), jnp.float32),
        "static_weight_average": jnp.zeros((1,), jnp.float32),
    }
    return sigma, rgb, extra


if __name__ == "__main__":
    key = jax.random.PRNGKey(0)
    k_p, k_x, k_d, k_t = jax.random.split(key, 4)

    scale = 0.5
    N = 2000                       # not a tile multiple -> exercises padding
    params = init_params(k_p, scale=scale)

    x = jax.random.uniform(k_x, (N, 3), jnp.float32, -scale, scale)
    d = jax.random.normal(k_d, (N, 3), jnp.float32)
    times = jax.random.uniform(k_t, (N, 1), jnp.float32, -1.0, 1.0)

    sigma, rgb, extra = dct_ngp_forward(params, x, d, times)
    jax.block_until_ready((sigma, rgb))

    assert sigma.shape == (N,)
    assert rgb.shape == (N, 3)
    assert bool(jnp.all(jnp.isfinite(sigma))) and bool(jnp.all(jnp.isfinite(rgb)))
    assert bool(jnp.all((rgb >= 0.0) & (rgb <= 1.0)))
    print("KERNEL_OK")
</pallas_src>

<mosaic_0001>
module attributes {stable_mosaic.version = 11 : i64} {
  func.func @dct_ngp_kernel(%arg0: i32, %arg1: memref<3x1024xf32, #tpu.memory_space<vmem>>, %arg2: memref<32x1024xbf16, #tpu.memory_space<vmem>>, %arg3: memref<64x32xbf16, #tpu.memory_space<vmem>>, %arg4: memref<16x64xbf16, #tpu.memory_space<vmem>>, %arg5: memref<64x32xbf16, #tpu.memory_space<vmem>>, %arg6: memref<64x64xbf16, #tpu.memory_space<vmem>>, %arg7: memref<8x64xbf16, #tpu.memory_space<vmem>>, %arg8: memref<4x1024xf32, #tpu.memory_space<vmem>>, %arg9: memref<32x1024xf32, #tpu.memory_space<vmem>>) attributes {dimension_semantics = [#tpu.dimension_semantics<parallel>], iteration_bounds = array<i64: 2>, scalar_prefetch = 0 : i64, scratch_operands = 1 : i64, tpu.core_type = #tpu.core_type<tc>, window_params = [{transform_indices = @transform_0, window_bounds = array<i64: 3, 1024>}, {transform_indices = @transform_1, window_bounds = array<i64: 32, 1024>}, {pipeline_mode = #tpu.pipeline_mode<synchronous>, transform_indices = @transform_2, window_bounds = array<i64: 64, 32>}, {pipeline_mode = #tpu.pipeline_mode<synchronous>, transform_indices = @transform_3, window_bounds = array<i64: 16, 64>}, {pipeline_mode = #tpu.pipeline_mode<synchronous>, transform_indices = @transform_4, window_bounds = array<i64: 64, 32>}, {pipeline_mode = #tpu.pipeline_mode<synchronous>, transform_indices = @transform_5, window_bounds = array<i64: 64, 64>}, {pipeline_mode = #tpu.pipeline_mode<synchronous>, transform_indices = @transform_6, window_bounds = array<i64: 8, 64>}, {transform_indices = @transform_7, window_bounds = array<i64: 4, 1024>}]} {
    %c0 = arith.constant 0 : index
    %c0_0 = arith.constant 0 : index
    %0 = vector.load %arg1[%c0, %c0_0] : memref<3x1024xf32, #tpu.memory_space<vmem>>, vector<3x1024xf32>
    %1 = vector.extract_strided_slice %0 {offsets = [0, 0], sizes = [1, 1024], strides = [1, 1]} : vector<3x1024xf32> to vector<1x1024xf32>
    %2 = vector.extract_strided_slice %0 {offsets = [1, 0], sizes = [1, 1024], strides = [1, 1]} : vector<3x1024xf32> to vector<1x1024xf32>
    %3 = vector.extract_strided_slice %0 {offsets = [2, 0], sizes = [1, 1024], strides = [1, 1]} : vector<3x1024xf32> to vector<1x1024xf32>
    %4 = arith.mulf %1, %1 : vector<1x1024xf32>
    %5 = arith.mulf %2, %2 : vector<1x1024xf32>
    %6 = arith.addf %4, %5 : vector<1x1024xf32>
    %7 = arith.mulf %3, %3 : vector<1x1024xf32>
    %8 = arith.addf %6, %7 : vector<1x1024xf32>
    %9 = math.rsqrt %8 : vector<1x1024xf32>
    %10 = arith.mulf %1, %9 : vector<1x1024xf32>
    %11 = arith.mulf %2, %9 : vector<1x1024xf32>
    %12 = arith.mulf %3, %9 : vector<1x1024xf32>
    %13 = arith.mulf %10, %11 : vector<1x1024xf32>
    %14 = arith.mulf %10, %12 : vector<1x1024xf32>
    %15 = arith.mulf %11, %12 : vector<1x1024xf32>
    %16 = arith.mulf %10, %10 : vector<1x1024xf32>
    %17 = arith.mulf %11, %11 : vector<1x1024xf32>
    %18 = arith.mulf %12, %12 : vector<1x1024xf32>
    %cst = arith.constant 0.282094806 : f32
    %19 = vector.broadcast %cst : f32 to vector<1x1024xf32>
    %c0_1 = arith.constant 0 : index
    %c0_2 = arith.constant 0 : index
    %20 = vector.load %arg9[%c0_1, %c0_2] : memref<32x1024xf32, #tpu.memory_space<vmem>>, vector<1x1024xf32>
    tpu.vector_store %arg9[%c0_1, %c0_2], %19 {strides = array<i32>} : memref<32x1024xf32, #tpu.memory_space<vmem>>, vector<1x1024xf32>,
    %cst_3 = arith.constant -0.488602519 : f32
    %21 = vector.broadcast %cst_3 : f32 to vector<1x1024xf32>
    %22 = arith.mulf %21, %11 : vector<1x1024xf32>
    %c1 = arith.constant 1 : index
    %c0_4 = arith.constant 0 : index
    %23 = vector.load %arg9[%c1, %c0_4] : memref<32x1024xf32, #tpu.memory_space<vmem>>, vector<1x1024xf32>
    tpu.vector_store %arg9[%c1, %c0_4], %22 {strides = array<i32>} : memref<32x1024xf32, #tpu.memory_space<vmem>>, vector<1x1024xf32>,
    %cst_5 = arith.constant 0.488602519 : f32
    %24 = vector.broadcast %cst_5 : f32 to vector<1x1024xf32>
    %25 = arith.mulf %24, %12 : vector<1x1024xf32>
    %c2 = arith.constant 2 : index
    %c0_6 = arith.constant 0 : index
    %26 = vector.load %arg9[%c2, %c0_6] : memref<32x1024xf32, #tpu.memory_space<vmem>>, vector<1x1024xf32>
    tpu.vector_store %arg9[%c2, %c0_6], %25 {strides = array<i32>} : memref<32x1024xf32, #tpu.memory_space<vmem>>, vector<1x1024xf32>,
    %cst_7 = arith.constant -0.488602519 : f32
    %27 = vector.broadcast %cst_7 : f32 to vector<1x1024xf32>
    %28 = arith.mulf %27, %10 : vector<1x1024xf32>
    %c3 = arith.constant 3 : index
    %c0_8 = arith.constant 0 : index
    %29 = vector.load %arg9[%c3, %c0_8] : memref<32x1024xf32, #tpu.memory_space<vmem>>, vector<1x1024xf32>
    tpu.vector_store %arg9[%c3, %c0_8], %28 {strides = array<i32>} : memref<32x1024xf32, #tpu.memory_space<vmem>>, vector<1x1024xf32>,
    %cst_9 = arith.constant 1.09254849 : f32
    %30 = vector.broadcast %cst_9 : f32 to vector<1x1024xf32>
    %31 = arith.mulf %30, %13 : vector<1x1024xf32>
    %c4 = arith.constant 4 : index
    %c0_10 = arith.constant 0 : index
    %32 = vector.load %arg9[%c4, %c0_10] : memref<32x1024xf32, #tpu.memory_space<vmem>>, vector<1x1024xf32>
    tpu.vector_store %arg9[%c4, %c0_10], %31 {strides = array<i32>} : memref<32x1024xf32, #tpu.memory_space<vmem>>, vector<1x1024xf32>,
    %cst_11 = arith.constant -1.09254849 : f32
    %33 = vector.broadcast %cst_11 : f32 to vector<1x1024xf32>
    %34 = arith.mulf %33, %15 : vector<1x1024xf32>
    %c5 = arith.constant 5 : index
    %c0_12 = arith.constant 0 : index
    %35 = vector.load %arg9[%c5, %c0_12] : memref<32x1024xf32, #tpu.memory_space<vmem>>, vector<1x1024xf32>
    tpu.vector_store %arg9[%c5, %c0_12], %34 {strides = array<i32>} : memref<32x1024xf32, #tpu.memory_space<vmem>>, vector<1x1024xf32>,
    %cst_13 = arith.constant 0.946174681 : f32
    %36 = vector.broadcast %cst_13 : f32 to vector<1x1024xf32>
    %37 = arith.mulf %36, %18 : vector<1x1024xf32>
    %cst_14 = arith.constant 0.31539157 : f32
    %38 = vector.broadcast %cst_14 : f32 to vector<1x1024xf32>
    %39 = arith.subf %37, %38 : vector<1x1024xf32>
    %c6 = arith.constant 6 : index
    %c0_15 = arith.constant 0 : index
    %40 = vector.load %arg9[%c6, %c0_15] : memref<32x1024xf32, #tpu.memory_space<vmem>>, vector<1x1024xf32>
    tpu.vector_store %arg9[%c6, %c0_15], %39 {strides = array<i32>} : memref<32x1024xf32, #tpu.memory_space<vmem>>, vector<1x1024xf32>,
    %cst_16 = arith.constant -1.09254849 : f32
    %41 = vector.broadcast %cst_16 : f32 to vector<1x1024xf32>
    %42 = arith.mulf %41, %14 : vector<1x1024xf32>
    %c7 = arith.constant 7 : index
    %c0_17 = arith.constant 0 : index
    %43 = vector.load %arg9[%c7, %c0_17] : memref<32x1024xf32, #tpu.memory_space<vmem>>, vector<1x1024xf32>
    tpu.vector_store %arg9[%c7, %c0_17], %42 {strides = array<i32>} : memref<32x1024xf32, #tpu.memory_space<vmem>>, vector<1x1024xf32>,
    %44 = arith.subf %16, %17 : vector<1x1024xf32>
    %cst_18 = arith.constant 0.546274245 : f32
    %45 = vector.broadcast %cst_18 : f32 to vector<1x1024xf32>
    %46 = arith.mulf %45, %44 : vector<1x1024xf32>
    %c8 = arith.constant 8 : index
    %c0_19 = arith.constant 0 : index
    %47 = vector.load %arg9[%c8, %c0_19] : memref<32x1024xf32, #tpu.memory_space<vmem>>, vector<1x1024xf32>
    tpu.vector_store %arg9[%c8, %c0_19], %46 {strides = array<i32>} : memref<32x1024xf32, #tpu.memory_space<vmem>>, vector<1x1024xf32>,
    %cst_20 = arith.constant 0.590043604 : f32
    %48 = vector.broadcast %cst_20 : f32 to vector<1x1024xf32>
    %49 = arith.mulf %48, %11 : vector<1x1024xf32>
    %cst_21 = arith.constant -3.000000e+00 : f32
    %50 = vector.broadcast %cst_21 : f32 to vector<1x1024xf32>
    %51 = arith.mulf %50, %16 : vector<1x1024xf32>
    %52 = arith.addf %51, %17 : vector<1x1024xf32>
    %53 = arith.mulf %49, %52 : vector<1x1024xf32>
    %c9 = arith.constant 9 : index
    %c0_22 = arith.constant 0 : index
    %54 = vector.load %arg9[%c9, %c0_22] : memref<32x1024xf32, #tpu.memory_space<vmem>>, vector<1x1024xf32>
    tpu.vector_store %arg9[%c9, %c0_22], %53 {strides = array<i32>} : memref<32x1024xf32, #tpu.memory_space<vmem>>, vector<1x1024xf32>,
    %cst_23 = arith.constant 2.89061141 : f32
    %55 = vector.broadcast %cst_23 : f32 to vector<1x1024xf32>
    %56 = arith.mulf %55, %13 : vector<1x1024xf32>
    %57 = arith.mulf %56, %12 : vector<1x1024xf32>
    %c10 = arith.constant 10 : index
    %c0_24 = arith.constant 0 : index
    %58 = vector.load %arg9[%c10, %c0_24] : memref<32x1024xf32, #tpu.memory_space<vmem>>, vector<1x1024xf32>
    tpu.vector_store %arg9[%c10, %c0_24], %57 {strides = array<i32>} : memref<32x1024xf32, #tpu.memory_space<vmem>>, vector<1x1024xf32>,
    %cst_25 = arith.constant 0.457045794 : f32
    %59 = vector.broadcast %cst_25 : f32 to vector<1x1024xf32>
    %60 = arith.mulf %59, %11 : vector<1x1024xf32>
    %cst_26 = arith.constant 5.000000e+00 : f32
    %61 = vector.broadcast %cst_26 : f32 to vector<1x1024xf32>
    %62 = arith.mulf %61, %18 : vector<1x1024xf32>
    %cst_27 = arith.constant 1.000000e+00 : f32
    %63 = vector.broadcast %cst_27 : f32 to vector<1x1024xf32>
    %64 = arith.subf %63, %62 : vector<1x1024xf32>
    %65 = arith.mulf %60, %64 : vector<1x1024xf32>
    %c11 = arith.constant 11 : index
    %c0_28 = arith.constant 0 : index
    %66 = vector.load %arg9[%c11, %c0_28] : memref<32x1024xf32, #tpu.memory_space<vmem>>, vector<1x1024xf32>
    tpu.vector_store %arg9[%c11, %c0_28], %65 {strides = array<i32>} : memref<32x1024xf32, #tpu.memory_space<vmem>>, vector<1x1024xf32>,
    %cst_29 = arith.constant 0.373176336 : f32
    %67 = vector.broadcast %cst_29 : f32 to vector<1x1024xf32>
    %68 = arith.mulf %67, %12 : vector<1x1024xf32>
    %cst_30 = arith.constant 5.000000e+00 : f32
    %69 = vector.broadcast %cst_30 : f32 to vector<1x1024xf32>
    %70 = arith.mulf %69, %18 : vector<1x1024xf32>
    %cst_31 = arith.constant 3.000000e+00 : f32
    %71 = vector.broadcast %cst_31 : f32 to vector<1x1024xf32>
    %72 = arith.subf %70, %71 : vector<1x1024xf32>
    %73 = arith.mulf %68, %72 : vector<1x1024xf32>
    %c12 = arith.constant 12 : index
    %c0_32 = arith.constant 0 : index
    %74 = vector.load %arg9[%c12, %c0_32] : memref<32x1024xf32, #tpu.memory_space<vmem>>, vector<1x1024xf32>
    tpu.vector_store %arg9[%c12, %c0_32], %73 {strides = array<i32>} : memref<32x1024xf32, #tpu.memory_space<vmem>>, vector<1x1024xf32>,
    %cst_33 = arith.constant 0.457045794 : f32
    %75 = vector.broadcast %cst_33 : f32 to vector<1x1024xf32>
    %76 = arith.mulf %75, %10 : vector<1x1024xf32>
    %cst_34 = arith.constant 5.000000e+00 : f32
    %77 = vector.broadcast %cst_34 : f32 to vector<1x1024xf32>
    %78 = arith.mulf %77, %18 : vector<1x1024xf32>
    %cst_35 = arith.constant 1.000000e+00 : f32
    %79 = vector.broadcast %cst_35 : f32 to vector<1x1024xf32>
    %80 = arith.subf %79, %78 : vector<1x1024xf32>
    %81 = arith.mulf %76, %80 : vector<1x1024xf32>
    %c13 = arith.constant 13 : index
    %c0_36 = arith.constant 0 : index
    %82 = vector.load %arg9[%c13, %c0_36] : memref<32x1024xf32, #tpu.memory_space<vmem>>, vector<1x1024xf32>
    tpu.vector_store %arg9[%c13, %c0_36], %81 {strides = array<i32>} : memref<32x1024xf32, #tpu.memory_space<vmem>>, vector<1x1024xf32>,
    %cst_37 = arith.constant 1.44530571 : f32
    %83 = vector.broadcast %cst_37 : f32 to vector<1x1024xf32>
    %84 = arith.mulf %83, %12 : vector<1x1024xf32>
    %85 = arith.subf %16, %17 : vector<1x1024xf32>
    %86 = arith.mulf %84, %85 : vector<1x1024xf32>
    %c14 = arith.constant 14 : index
    %c0_38 = arith.constant 0 : index
    %87 = vector.load %arg9[%c14, %c0_38] : memref<32x1024xf32, #tpu.memory_space<vmem>>, vector<1x1024xf32>
    tpu.vector_store %arg9[%c14, %c0_38], %86 {strides = array<i32>} : memref<32x1024xf32, #tpu.memory_space<vmem>>, vector<1x1024xf32>,
    %cst_39 = arith.constant 0.590043604 : f32
    %88 = vector.broadcast %cst_39 : f32 to vector<1x1024xf32>
    %89 = arith.mulf %88, %10 : vector<1x1024xf32>
    %cst_40 = arith.constant 0.000000e+00 : f32
    %90 = vector.broadcast %cst_40 : f32 to vector<1x1024xf32>
    %91 = arith.subf %90, %16 : vector<1x1024xf32>
    %cst_41 = arith.constant 3.000000e+00 : f32
    %92 = vector.broadcast %cst_41 : f32 to vector<1x1024xf32>
    %93 = arith.mulf %92, %17 : vector<1x1024xf32>
    %94 = arith.addf %91, %93 : vector<1x1024xf32>
    %95 = arith.mulf %89, %94 : vector<1x1024xf32>
    %c15 = arith.constant 15 : index
    %c0_42 = arith.constant 0 : index
    %96 = vector.load %arg9[%c15, %c0_42] : memref<32x1024xf32, #tpu.memory_space<vmem>>, vector<1x1024xf32>
    tpu.vector_store %arg9[%c15, %c0_42], %95 {strides = array<i32>} : memref<32x1024xf32, #tpu.memory_space<vmem>>, vector<1x1024xf32>,
    %c0_43 = arith.constant 0 : index
    %c0_44 = arith.constant 0 : index
    %97 = vector.load %arg2[%c0_43, %c0_44] : memref<32x1024xbf16, #tpu.memory_space<vmem>>, vector<32x1024xbf16>
    %c0_45 = arith.constant 0 : index
    %c0_46 = arith.constant 0 : index
    %98 = vector.load %arg3[%c0_45, %c0_46] : memref<64x32xbf16, #tpu.memory_space<vmem>>, vector<64x32xbf16>
    %cst_47 = arith.constant dense<0.000000e+00> : vector<64x1024xf32>
    %99 = tpu.matmul %98, %97, %cst_47 {dimension_numbers = #tpu.dot_dimension_numbers<[1], [0], [0], [1], [0, 0, 1, 1], [], []>} : vector<64x32xbf16>, vector<32x1024xbf16>, vector<64x1024xf32> -> vector<64x1024xf32>
    %cst_48 = arith.constant 0.000000e+00 : f32
    %100 = vector.broadcast %cst_48 : f32 to vector<64x1024xf32>
    %101 = arith.maximumf %99, %100 : vector<64x1024xf32>
    %c0_49 = arith.constant 0 : index
    %c0_50 = arith.constant 0 : index
    %102 = vector.load %arg4[%c0_49, %c0_50] : memref<16x64xbf16, #tpu.memory_space<vmem>>, vector<16x64xbf16>
    %103 = arith.truncf %101 : vector<64x1024xf32> to vector<64x1024xbf16>
    %cst_51 = arith.constant dense<0.000000e+00> : vector<16x1024xf32>
    %104 = tpu.matmul %102, %103, %cst_51 {dimension_numbers = #tpu.dot_dimension_numbers<[1], [0], [0], [1], [0, 0, 1, 1], [], []>} : vector<16x64xbf16>, vector<64x1024xbf16>, vector<16x1024xf32> -> vector<16x1024xf32>
    %105 = vector.extract_strided_slice %104 {offsets = [0, 0], sizes = [1, 1024], strides = [1, 1]} : vector<16x1024xf32> to vector<1x1024xf32>
    %106 = math.exp %105 : vector<1x1024xf32>
    %c0_52 = arith.constant 0 : index
    %c0_53 = arith.constant 0 : index
    %107 = vector.load %arg8[%c0_52, %c0_53] : memref<4x1024xf32, #tpu.memory_space<vmem>>, vector<1x1024xf32>
    tpu.vector_store %arg8[%c0_52, %c0_53], %106 {strides = array<i32>} : memref<4x1024xf32, #tpu.memory_space<vmem>>, vector<1x1024xf32>,
    %c16 = arith.constant 16 : index
    %c0_54 = arith.constant 0 : index
    %108 = vector.load %arg9[%c16, %c0_54] : memref<32x1024xf32, #tpu.memory_space<vmem>>, vector<16x1024xf32>
    tpu.vector_store %arg9[%c16, %c0_54], %104 {strides = array<i32>} : memref<32x1024xf32, #tpu.memory_space<vmem>>, vector<16x1024xf32>,
    %c0_55 = arith.constant 0 : index
    %c0_56 = arith.constant 0 : index
    %109 = vector.load %arg9[%c0_55, %c0_56] : memref<32x1024xf32, #tpu.memory_space<vmem>>, vector<32x1024xf32>
    %110 = arith.truncf %109 : vector<32x1024xf32> to vector<32x1024xbf16>
    %c0_57 = arith.constant 0 : index
    %c0_58 = arith.constant 0 : index
    %111 = vector.load %arg5[%c0_57, %c0_58] : memref<64x32xbf16, #tpu.memory_space<vmem>>, vector<64x32xbf16>
    %cst_59 = arith.constant dense<0.000000e+00> : vector<64x1024xf32>
    %112 = tpu.matmul %111, %110, %cst_59 {dimension_numbers = #tpu.dot_dimension_numbers<[1], [0], [0], [1], [0, 0, 1, 1], [], []>} : vector<64x32xbf16>, vector<32x1024xbf16>, vector<64x1024xf32> -> vector<64x1024xf32>
    %cst_60 = arith.constant 0.000000e+00 : f32
    %113 = vector.broadcast %cst_60 : f32 to vector<64x1024xf32>
    %114 = arith.maximumf %112, %113 : vector<64x1024xf32>
    %c0_61 = arith.constant 0 : index
    %c0_62 = arith.constant 0 : index
    %115 = vector.load %arg6[%c0_61, %c0_62] : memref<64x64xbf16, #tpu.memory_space<vmem>>, vector<64x64xbf16>
    %116 = arith.truncf %114 : vector<64x1024xf32> to vector<64x1024xbf16>
    %cst_63 = arith.constant dense<0.000000e+00> : vector<64x1024xf32>
    %117 = tpu.matmul %115, %116, %cst_63 {dimension_numbers = #tpu.dot_dimension_numbers<[1], [0], [0], [1], [0, 0, 1, 1], [], []>} : vector<64x64xbf16>, vector<64x1024xbf16>, vector<64x1024xf32> -> vector<64x1024xf32>
    %cst_64 = arith.constant 0.000000e+00 : f32
    %118 = vector.broadcast %cst_64 : f32 to vector<64x1024xf32>
    %119 = arith.maximumf %117, %118 : vector<64x1024xf32>
    %c0_65 = arith.constant 0 : index
    %c0_66 = arith.constant 0 : index
    %120 = vector.load %arg7[%c0_65, %c0_66] : memref<8x64xbf16, #tpu.memory_space<vmem>>, vector<8x64xbf16>
    %121 = arith.truncf %119 : vector<64x1024xf32> to vector<64x1024xbf16>
    %cst_67 = arith.constant dense<0.000000e+00> : vector<8x1024xf32>
    %122 = tpu.matmul %120, %121, %cst_67 {dimension_numbers = #tpu.dot_dimension_numbers<[1], [0], [0], [1], [0, 0, 1, 1], [], []>} : vector<8x64xbf16>, vector<64x1024xbf16>, vector<8x1024xf32> -> vector<8x1024xf32>
    %123 = vector.extract_strided_slice %122 {offsets = [0, 0], sizes = [3, 1024], strides = [1, 1]} : vector<8x1024xf32> to vector<3x1024xf32>
    %124 = arith.negf %123 : vector<3x1024xf32>
    %125 = math.exp %124 : vector<3x1024xf32>
    %cst_68 = arith.constant 1.000000e+00 : f32
    %126 = vector.broadcast %cst_68 : f32 to vector<3x1024xf32>
    %127 = arith.addf %126, %125 : vector<3x1024xf32>
    %128 = arith.divf %126, %127 : vector<3x1024xf32>
    %c1_69 = arith.constant 1 : index
    %c0_70 = arith.constant 0 : index
    %129 = vector.load %arg8[%c1_69, %c0_70] : memref<4x1024xf32, #tpu.memory_space<vmem>>, vector<3x1024xf32>
    tpu.vector_store %arg8[%c1_69, %c0_70], %128 {strides = array<i32>} : memref<4x1024xf32, #tpu.memory_space<vmem>>, vector<3x1024xf32>,
    return
  }
  func.func @transform_0(%arg0: i32) -> (i32, i32) {
    %c0_i32 = arith.constant 0 : i32
    %c0_i32_0 = arith.constant 0 : i32
    return %c0_i32, %arg0 : i32, i32
  }
  func.func @transform_1(%arg0: i32) -> (i32, i32) {
    %c0_i32 = arith.constant 0 : i32
    %c0_i32_0 = arith.constant 0 : i32
    return %c0_i32, %arg0 : i32, i32
  }
  func.func @transform_2(%arg0: i32) -> (i32, i32) {
    %c0_i32 = arith.constant 0 : i32
    %c0_i32_0 = arith.constant 0 : i32
    %c0_i32_1 = arith.constant 0 : i32
    return %c0_i32, %c0_i32_0 : i32, i32
  }
  func.func @transform_3(%arg0: i32) -> (i32, i32) {
    %c0_i32 = arith.constant 0 : i32
    %c0_i32_0 = arith.constant 0 : i32
    %c0_i32_1 = arith.constant 0 : i32
    return %c0_i32, %c0_i32_0 : i32, i32
  }
  func.func @transform_4(%arg0: i32) -> (i32, i32) {
    %c0_i32 = arith.constant 0 : i32
    %c0_i32_0 = arith.constant 0 : i32
    %c0_i32_1 = arith.constant 0 : i32
    return %c0_i32, %c0_i32_0 : i32, i32
  }
  func.func @transform_5(%arg0: i32) -> (i32, i32) {
    %c0_i32 = arith.constant 0 : i32
    %c0_i32_0 = arith.constant 0 : i32
    %c0_i32_1 = arith.constant 0 : i32
    return %c0_i32, %c0_i32_0 : i32, i32
  }
  func.func @transform_6(%arg0: i32) -> (i32, i32) {
    %c0_i32 = arith.constant 0 : i32
    %c0_i32_0 = arith.constant 0 : i32
    %c0_i32_1 = arith.constant 0 : i32
    return %c0_i32, %c0_i32_0 : i32, i32
  }
  func.func @transform_7(%arg0: i32) -> (i32, i32) {
    %c0_i32 = arith.constant 0 : i32
    %c0_i32_0 = arith.constant 0 : i32
    return %c0_i32, %arg0 : i32, i32
  }
}

</mosaic_0001>

<llo_original>
// kernel: tpu_custom_call.1
$region0: #{tpu_custom_call.1}
  #allocation0 [shape = 'u32[]', space=smem, size = 0x4, offset = 0x4, fixed_abs, tag = 'smem constant byte address 0x4 - core index']
  #allocation1 [shape = 'u32[144,128]{1,0:T(1,128)}', space=vmem, size = 0x12000, scoped, tag = 'internal scratch']
  #allocation2 [shape = 'f32[32,1024]{1,0:T(8,128)}', space=vmem, size = 0x20000, scoped, tag = 'scratch operand']
  %s0 = inlined_call_operand.vmem [shape: f32[3,2048], index: 0, kind: input, shape index: {}]
  %s1 = inlined_call_operand.hbm [shape: bf16[32,2048], index: 1, kind: input, shape index: {}]
  %s2 = inlined_call_operand.vmem [shape: bf16[64,32], index: 2, kind: input, shape index: {}]
  %s3 = inlined_call_operand.vmem [shape: bf16[16,64], index: 3, kind: input, shape index: {}]
  %s4 = inlined_call_operand.vmem [shape: bf16[64,32], index: 4, kind: input, shape index: {}]
  %s5 = inlined_call_operand.vmem [shape: bf16[64,64], index: 5, kind: input, shape index: {}]
  %s6 = inlined_call_operand.vmem [shape: bf16[8,64], index: 6, kind: input, shape index: {}]
  %s7 = inlined_call_operand.hbm [shape: f32[4,2048], index: 7, kind: output, shape index: {}]
  %s8 = sld [smem:[#allocation0]]
  $region65: #{tpu_custom_call.1} parent=0
    _
  %s10 = ssub.s32 1, %s8
  %s11 = scalar_select 0, %s10, %s8
  $region1: #{tpu_custom_call.1} parent=0
    #allocation3 [shape = 'u8[131072]{0}', space=vmem, size = 0x20000, scoped, tag = 'input window, operand 1']
    #allocation4 [shape = 's32[2]{0}', space=sflag, size = 0x8, scoped, tag = 'scoped memory for tpu_custom_call.1']
    #allocation5 [shape = 's32[2]{0}', space=sflag, size = 0x8, scoped, tag = 'scoped memory for tpu_custom_call.1']
    #allocation6 [shape = 'u8[32768]{0}', space=vmem, size = 0x8000, scoped, tag = 'output window, operand 0']
    %12 = vsyncpa [#allocation4], 0
    %s13 = scalar_lea.sflag [#allocation4], 1
    %14 = vsyncpa %s13, 0
    %15 = vsyncpa [#allocation5], 0
    %s16 = scalar_lea.sflag [#allocation5], 1
    %17 = vsyncpa %s16, 0
    loop: start=0, step=1, limit=4
    $region2: #{tpu_custom_call.1} parent=1 // loop_pre_header
      _
    $region3: #{tpu_custom_call.1} parent=1 // loop_header
      %s19 = sphi 0, %s23
      %p20 = scmp.ge.s32.totalorder %s19, 4
      %s29 = sphi 0, %s31
      %s32 = sphi 0, %s29
      %s33 = sphi 0, %s32
      %s49 = sphi 0, %s33
      %s55 = sphi 0, %s57
      %s58 = sphi 0, %s55
      %s59 = sphi 0, %s58
      %s75 = sphi 0, %s59
      %s79 = sphi 0, %s79
      %s81 = sphi 0, %s79
      %s82 = sphi 0, %s81
      %s96 = sphi 0, %s82
      %s100 = sphi 0, %s100
      %s102 = sphi 0, %s100
      %s103 = sphi 0, %s102
      %s117 = sphi 0, %s103
      %s121 = sphi 0, %s121
      %s123 = sphi 0, %s121
      %s124 = sphi 0, %s123
      %s138 = sphi 0, %s124
      %s142 = sphi 0, %s142
      %s144 = sphi 0, %s142
      %s145 = sphi 0, %s144
      %s159 = sphi 0, %s145
      %s163 = sphi 0, %s163
      %s165 = sphi 0, %s163
      %s166 = sphi 0, %s165
      %s180 = sphi 0, %s166
      %s186 = sphi 0, %s188
      %s189 = sphi 0, %s186
      %s190 = sphi 0, %s189
      %s206 = sphi 0, %s190
    $region4: #{tpu_custom_call.1} parent=1 // loop_header_branch
      %22 = sbr.rel (%p20) target = $region8
    $region5: #{tpu_custom_call.1} parent=1 // loop_body
      %s24 = ssub.s32 %s19, 1
      %s25 = ssub.s32 %s19, 2
      %s26 = sadd.s32 %s19, 1
      %s27 = ssub.s32 %s19, %s26
      %p28 = scmp.eq.s32.totalorder %s27, 0
      %s30 = sadd.s32 %s29, 1
      %s31 = scalar_select %p28, %s29, %s30
      %p34 = pneg %p28
      %p35 = scmp.eq.s32.totalorder %s19, 1
      %p36 = por %p34, %p35
      %p37 = scmp.ne.s32.totalorder %s29, %s32
      %p38 = scmp.eq.s32.totalorder %s19, 0
      %p39 = por %p37, %p38
      %p40 = scmp.ne.s32.totalorder %s29, %s32
      %p41 = scmp.eq.s32.totalorder %s24, 1
      %p42 = por %p40, %p41
      %p43 = scmp.ne.s32.totalorder %s32, %s33
      %p44 = scmp.eq.s32.totalorder %s24, 0
      %p45 = por %p43, %p44
      %p46 = scmp.ne.s32.totalorder %s32, %s33
      %p47 = scmp.eq.s32.totalorder %s25, 1
      %p48 = por %p46, %p47
      %p50 = scmp.ne.s32.totalorder %s33, %s49
      %p51 = scmp.eq.s32.totalorder %s25, 0
      %p52 = por %p50, %p51
      %s53 = ssub.s32 %s19, %s26
      %p54 = scmp.eq.s32.totalorder %s53, 0
      %s56 = sadd.s32 %s55, 1
      %s57 = scalar_select %p54, %s55, %s56
      %p60 = pneg %p54
      %p61 = scmp.eq.s32.totalorder %s19, 1
      %p62 = por %p60, %p61
      %p63 = scmp.ne.s32.totalorder %s55, %s58
      %p64 = scmp.eq.s32.totalorder %s19, 0
      %p65 = por %p63, %p64
      %p66 = scmp.ne.s32.totalorder %s55, %s58
      %p67 = scmp.eq.s32.totalorder %s24, 1
      %p68 = por %p66, %p67
      %p69 = scmp.ne.s32.totalorder %s58, %s59
      %p70 = scmp.eq.s32.totalorder %s24, 0
      %p71 = por %p69, %p70
      %p72 = scmp.ne.s32.totalorder %s58, %s59
      %p73 = scmp.eq.s32.totalorder %s25, 1
      %p74 = por %p72, %p73
      %p76 = scmp.ne.s32.totalorder %s59, %s75
      %p77 = scmp.eq.s32.totalorder %s25, 0
      %p78 = por %p76, %p77
      %s80 = sadd.s32 %s79, 1
      %p83 = scmp.eq.s32.totalorder %s19, 1
      %p84 = scmp.ne.s32.totalorder %s79, %s81
      %p85 = scmp.eq.s32.totalorder %s19, 0
      %p86 = por %p84, %p85
      %p87 = scmp.ne.s32.totalorder %s79, %s81
      %p88 = scmp.eq.s32.totalorder %s24, 1
      %p89 = por %p87, %p88
      %p90 = scmp.ne.s32.totalorder %s81, %s82
      %p91 = scmp.eq.s32.totalorder %s24, 0
      %p92 = por %p90, %p91
      %p93 = scmp.ne.s32.totalorder %s81, %s82
      %p94 = scmp.eq.s32.totalorder %s25, 1
      %p95 = por %p93, %p94
      %p97 = scmp.ne.s32.totalorder %s82, %s96
      %p98 = scmp.eq.s32.totalorder %s25, 0
      %p99 = por %p97, %p98
      %s101 = sadd.s32 %s100, 1
      %p104 = scmp.eq.s32.totalorder %s19, 1
      %p105 = scmp.ne.s32.totalorder %s100, %s102
      %p106 = scmp.eq.s32.totalorder %s19, 0
      %p107 = por %p105, %p106
      %p108 = scmp.ne.s32.totalorder %s100, %s102
      %p109 = scmp.eq.s32.totalorder %s24, 1
      %p110 = por %p108, %p109
      %p111 = scmp.ne.s32.totalorder %s102, %s103
      %p112 = scmp.eq.s32.totalorder %s24, 0
      %p113 = por %p111, %p112
      %p114 = scmp.ne.s32.totalorder %s102, %s103
      %p115 = scmp.eq.s32.totalorder %s25, 1
      %p116 = por %p114, %p115
      %p118 = scmp.ne.s32.totalorder %s103, %s117
      %p119 = scmp.eq.s32.totalorder %s25, 0
      %p120 = por %p118, %p119
      %s122 = sadd.s32 %s121, 1
      %p125 = scmp.eq.s32.totalorder %s19, 1
      %p126 = scmp.ne.s32.totalorder %s121, %s123
      %p127 = scmp.eq.s32.totalorder %s19, 0
      %p128 = por %p126, %p127
      %p129 = scmp.ne.s32.totalorder %s121, %s123
      %p130 = scmp.eq.s32.totalorder %s24, 1
      %p131 = por %p129, %p130
      %p132 = scmp.ne.s32.totalorder %s123, %s124
      %p133 = scmp.eq.s32.totalorder %s24, 0
      %p134 = por %p132, %p133
      %p135 = scmp.ne.s32.totalorder %s123, %s124
      %p136 = scmp.eq.s32.totalorder %s25, 1
      %p137 = por %p135, %p136
      %p139 = scmp.ne.s32.totalorder %s124, %s138
      %p140 = scmp.eq.s32.totalorder %s25, 0
      %p141 = por %p139, %p140
      %s143 = sadd.s32 %s142, 1
      %p146 = scmp.eq.s32.totalorder %s19, 1
      %p147 = scmp.ne.s32.totalorder %s142, %s144
      %p148 = scmp.eq.s32.totalorder %s19, 0
      %p149 = por %p147, %p148
      %p150 = scmp.ne.s32.totalorder %s142, %s144
      %p151 = scmp.eq.s32.totalorder %s24, 1
      %p152 = por %p150, %p151
      %p153 = scmp.ne.s32.totalorder %s144, %s145
      %p154 = scmp.eq.s32.totalorder %s24, 0
      %p155 = por %p153, %p154
      %p156 = scmp.ne.s32.totalorder %s144, %s145
      %p157 = scmp.eq.s32.totalorder %s25, 1
      %p158 = por %p156, %p157
      %p160 = scmp.ne.s32.totalorder %s145, %s159
      %p161 = scmp.eq.s32.totalorder %s25, 0
      %p162 = por %p160, %p161
      %s164 = sadd.s32 %s163, 1
      %p167 = scmp.eq.s32.totalorder %s19, 1
      %p168 = scmp.ne.s32.totalorder %s163, %s165
      %p169 = scmp.eq.s32.totalorder %s19, 0
      %p170 = por %p168, %p169
      %p171 = scmp.ne.s32.totalorder %s163, %s165
      %p172 = scmp.eq.s32.totalorder %s24, 1
      %p173 = por %p171, %p172
      %p174 = scmp.ne.s32.totalorder %s165, %s166
      %p175 = scmp.eq.s32.totalorder %s24, 0
      %p176 = por %p174, %p175
      %p177 = scmp.ne.s32.totalorder %s165, %s166
      %p178 = scmp.eq.s32.totalorder %s25, 1
      %p179 = por %p177, %p178
      %p181 = scmp.ne.s32.totalorder %s166, %s180
      %p182 = scmp.eq.s32.totalorder %s25, 0
      %p183 = por %p181, %p182
      %s184 = ssub.s32 %s19, %s26
      %p185 = scmp.eq.s32.totalorder %s184, 0
      %s187 = sadd.s32 %s186, 1
      %s188 = scalar_select %p185, %s186, %s187
      %p191 = pneg %p185
      %p192 = scmp.eq.s32.totalorder %s19, 1
      %p193 = por %p191, %p192
      %p194 = scmp.ne.s32.totalorder %s186, %s189
      %p195 = scmp.eq.s32.totalorder %s19, 0
      %p196 = por %p194, %p195
      %p197 = scmp.ne.s32.totalorder %s186, %s189
      %p198 = scmp.eq.s32.totalorder %s24, 1
      %p199 = por %p197, %p198
      %p200 = scmp.ne.s32.totalorder %s189, %s190
      %p201 = scmp.eq.s32.totalorder %s24, 0
      %p202 = por %p200, %p201
      %p203 = scmp.ne.s32.totalorder %s189, %s190
      %p204 = scmp.eq.s32.totalorder %s25, 1
      %p205 = por %p203, %p204
      %p207 = scmp.ne.s32.totalorder %s190, %s206
      %p208 = scmp.eq.s32.totalorder %s25, 0
      %p209 = por %p207, %p208
      %p210 = scmp.le.s32.totalorder 1, %s19
      %p211 = scmp.lt.s32.totalorder %s19, 3
      %p212 = pnand %p210, %p211
      %p213 = pneg %p212
      // Predicated region
      $region9: #{tpu_custom_call.1} parent=5 // pred_check
        _
      $region10: #{tpu_custom_call.1} parent=5 // pred_check_branch
        %215 = sbr.rel (%p212) target = $region12
      $region11: #{tpu_custom_call.1} parent=5 // pred_region
        %s216 = ssub.s32 %s19, 1
        // Predicated region
        $region13: #{tpu_custom_call.1} parent=11 // pred_check
          %p217 = pneg %p92
        $region14: #{tpu_custom_call.1} parent=11 // pred_check_branch
          %219 = sbr.rel (%p217) target = $region16
        $region15: #{tpu_custom_call.1} parent=11 // pred_region
          _
        $region16: #{tpu_custom_call.1} parent=11 // pred_fallthru
          _
        // Predicated region
        $region17: #{tpu_custom_call.1} parent=11 // pred_check
          %p220 = pneg %p113
        $region18: #{tpu_custom_call.1} parent=11 // pred_check_branch
          %222 = sbr.rel (%p220) target = $region20
        $region19: #{tpu_custom_call.1} parent=11 // pred_region
          _
        $region20: #{tpu_custom_call.1} parent=11 // pred_fallthru
          _
        // Predicated region
        $region21: #{tpu_custom_call.1} parent=11 // pred_check
          %p223 = pneg %p134
        $region22: #{tpu_custom_call.1} parent=11 // pred_check_branch
          %225 = sbr.rel (%p223) target = $region24
        $region23: #{tpu_custom_call.1} parent=11 // pred_region
          _
        $region24: #{tpu_custom_call.1} parent=11 // pred_fallthru
          _
        // Predicated region
        $region25: #{tpu_custom_call.1} parent=11 // pred_check
          %p226 = pneg %p155
        $region26: #{tpu_custom_call.1} parent=11 // pred_check_branch
          %228 = sbr.rel (%p226) target = $region28
        $region27: #{tpu_custom_call.1} parent=11 // pred_region
          _
        $region28: #{tpu_custom_call.1} parent=11 // pred_fallthru
          _
        // Predicated region
        $region29: #{tpu_custom_call.1} parent=11 // pred_check
          %p229 = pneg %p176
        $region30: #{tpu_custom_call.1} parent=11 // pred_check_branch
          %231 = sbr.rel (%p229) target = $region32
        $region31: #{tpu_custom_call.1} parent=11 // pred_region
          _
        $region32: #{tpu_custom_call.1} parent=11 // pred_fallthru
          _
      $region12: #{tpu_custom_call.1} parent=5 // pred_fallthru
        _
      %p232 = scmp.lt.s32.totalorder %s19, 2
      // Predicated region
      $region33: #{tpu_custom_call.1} parent=5 // pred_check
        %p233 = pneg %p232
      $region34: #{tpu_custom_call.1} parent=5 // pred_check_branch
        %235 = sbr.rel (%p233) target = $region36
      $region35: #{tpu_custom_call.1} parent=5 // pred_region
        // Predicated region
        $region37: #{tpu_custom_call.1} parent=35 // pred_check
          %p236 = pneg %p39
        $region38: #{tpu_custom_call.1} parent=35 // pred_check_branch
          %238 = sbr.rel (%p236) target = $region40
        $region39: #{tpu_custom_call.1} parent=35 // pred_region
          %s239 = smul.u32 8, %s19
          %p240 = scmp.lt.s32.totalorder %s239, 15
          %s241 = scalar_select %p240, %s239, 15
          %s242 = smul.addr %s241, 4
          %s243 = scalar_lea.vmem %s0, %s242
          %s244 = smul.u32 8, %s19
        $region40: #{tpu_custom_call.1} parent=35 // pred_fallthru
          _
        // Predicated region
        $region41: #{tpu_custom_call.1} parent=35 // pred_check
          %p245 = pneg %p65
        $region42: #{tpu_custom_call.1} parent=35 // pred_check_branch
          %247 = sbr.rel (%p245) target = $region44
        $region43: #{tpu_custom_call.1} parent=35 // pred_region
          %s248 = sand.u32 %s55, 1
          %s249 = scalar_lea.sflag [#allocation4], %s248
          %s250 = sand.u32 %s55, 1
          %s251 = smul.addr %s250, 128
          %s252 = scalar_lea.vmem [#allocation3], %s251
          %s253 = smul.u32 8, %s19
          %s255 = ssub.s32 2048, 2048
          %256 = vsyncadd %s249, %s255
          %s257 = smul.addr %s253, 64
          %s258 = scalar_lea.hbm %s1, %s257
          %s259 = sshll.u32 %s252, 4
          %s260 = int_to_ptr.vmem [resolvable:$true] %s259
          %265 = dma.hbm_to_vmem [thread:$0]  %s258, 2048, %s260, %s249, 1024, 512, 32
        $region44: #{tpu_custom_call.1} parent=35 // pred_fallthru
          _
      $region36: #{tpu_custom_call.1} parent=5 // pred_fallthru
        _
      %p266 = scmp.le.s32.totalorder 1, %s19
      %p267 = scmp.lt.s32.totalorder %s19, 3
      %p268 = pnand %p266, %p267
      %p269 = pneg %p268
      // Predicated region
      $region45: #{tpu_custom_call.1} parent=5 // pred_check
        _
      $region46: #{tpu_custom_call.1} parent=5 // pred_check_branch
        %271 = sbr.rel (%p268) target = $region48
      $region47: #{tpu_custom_call.1} parent=5 // pred_region
        %s272 = ssub.s32 %s19, 1
        %s273 = sand.u32 %s58, 1
        %s274 = scalar_lea.sflag [#allocation4], %s273
        %s275 = sand.u32 %s58, 1
        %s276 = smul.addr %s275, 128
        %s277 = scalar_lea.vmem [#allocation3], %s276
        // Predicated region
        $region49: #{tpu_custom_call.1} parent=47 // pred_check
          %p278 = pneg %p71
        $region50: #{tpu_custom_call.1} parent=47 // pred_check_branch
          %280 = sbr.rel (%p278) target = $region52
        $region51: #{tpu_custom_call.1} parent=47 // pred_region
          %281 = dma.done %s274, 2048
        $region52: #{tpu_custom_call.1} parent=47 // pred_fallthru
          _
        %s282 = smul.u32 8, %s24
        %p283 = scmp.lt.s32.totalorder %s282, 15
        %s284 = scalar_select %p283, %s282, 15
        %s285 = smul.addr %s284, 4
        %s286 = scalar_lea.vmem %s0, %s285
        %p287 = pneg %p45
        %p288 = pneg %p42
        %s289 = sand.u32 %s58, 1
        %s290 = scalar_lea.sflag [#allocation4], %s289
        %s291 = sand.u32 %s58, 1
        %s292 = smul.addr %s291, 128
        %s293 = scalar_lea.vmem [#allocation3], %s292
        %p294 = pneg %p71
        %p295 = pneg %p68
        %p296 = pneg %p92
        %p297 = pneg %p89
        %p298 = pneg %p113
        %p299 = pneg %p110
        %p300 = pneg %p134
        %p301 = pneg %p131
        %p302 = pneg %p155
        %p303 = pneg %p152
        %p304 = pneg %p176
        %p305 = pneg %p173
        %p306 = pneg %p202
        %p307 = pneg %p199
        %s308 = sand.u32 %s189, 1
        %s309 = scalar_lea.sflag [#allocation5], %s308
        %s310 = sand.u32 %s189, 1
        %s311 = smul.addr %s310, 32
        %s312 = scalar_lea.vmem [#allocation6], %s311
        %s313 = smul.u32 8, %s24
        %p314 = scmp.lt.s32.totalorder %s313, 15
        %s315 = scalar_select %p314, %s313, 15
        %s316 = smul.addr %s315, 4
        %s317 = scalar_lea.vmem %s0, %s316
        %s318 = smul.u32 8, %s24
        %s319 = smul.u32 8, %s24
        %s320 = smul.u32 8, %s24
        %v322 = vld [vmem:[%s317] sm:$0x77]
        %v323 = vld [vmem:[%s317 + $0x8] sm:$0x77]
        %v324 = vld [vmem:[%s317 + $0x10] sm:$0x77]
        %v325 = vld [vmem:[%s317 + $0x18] sm:$0x77]
        %v326 = vmul.f32 %v322, %v322
        %v327 = vmul.f32 %v323, %v323
        %v328 = vmul.f32 %v324, %v324
        %v329 = vmul.f32 %v325, %v325
        %v334 = vrot.slane %v326, 5
        %v335 = vrot.slane %v334, 4
        %v336 = vrot.slane %v327, 5
        %v337 = vrot.slane %v336, 4
        %v338 = vrot.slane %v328, 5
        %v339 = vrot.slane %v338, 4
        %v340 = vrot.slane %v329, 5
        %v341 = vrot.slane %v340, 4
        %v346 = vadd.f32 %v326, %v335
        %v347 = vadd.f32 %v327, %v337
        %v348 = vadd.f32 %v328, %v339
        %v349 = vadd.f32 %v329, %v341
        %v350 = vrot.slane %v326, 6
        %v351 = vrot.slane %v350, 4
        %v352 = vrot.slane %v327, 6
        %v353 = vrot.slane %v352, 4
        %v354 = vrot.slane %v328, 6
        %v355 = vrot.slane %v354, 4
        %v356 = vrot.slane %v329, 6
        %v357 = vrot.slane %v356, 4
        %v362 = vadd.f32 %v346, %v351
        %v363 = vadd.f32 %v347, %v353
        %v364 = vadd.f32 %v348, %v355
        %v365 = vadd.f32 %v349, %v357
        %v366 = vrsqrt.pop %v362
        %v367 = vrsqrt.pop %v363
        %v368 = vrsqrt.pop %v364
        %v369 = vrsqrt.pop %v365
        %v370 = vmul.f32 %v322, %v366
        %v371 = vmul.f32 %v323, %v367
        %v372 = vmul.f32 %v324, %v368
        %v373 = vmul.f32 %v325, %v369
        %v378 = vrot.slane %v366, 7
        %v379 = vrot.slane %v367, 7
        %v380 = vrot.slane %v368, 7
        %v381 = vrot.slane %v369, 7
        %v386 = vmul.f32 %v322, %v378
        %v387 = vmul.f32 %v323, %v379
        %v388 = vmul.f32 %v324, %v380
        %v389 = vmul.f32 %v325, %v381
        %v390 = vrot.slane %v366, 6
        %v391 = vrot.slane %v367, 6
        %v392 = vrot.slane %v368, 6
        %v393 = vrot.slane %v369, 6
        %v398 = vmul.f32 %v322, %v390
        %v399 = vmul.f32 %v323, %v391
        %v400 = vmul.f32 %v324, %v392
        %v401 = vmul.f32 %v325, %v393
        %v406 = vrot.slane %v386, 5
        %v407 = vrot.slane %v406, 4
        %v408 = vrot.slane %v387, 5
        %v409 = vrot.slane %v408, 4
        %v410 = vrot.slane %v388, 5
        %v411 = vrot.slane %v410, 4
        %v412 = vrot.slane %v389, 5
        %v413 = vrot.slane %v412, 4
        %v418 = vmul.f32 %v370, %v407
        %v419 = vmul.f32 %v371, %v409
        %v420 = vmul.f32 %v372, %v411
        %v421 = vmul.f32 %v373, %v413
        %v426 = vrot.slane %v398, 6
        %v427 = vrot.slane %v426, 4
        %v428 = vrot.slane %v399, 6
        %v429 = vrot.slane %v428, 4
        %v430 = vrot.slane %v400, 6
        %v431 = vrot.slane %v430, 4
        %v432 = vrot.slane %v401, 6
        %v433 = vrot.slane %v432, 4
        %v438 = vmul.f32 %v370, %v427
        %v439 = vmul.f32 %v371, %v429
        %v440 = vmul.f32 %v372, %v431
        %v441 = vmul.f32 %v373, %v433
        %v442 = vrot.slane %v398, 5
        %v443 = vrot.slane %v442, 4
        %v444 = vrot.slane %v399, 5
        %v445 = vrot.slane %v444, 4
        %v446 = vrot.slane %v400, 5
        %v447 = vrot.slane %v446, 4
        %v448 = vrot.slane %v401, 5
        %v449 = vrot.slane %v448, 4
        %v454 = vmul.f32 %v386, %v443
        %v455 = vmul.f32 %v387, %v445
        %v456 = vmul.f32 %v388, %v447
        %v457 = vmul.f32 %v389, %v449
        %v458 = vmul.f32 %v370, %v370
        %v459 = vmul.f32 %v371, %v371
        %v460 = vmul.f32 %v372, %v372
        %v461 = vmul.f32 %v373, %v373
        %v462 = vmul.f32 %v386, %v386
        %v463 = vmul.f32 %v387, %v387
        %v464 = vmul.f32 %v388, %v388
        %v465 = vmul.f32 %v389, %v389
        %v466 = vmul.f32 %v398, %v398
        %v467 = vmul.f32 %v399, %v399
        %v468 = vmul.f32 %v400, %v400
        %v469 = vmul.f32 %v401, %v401
        %470 = vst [vmem:[#allocation2] ss:$8 sm:$0xf] 0.2820948
        %471 = vst [vmem:[#allocation2] ss:$8 sm:$0xf0] 0.2820948
        %v472 = vmul.f32 %v386, -0.48860252
        %v473 = vmul.f32 %v387, -0.48860252
        %v474 = vmul.f32 %v388, -0.48860252
        %v475 = vmul.f32 %v389, -0.48860252
        %v481 = vunpack.c.l.s4 1966171168
        %v482 = vunpack.c.0.s8 %v481
        %v483 = vlaneseq
        %v484 = vshrl.u32 %v483, 7
        %v485 = vsub.s32 %v482, %v484
        %v486 = vrot.slane %v472, %v485
        %v488 = vunpack.c.l.s4 1966171168
        %v489 = vunpack.c.0.s8 %v488
        %v490 = vlaneseq
        %v491 = vshrl.u32 %v490, 7
        %v492 = vsub.s32 %v489, %v491
        %v493 = vrot.slane %v473, %v492
        %v495 = vunpack.c.l.s4 1966171168
        %v496 = vunpack.c.0.s8 %v495
        %v497 = vlaneseq
        %v498 = vshrl.u32 %v497, 7
        %v499 = vsub.s32 %v496, %v498
        %v500 = vrot.slane %v474, %v499
        %v502 = vunpack.c.l.s4 1966171168
        %v503 = vunpack.c.0.s8 %v502
        %v504 = vlaneseq
        %v505 = vshrl.u32 %v504, 7
        %v506 = vsub.s32 %v503, %v505
        %v507 = vrot.slane %v475, %v506
        %v508 = vcombine.high %v486, %v493
        %v509 = vcombine.high %v500, %v507
        %v511 = vunpack.c.l.s4 1966171168
        %v512 = vunpack.c.0.s8 %v511
        %v513 = vlaneseq
        %v514 = vshrl.u32 %v513, 7
        %v515 = vsub.s32 %v512, %v514
        %v516 = vrot.slane %v508, %v515
        %v518 = vunpack.c.l.s4 1966171168
        %v519 = vunpack.c.0.s8 %v518
        %v520 = vlaneseq
        %v521 = vshrl.u32 %v520, 7
        %v522 = vsub.s32 %v519, %v521
        %v523 = vrot.slane %v509, %v522
        %v524 = vcombine.low %v516, %v523
        %s526 = scalar_lea.vmem [#allocation2], 1
        %527 = vst [vmem:[%s526] ss:$8 sm:$0xf] %v524
        %528 = vst [vmem:[%s526] ss:$8 sm:$0xf0] %v524
        %v529 = vmul.f32 %v398, 0.48860252
        %v530 = vmul.f32 %v399, 0.48860252
        %v531 = vmul.f32 %v400, 0.48860252
        %v532 = vmul.f32 %v401, 0.48860252
        %v538 = vunpack.c.l.s4 1966171168
        %v539 = vunpack.c.0.s8 %v538
        %v540 = vlaneseq
        %v541 = vshrl.u32 %v540, 7
        %v542 = vsub.s32 %v539, %v541
        %v543 = vrot.slane %v529, %v542
        %v545 = vunpack.c.l.s4 1966171168
        %v546 = vunpack.c.0.s8 %v545
        %v547 = vlaneseq
        %v548 = vshrl.u32 %v547, 7
        %v549 = vsub.s32 %v546, %v548
        %v550 = vrot.slane %v530, %v549
        %v552 = vunpack.c.l.s4 1966171168
        %v553 = vunpack.c.0.s8 %v552
        %v554 = vlaneseq
        %v555 = vshrl.u32 %v554, 7
        %v556 = vsub.s32 %v553, %v555
        %v557 = vrot.slane %v531, %v556
        %v559 = vunpack.c.l.s4 1966171168
        %v560 = vunpack.c.0.s8 %v559
        %v561 = vlaneseq
        %v562 = vshrl.u32 %v561, 7
        %v563 = vsub.s32 %v560, %v562
        %v564 = vrot.slane %v532, %v563
        %v565 = vcombine.low %v543, %v550
        %v566 = vcombine.low %v557, %v564
        %v568 = vunpack.c.l.s4 1966171168
        %v569 = vunpack.c.0.s8 %v568
        %v570 = vlaneseq
        %v571 = vshrl.u32 %v570, 7
        %v572 = vsub.s32 %v569, %v571
        %v573 = vrot.slane %v565, %v572
        %v575 = vunpack.c.l.s4 1966171168
        %v576 = vunpack.c.0.s8 %v575
        %v577 = vlaneseq
        %v578 = vshrl.u32 %v577, 7
        %v579 = vsub.s32 %v576, %v578
        %v580 = vrot.slane %v566, %v579
        %v581 = vcombine.high %v573, %v580
        %s583 = scalar_lea.vmem [#allocation2], 2
        %584 = vst [vmem:[%s583] ss:$8 sm:$0xf] %v581
        %585 = vst [vmem:[%s583] ss:$8 sm:$0xf0] %v581
        %v586 = vmul.f32 %v370, -0.48860252
        %v587 = vmul.f32 %v371, -0.48860252
        %v588 = vmul.f32 %v372, -0.48860252
        %v589 = vmul.f32 %v373, -0.48860252
        %v595 = vunpack.c.l.s4 1966171168
        %v596 = vunpack.c.0.s8 %v595
        %v597 = vlaneseq
        %v598 = vshrl.u32 %v597, 7
        %v599 = vsub.s32 %v596, %v598
        %v600 = vrot.slane %v586, %v599
        %v602 = vunpack.c.l.s4 1966171168
        %v603 = vunpack.c.0.s8 %v602
        %v604 = vlaneseq
        %v605 = vshrl.u32 %v604, 7
        %v606 = vsub.s32 %v603, %v605
        %v607 = vrot.slane %v587, %v606
        %v609 = vunpack.c.l.s4 1966171168
        %v610 = vunpack.c.0.s8 %v609
        %v611 = vlaneseq
        %v612 = vshrl.u32 %v611, 7
        %v613 = vsub.s32 %v610, %v612
        %v614 = vrot.slane %v588, %v613
        %v616 = vunpack.c.l.s4 1966171168
        %v617 = vunpack.c.0.s8 %v616
        %v618 = vlaneseq
        %v619 = vshrl.u32 %v618, 7
        %v620 = vsub.s32 %v617, %v619
        %v621 = vrot.slane %v589, %v620
        %v622 = vcombine.low %v600, %v607
        %v623 = vcombine.low %v614, %v621
        %v625 = vunpack.c.l.s4 1966171168
        %v626 = vunpack.c.0.s8 %v625
        %v627 = vlaneseq
        %v628 = vshrl.u32 %v627, 7
        %v629 = vsub.s32 %v626, %v628
        %v630 = vrot.slane %v622, %v629
        %v632 = vunpack.c.l.s4 1966171168
        %v633 = vunpack.c.0.s8 %v632
        %v634 = vlaneseq
        %v635 = vshrl.u32 %v634, 7
        %v636 = vsub.s32 %v633, %v635
        %v637 = vrot.slane %v623, %v636
        %v638 = vcombine.low %v630, %v637
        %s640 = scalar_lea.vmem [#allocation2], 3
        %641 = vst [vmem:[%s640] ss:$8 sm:$0xf] %v638
        %642 = vst [vmem:[%s640] ss:$8 sm:$0xf0] %v638
        %v643 = vmul.f32 %v418, 1.0925485
        %v644 = vmul.f32 %v419, 1.0925485
        %v645 = vmul.f32 %v420, 1.0925485
        %v646 = vmul.f32 %v421, 1.0925485
        %v652 = vunpack.c.l.s4 1966171168
        %v653 = vunpack.c.0.s8 %v652
        %v654 = vlaneseq
        %v655 = vshrl.u32 %v654, 7
        %v656 = vsub.s32 %v653, %v655
        %v657 = vrot.slane %v643, %v656
        %v659 = vunpack.c.l.s4 1966171168
        %v660 = vunpack.c.0.s8 %v659
        %v661 = vlaneseq
        %v662 = vshrl.u32 %v661, 7
        %v663 = vsub.s32 %v660, %v662
        %v664 = vrot.slane %v644, %v663
        %v666 = vunpack.c.l.s4 1966171168
        %v667 = vunpack.c.0.s8 %v666
        %v668 = vlaneseq
        %v669 = vshrl.u32 %v668, 7
        %v670 = vsub.s32 %v667, %v669
        %v671 = vrot.slane %v645, %v670
        %v673 = vunpack.c.l.s4 1966171168
        %v674 = vunpack.c.0.s8 %v673
        %v675 = vlaneseq
        %v676 = vshrl.u32 %v675, 7
        %v677 = vsub.s32 %v674, %v676
        %v678 = vrot.slane %v646, %v677
        %v679 = vcombine.low %v657, %v664
        %v680 = vcombine.low %v671, %v678
        %v682 = vunpack.c.l.s4 1966171168
        %v683 = vunpack.c.0.s8 %v682
        %v684 = vlaneseq
        %v685 = vshrl.u32 %v684, 7
        %v686 = vsub.s32 %v683, %v685
        %v687 = vrot.slane %v679, %v686
        %v689 = vunpack.c.l.s4 1966171168
        %v690 = vunpack.c.0.s8 %v689
        %v691 = vlaneseq
        %v692 = vshrl.u32 %v691, 7
        %v693 = vsub.s32 %v690, %v692
        %v694 = vrot.slane %v680, %v693
        %v695 = vcombine.low %v687, %v694
        %s697 = scalar_lea.vmem [#allocation2], 4
        %698 = vst [vmem:[%s697] ss:$8 sm:$0xf] %v695
        %699 = vst [vmem:[%s697] ss:$8 sm:$0xf0] %v695
        %v700 = vmul.f32 %v454, -1.0925485
        %v701 = vmul.f32 %v455, -1.0925485
        %v702 = vmul.f32 %v456, -1.0925485
        %v703 = vmul.f32 %v457, -1.0925485
        %v709 = vunpack.c.l.s4 1966171168
        %v710 = vunpack.c.0.s8 %v709
        %v711 = vlaneseq
        %v712 = vshrl.u32 %v711, 7
        %v713 = vsub.s32 %v710, %v712
        %v714 = vrot.slane %v700, %v713
        %v716 = vunpack.c.l.s4 1966171168
        %v717 = vunpack.c.0.s8 %v716
        %v718 = vlaneseq
        %v719 = vshrl.u32 %v718, 7
        %v720 = vsub.s32 %v717, %v719
        %v721 = vrot.slane %v701, %v720
        %v723 = vunpack.c.l.s4 1966171168
        %v724 = vunpack.c.0.s8 %v723
        %v725 = vlaneseq
        %v726 = vshrl.u32 %v725, 7
        %v727 = vsub.s32 %v724, %v726
        %v728 = vrot.slane %v702, %v727
        %v730 = vunpack.c.l.s4 1966171168
        %v731 = vunpack.c.0.s8 %v730
        %v732 = vlaneseq
        %v733 = vshrl.u32 %v732, 7
        %v734 = vsub.s32 %v731, %v733
        %v735 = vrot.slane %v703, %v734
        %v736 = vcombine.high %v714, %v721
        %v737 = vcombine.high %v728, %v735
        %v739 = vunpack.c.l.s4 1966171168
        %v740 = vunpack.c.0.s8 %v739
        %v741 = vlaneseq
        %v742 = vshrl.u32 %v741, 7
        %v743 = vsub.s32 %v740, %v742
        %v744 = vrot.slane %v736, %v743
        %v746 = vunpack.c.l.s4 1966171168
        %v747 = vunpack.c.0.s8 %v746
        %v748 = vlaneseq
        %v749 = vshrl.u32 %v748, 7
        %v750 = vsub.s32 %v747, %v749
        %v751 = vrot.slane %v737, %v750
        %v752 = vcombine.low %v744, %v751
        %s754 = scalar_lea.vmem [#allocation2], 5
        %755 = vst [vmem:[%s754] ss:$8 sm:$0xf] %v752
        %756 = vst [vmem:[%s754] ss:$8 sm:$0xf0] %v752
        %v757 = vmul.f32 %v466, 0.9461747
        %v758 = vmul.f32 %v467, 0.9461747
        %v759 = vmul.f32 %v468, 0.9461747
        %v760 = vmul.f32 %v469, 0.9461747
        %v761 = vsub.f32 %v757, 0.31539157
        %v762 = vsub.f32 %v758, 0.31539157
        %v763 = vsub.f32 %v759, 0.31539157
        %v764 = vsub.f32 %v760, 0.31539157
        %v770 = vunpack.c.l.s4 1966171168
        %v771 = vunpack.c.0.s8 %v770
        %v772 = vlaneseq
        %v773 = vshrl.u32 %v772, 7
        %v774 = vsub.s32 %v771, %v773
        %v775 = vrot.slane %v761, %v774
        %v777 = vunpack.c.l.s4 1966171168
        %v778 = vunpack.c.0.s8 %v777
        %v779 = vlaneseq
        %v780 = vshrl.u32 %v779, 7
        %v781 = vsub.s32 %v778, %v780
        %v782 = vrot.slane %v762, %v781
        %v784 = vunpack.c.l.s4 1966171168
        %v785 = vunpack.c.0.s8 %v784
        %v786 = vlaneseq
        %v787 = vshrl.u32 %v786, 7
        %v788 = vsub.s32 %v785, %v787
        %v789 = vrot.slane %v763, %v788
        %v791 = vunpack.c.l.s4 1966171168
        %v792 = vunpack.c.0.s8 %v791
        %v793 = vlaneseq
        %v794 = vshrl.u32 %v793, 7
        %v795 = vsub.s32 %v792, %v794
        %v796 = vrot.slane %v764, %v795
        %v797 = vcombine.low %v775, %v782
        %v798 = vcombine.low %v789, %v796
        %v800 = vunpack.c.l.s4 1966171168
        %v801 = vunpack.c.0.s8 %v800
        %v802 = vlaneseq
        %v803 = vshrl.u32 %v802, 7
        %v804 = vsub.s32 %v801, %v803
        %v805 = vrot.slane %v797, %v804
        %v807 = vunpack.c.l.s4 1966171168
        %v808 = vunpack.c.0.s8 %v807
        %v809 = vlaneseq
        %v810 = vshrl.u32 %v809, 7
        %v811 = vsub.s32 %v808, %v810
        %v812 = vrot.slane %v798, %v811
        %v813 = vcombine.high %v805, %v812
        %s815 = scalar_lea.vmem [#allocation2], 6
        %816 = vst [vmem:[%s815] ss:$8 sm:$0xf] %v813
        %817 = vst [vmem:[%s815] ss:$8 sm:$0xf0] %v813
        %v818 = vmul.f32 %v438, -1.0925485
        %v819 = vmul.f32 %v439, -1.0925485
        %v820 = vmul.f32 %v440, -1.0925485
        %v821 = vmul.f32 %v441, -1.0925485
        %v827 = vunpack.c.l.s4 1966171168
        %v828 = vunpack.c.0.s8 %v827
        %v829 = vlaneseq
        %v830 = vshrl.u32 %v829, 7
        %v831 = vsub.s32 %v828, %v830
        %v832 = vrot.slane %v818, %v831
        %v834 = vunpack.c.l.s4 1966171168
        %v835 = vunpack.c.0.s8 %v834
        %v836 = vlaneseq
        %v837 = vshrl.u32 %v836, 7
        %v838 = vsub.s32 %v835, %v837
        %v839 = vrot.slane %v819, %v838
        %v841 = vunpack.c.l.s4 1966171168
        %v842 = vunpack.c.0.s8 %v841
        %v843 = vlaneseq
        %v844 = vshrl.u32 %v843, 7
        %v845 = vsub.s32 %v842, %v844
        %v846 = vrot.slane %v820, %v845
        %v848 = vunpack.c.l.s4 1966171168
        %v849 = vunpack.c.0.s8 %v848
        %v850 = vlaneseq
        %v851 = vshrl.u32 %v850, 7
        %v852 = vsub.s32 %v849, %v851
        %v853 = vrot.slane %v821, %v852
        %v854 = vcombine.low %v832, %v839
        %v855 = vcombine.low %v846, %v853
        %v857 = vunpack.c.l.s4 1966171168
        %v858 = vunpack.c.0.s8 %v857
        %v859 = vlaneseq
        %v860 = vshrl.u32 %v859, 7
        %v861 = vsub.s32 %v858, %v860
        %v862 = vrot.slane %v854, %v861
        %v864 = vunpack.c.l.s4 1966171168
        %v865 = vunpack.c.0.s8 %v864
        %v866 = vlaneseq
        %v867 = vshrl.u32 %v866, 7
        %v868 = vsub.s32 %v865, %v867
        %v869 = vrot.slane %v855, %v868
        %v870 = vcombine.low %v862, %v869
        %s872 = scalar_lea.vmem [#allocation2], 7
        %873 = vst [vmem:[%s872] ss:$8 sm:$0xf] %v870
        %874 = vst [vmem:[%s872] ss:$8 sm:$0xf0] %v870
        %v879 = vrot.slane %v462, 5
        %v880 = vrot.slane %v879, 4
        %v881 = vrot.slane %v463, 5
        %v882 = vrot.slane %v881, 4
        %v883 = vrot.slane %v464, 5
        %v884 = vrot.slane %v883, 4
        %v885 = vrot.slane %v465, 5
        %v886 = vrot.slane %v885, 4
        %v891 = vsub.f32 %v458, %v880
        %v892 = vsub.f32 %v459, %v882
        %v893 = vsub.f32 %v460, %v884
        %v894 = vsub.f32 %v461, %v886
        %v895 = vmul.f32 %v891, 0.54627424
        %v896 = vmul.f32 %v892, 0.54627424
        %v897 = vmul.f32 %v893, 0.54627424
        %v898 = vmul.f32 %v894, 0.54627424
        %v904 = vunpack.c.l.s4 1966171168
        %v905 = vunpack.c.0.s8 %v904
        %v906 = vlaneseq
        %v907 = vshrl.u32 %v906, 7
        %v908 = vsub.s32 %v905, %v907
        %v909 = vrot.slane %v895, %v908
        %v911 = vunpack.c.l.s4 1966171168
        %v912 = vunpack.c.0.s8 %v911
        %v913 = vlaneseq
        %v914 = vshrl.u32 %v913, 7
        %v915 = vsub.s32 %v912, %v914
        %v916 = vrot.slane %v896, %v915
        %v918 = vunpack.c.l.s4 1966171168
        %v919 = vunpack.c.0.s8 %v918
        %v920 = vlaneseq
        %v921 = vshrl.u32 %v920, 7
        %v922 = vsub.s32 %v919, %v921
        %v923 = vrot.slane %v897, %v922
        %v925 = vunpack.c.l.s4 1966171168
        %v926 = vunpack.c.0.s8 %v925
        %v927 = vlaneseq
        %v928 = vshrl.u32 %v927, 7
        %v929 = vsub.s32 %v926, %v928
        %v930 = vrot.slane %v898, %v929
        %v931 = vcombine.low %v909, %v916
        %v932 = vcombine.low %v923, %v930
        %v934 = vunpack.c.l.s4 1966171168
        %v935 = vunpack.c.0.s8 %v934
        %v936 = vlaneseq
        %v937 = vshrl.u32 %v936, 7
        %v938 = vsub.s32 %v935, %v937
        %v939 = vrot.slane %v931, %v938
        %v941 = vunpack.c.l.s4 1966171168
        %v942 = vunpack.c.0.s8 %v941
        %v943 = vlaneseq
        %v944 = vshrl.u32 %v943, 7
        %v945 = vsub.s32 %v942, %v944
        %v946 = vrot.slane %v932, %v945
        %v947 = vcombine.low %v939, %v946
        %s949 = scalar_lea.vmem [#allocation2], 64
        %950 = vst [vmem:[%s949] ss:$8 sm:$0xf] %v947
        %951 = vst [vmem:[%s949] ss:$8 sm:$0xf0] %v947
        %v952 = vmul.f32 %v386, 0.5900436
        %v953 = vmul.f32 %v387, 0.5900436
        %v954 = vmul.f32 %v388, 0.5900436
        %v955 = vmul.f32 %v389, 0.5900436
        %v956 = vmul.f32 %v458, -3.0
        %v957 = vmul.f32 %v459, -3.0
        %v958 = vmul.f32 %v460, -3.0
        %v959 = vmul.f32 %v461, -3.0
        %v960 = vadd.f32 %v956, %v880
        %v961 = vadd.f32 %v957, %v882
        %v962 = vadd.f32 %v958, %v884
        %v963 = vadd.f32 %v959, %v886
        %v968 = vrot.slane %v960, 7
        %v969 = vrot.slane %v961, 7
        %v970 = vrot.slane %v962, 7
        %v971 = vrot.slane %v963, 7
        %v976 = vmul.f32 %v952, %v968
        %v977 = vmul.f32 %v953, %v969
        %v978 = vmul.f32 %v954, %v970
        %v979 = vmul.f32 %v955, %v971
        %v985 = vunpack.c.l.s4 1966171168
        %v986 = vunpack.c.0.s8 %v985
        %v987 = vlaneseq
        %v988 = vshrl.u32 %v987, 7
        %v989 = vsub.s32 %v986, %v988
        %v990 = vrot.slane %v976, %v989
        %v992 = vunpack.c.l.s4 1966171168
        %v993 = vunpack.c.0.s8 %v992
        %v994 = vlaneseq
        %v995 = vshrl.u32 %v994, 7
        %v996 = vsub.s32 %v993, %v995
        %v997 = vrot.slane %v977, %v996
        %v999 = vunpack.c.l.s4 1966171168
        %v1000 = vunpack.c.0.s8 %v999
        %v1001 = vlaneseq
        %v1002 = vshrl.u32 %v1001, 7
        %v1003 = vsub.s32 %v1000, %v1002
        %v1004 = vrot.slane %v978, %v1003
        %v1006 = vunpack.c.l.s4 1966171168
        %v1007 = vunpack.c.0.s8 %v1006
        %v1008 = vlaneseq
        %v1009 = vshrl.u32 %v1008, 7
        %v1010 = vsub.s32 %v1007, %v1009
        %v1011 = vrot.slane %v979, %v1010
        %v1012 = vcombine.high %v990, %v997
        %v1013 = vcombine.high %v1004, %v1011
        %v1015 = vunpack.c.l.s4 1966171168
        %v1016 = vunpack.c.0.s8 %v1015
        %v1017 = vlaneseq
        %v1018 = vshrl.u32 %v1017, 7
        %v1019 = vsub.s32 %v1016, %v1018
        %v1020 = vrot.slane %v1012, %v1019
        %v1022 = vunpack.c.l.s4 1966171168
        %v1023 = vunpack.c.0.s8 %v1022
        %v1024 = vlaneseq
        %v1025 = vshrl.u32 %v1024, 7
        %v1026 = vsub.s32 %v1023, %v1025
        %v1027 = vrot.slane %v1013, %v1026
        %v1028 = vcombine.low %v1020, %v1027
        %s1030 = scalar_lea.vmem [#allocation2], 65
        %1031 = vst [vmem:[%s1030] ss:$8 sm:$0xf] %v1028
        %1032 = vst [vmem:[%s1030] ss:$8 sm:$0xf0] %v1028
        %v1033 = vmul.f32 %v418, 2.8906114
        %v1034 = vmul.f32 %v419, 2.8906114
        %v1035 = vmul.f32 %v420, 2.8906114
        %v1036 = vmul.f32 %v421, 2.8906114
        %v1037 = vmul.f32 %v1033, %v427
        %v1038 = vmul.f32 %v1034, %v429
        %v1039 = vmul.f32 %v1035, %v431
        %v1040 = vmul.f32 %v1036, %v433
        %v1046 = vunpack.c.l.s4 1966171168
        %v1047 = vunpack.c.0.s8 %v1046
        %v1048 = vlaneseq
        %v1049 = vshrl.u32 %v1048, 7
        %v1050 = vsub.s32 %v1047, %v1049
        %v1051 = vrot.slane %v1037, %v1050
        %v1053 = vunpack.c.l.s4 1966171168
        %v1054 = vunpack.c.0.s8 %v1053
        %v1055 = vlaneseq
        %v1056 = vshrl.u32 %v1055, 7
        %v1057 = vsub.s32 %v1054, %v1056
        %v1058 = vrot.slane %v1038, %v1057
        %v1060 = vunpack.c.l.s4 1966171168
        %v1061 = vunpack.c.0.s8 %v1060
        %v1062 = vlaneseq
        %v1063 = vshrl.u32 %v1062, 7
        %v1064 = vsub.s32 %v1061, %v1063
        %v1065 = vrot.slane %v1039, %v1064
        %v1067 = vunpack.c.l.s4 1966171168
        %v1068 = vunpack.c.0.s8 %v1067
        %v1069 = vlaneseq
        %v1070 = vshrl.u32 %v1069, 7
        %v1071 = vsub.s32 %v1068, %v1070
        %v1072 = vrot.slane %v1040, %v1071
        %v1073 = vcombine.low %v1051, %v1058
        %v1074 = vcombine.low %v1065, %v1072
        %v1076 = vunpack.c.l.s4 1966171168
        %v1077 = vunpack.c.0.s8 %v1076
        %v1078 = vlaneseq
        %v1079 = vshrl.u32 %v1078, 7
        %v1080 = vsub.s32 %v1077, %v1079
        %v1081 = vrot.slane %v1073, %v1080
        %v1083 = vunpack.c.l.s4 1966171168
        %v1084 = vunpack.c.0.s8 %v1083
        %v1085 = vlaneseq
        %v1086 = vshrl.u32 %v1085, 7
        %v1087 = vsub.s32 %v1084, %v1086
        %v1088 = vrot.slane %v1074, %v1087
        %v1089 = vcombine.low %v1081, %v1088
        %s1091 = scalar_lea.vmem [#allocation2], 66
        %1092 = vst [vmem:[%s1091] ss:$8 sm:$0xf] %v1089
        %1093 = vst [vmem:[%s1091] ss:$8 sm:$0xf0] %v1089
        %v1094 = vmul.f32 %v386, 0.4570458
        %v1095 = vmul.f32 %v387, 0.4570458
        %v1096 = vmul.f32 %v388, 0.4570458
        %v1097 = vmul.f32 %v389, 0.4570458
        %v1098 = vmul.f32 %v466, 5.0
        %v1099 = vmul.f32 %v467, 5.0
        %v1100 = vmul.f32 %v468, 5.0
        %v1101 = vmul.f32 %v469, 5.0
        %v1102 = vsub.f32 1.0, %v1098
        %v1103 = vsub.f32 1.0, %v1099
        %v1104 = vsub.f32 1.0, %v1100
        %v1105 = vsub.f32 1.0, %v1101
        %v1110 = vrot.slane %v1102, 5
        %v1111 = vrot.slane %v1110, 4
        %v1112 = vrot.slane %v1103, 5
        %v1113 = vrot.slane %v1112, 4
        %v1114 = vrot.slane %v1104, 5
        %v1115 = vrot.slane %v1114, 4
        %v1116 = vrot.slane %v1105, 5
        %v1117 = vrot.slane %v1116, 4
        %v1122 = vmul.f32 %v1094, %v1111
        %v1123 = vmul.f32 %v1095, %v1113
        %v1124 = vmul.f32 %v1096, %v1115
        %v1125 = vmul.f32 %v1097, %v1117
        %v1131 = vunpack.c.l.s4 1966171168
        %v1132 = vunpack.c.0.s8 %v1131
        %v1133 = vlaneseq
        %v1134 = vshrl.u32 %v1133, 7
        %v1135 = vsub.s32 %v1132, %v1134
        %v1136 = vrot.slane %v1122, %v1135
        %v1138 = vunpack.c.l.s4 1966171168
        %v1139 = vunpack.c.0.s8 %v1138
        %v1140 = vlaneseq
        %v1141 = vshrl.u32 %v1140, 7
        %v1142 = vsub.s32 %v1139, %v1141
        %v1143 = vrot.slane %v1123, %v1142
        %v1145 = vunpack.c.l.s4 1966171168
        %v1146 = vunpack.c.0.s8 %v1145
        %v1147 = vlaneseq
        %v1148 = vshrl.u32 %v1147, 7
        %v1149 = vsub.s32 %v1146, %v1148
        %v1150 = vrot.slane %v1124, %v1149
        %v1152 = vunpack.c.l.s4 1966171168
        %v1153 = vunpack.c.0.s8 %v1152
        %v1154 = vlaneseq
        %v1155 = vshrl.u32 %v1154, 7
        %v1156 = vsub.s32 %v1153, %v1155
        %v1157 = vrot.slane %v1125, %v1156
        %v1158 = vcombine.high %v1136, %v1143
        %v1159 = vcombine.high %v1150, %v1157
        %v1161 = vunpack.c.l.s4 1966171168
        %v1162 = vunpack.c.0.s8 %v1161
        %v1163 = vlaneseq
        %v1164 = vshrl.u32 %v1163, 7
        %v1165 = vsub.s32 %v1162, %v1164
        %v1166 = vrot.slane %v1158, %v1165
        %v1168 = vunpack.c.l.s4 1966171168
        %v1169 = vunpack.c.0.s8 %v1168
        %v1170 = vlaneseq
        %v1171 = vshrl.u32 %v1170, 7
        %v1172 = vsub.s32 %v1169, %v1171
        %v1173 = vrot.slane %v1159, %v1172
        %v1174 = vcombine.low %v1166, %v1173
        %s1176 = scalar_lea.vmem [#allocation2], 67
        %1177 = vst [vmem:[%s1176] ss:$8 sm:$0xf] %v1174
        %1178 = vst [vmem:[%s1176] ss:$8 sm:$0xf0] %v1174
        %v1179 = vmul.f32 %v398, 0.37317634
        %v1180 = vmul.f32 %v399, 0.37317634
        %v1181 = vmul.f32 %v400, 0.37317634
        %v1182 = vmul.f32 %v401, 0.37317634
        %v1183 = vsub.f32 %v1098, 3.0
        %v1184 = vsub.f32 %v1099, 3.0
        %v1185 = vsub.f32 %v1100, 3.0
        %v1186 = vsub.f32 %v1101, 3.0
        %v1187 = vmul.f32 %v1179, %v1183
        %v1188 = vmul.f32 %v1180, %v1184
        %v1189 = vmul.f32 %v1181, %v1185
        %v1190 = vmul.f32 %v1182, %v1186
        %v1196 = vunpack.c.l.s4 1966171168
        %v1197 = vunpack.c.0.s8 %v1196
        %v1198 = vlaneseq
        %v1199 = vshrl.u32 %v1198, 7
        %v1200 = vsub.s32 %v1197, %v1199
        %v1201 = vrot.slane %v1187, %v1200
        %v1203 = vunpack.c.l.s4 1966171168
        %v1204 = vunpack.c.0.s8 %v1203
        %v1205 = vlaneseq
        %v1206 = vshrl.u32 %v1205, 7
        %v1207 = vsub.s32 %v1204, %v1206
        %v1208 = vrot.slane %v1188, %v1207
        %v1210 = vunpack.c.l.s4 1966171168
        %v1211 = vunpack.c.0.s8 %v1210
        %v1212 = vlaneseq
        %v1213 = vshrl.u32 %v1212, 7
        %v1214 = vsub.s32 %v1211, %v1213
        %v1215 = vrot.slane %v1189, %v1214
        %v1217 = vunpack.c.l.s4 1966171168
        %v1218 = vunpack.c.0.s8 %v1217
        %v1219 = vlaneseq
        %v1220 = vshrl.u32 %v1219, 7
        %v1221 = vsub.s32 %v1218, %v1220
        %v1222 = vrot.slane %v1190, %v1221
        %v1223 = vcombine.low %v1201, %v1208
        %v1224 = vcombine.low %v1215, %v1222
        %v1226 = vunpack.c.l.s4 1966171168
        %v1227 = vunpack.c.0.s8 %v1226
        %v1228 = vlaneseq
        %v1229 = vshrl.u32 %v1228, 7
        %v1230 = vsub.s32 %v1227, %v1229
        %v1231 = vrot.slane %v1223, %v1230
        %v1233 = vunpack.c.l.s4 1966171168
        %v1234 = vunpack.c.0.s8 %v1233
        %v1235 = vlaneseq
        %v1236 = vshrl.u32 %v1235, 7
        %v1237 = vsub.s32 %v1234, %v1236
        %v1238 = vrot.slane %v1224, %v1237
        %v1239 = vcombine.high %v1231, %v1238
        %s1241 = scalar_lea.vmem [#allocation2], 68
        %1242 = vst [vmem:[%s1241] ss:$8 sm:$0xf] %v1239
        %1243 = vst [vmem:[%s1241] ss:$8 sm:$0xf0] %v1239
        %v1244 = vmul.f32 %v370, 0.4570458
        %v1245 = vmul.f32 %v371, 0.4570458
        %v1246 = vmul.f32 %v372, 0.4570458
        %v1247 = vmul.f32 %v373, 0.4570458
        %v1248 = vrot.slane %v1102, 6
        %v1249 = vrot.slane %v1248, 4
        %v1250 = vrot.slane %v1103, 6
        %v1251 = vrot.slane %v1250, 4
        %v1252 = vrot.slane %v1104, 6
        %v1253 = vrot.slane %v1252, 4
        %v1254 = vrot.slane %v1105, 6
        %v1255 = vrot.slane %v1254, 4
        %v1260 = vmul.f32 %v1244, %v1249
        %v1261 = vmul.f32 %v1245, %v1251
        %v1262 = vmul.f32 %v1246, %v1253
        %v1263 = vmul.f32 %v1247, %v1255
        %v1269 = vunpack.c.l.s4 1966171168
        %v1270 = vunpack.c.0.s8 %v1269
        %v1271 = vlaneseq
        %v1272 = vshrl.u32 %v1271, 7
        %v1273 = vsub.s32 %v1270, %v1272
        %v1274 = vrot.slane %v1260, %v1273
        %v1276 = vunpack.c.l.s4 1966171168
        %v1277 = vunpack.c.0.s8 %v1276
        %v1278 = vlaneseq
        %v1279 = vshrl.u32 %v1278, 7
        %v1280 = vsub.s32 %v1277, %v1279
        %v1281 = vrot.slane %v1261, %v1280
        %v1283 = vunpack.c.l.s4 1966171168
        %v1284 = vunpack.c.0.s8 %v1283
        %v1285 = vlaneseq
        %v1286 = vshrl.u32 %v1285, 7
        %v1287 = vsub.s32 %v1284, %v1286
        %v1288 = vrot.slane %v1262, %v1287
        %v1290 = vunpack.c.l.s4 1966171168
        %v1291 = vunpack.c.0.s8 %v1290
        %v1292 = vlaneseq
        %v1293 = vshrl.u32 %v1292, 7
        %v1294 = vsub.s32 %v1291, %v1293
        %v1295 = vrot.slane %v1263, %v1294
        %v1296 = vcombine.low %v1274, %v1281
        %v1297 = vcombine.low %v1288, %v1295
        %v1299 = vunpack.c.l.s4 1966171168
        %v1300 = vunpack.c.0.s8 %v1299
        %v1301 = vlaneseq
        %v1302 = vshrl.u32 %v1301, 7
        %v1303 = vsub.s32 %v1300, %v1302
        %v1304 = vrot.slane %v1296, %v1303
        %v1306 = vunpack.c.l.s4 1966171168
        %v1307 = vunpack.c.0.s8 %v1306
        %v1308 = vlaneseq
        %v1309 = vshrl.u32 %v1308, 7
        %v1310 = vsub.s32 %v1307, %v1309
        %v1311 = vrot.slane %v1297, %v1310
        %v1312 = vcombine.low %v1304, %v1311
        %s1314 = scalar_lea.vmem [#allocation2], 69
        %1315 = vst [vmem:[%s1314] ss:$8 sm:$0xf] %v1312
        %1316 = vst [vmem:[%s1314] ss:$8 sm:$0xf0] %v1312
        %v1317 = vmul.f32 %v398, 1.4453057
        %v1318 = vmul.f32 %v399, 1.4453057
        %v1319 = vmul.f32 %v400, 1.4453057
        %v1320 = vmul.f32 %v401, 1.4453057
        %v1325 = vrot.slane %v891, 6
        %v1326 = vrot.slane %v892, 6
        %v1327 = vrot.slane %v893, 6
        %v1328 = vrot.slane %v894, 6
        %v1333 = vmul.f32 %v1317, %v1325
        %v1334 = vmul.f32 %v1318, %v1326
        %v1335 = vmul.f32 %v1319, %v1327
        %v1336 = vmul.f32 %v1320, %v1328
        %v1342 = vunpack.c.l.s4 1966171168
        %v1343 = vunpack.c.0.s8 %v1342
        %v1344 = vlaneseq
        %v1345 = vshrl.u32 %v1344, 7
        %v1346 = vsub.s32 %v1343, %v1345
        %v1347 = vrot.slane %v1333, %v1346
        %v1349 = vunpack.c.l.s4 1966171168
        %v1350 = vunpack.c.0.s8 %v1349
        %v1351 = vlaneseq
        %v1352 = vshrl.u32 %v1351, 7
        %v1353 = vsub.s32 %v1350, %v1352
        %v1354 = vrot.slane %v1334, %v1353
        %v1356 = vunpack.c.l.s4 1966171168
        %v1357 = vunpack.c.0.s8 %v1356
        %v1358 = vlaneseq
        %v1359 = vshrl.u32 %v1358, 7
        %v1360 = vsub.s32 %v1357, %v1359
        %v1361 = vrot.slane %v1335, %v1360
        %v1363 = vunpack.c.l.s4 1966171168
        %v1364 = vunpack.c.0.s8 %v1363
        %v1365 = vlaneseq
        %v1366 = vshrl.u32 %v1365, 7
        %v1367 = vsub.s32 %v1364, %v1366
        %v1368 = vrot.slane %v1336, %v1367
        %v1369 = vcombine.low %v1347, %v1354
        %v1370 = vcombine.low %v1361, %v1368
        %v1372 = vunpack.c.l.s4 1966171168
        %v1373 = vunpack.c.0.s8 %v1372
        %v1374 = vlaneseq
        %v1375 = vshrl.u32 %v1374, 7
        %v1376 = vsub.s32 %v1373, %v1375
        %v1377 = vrot.slane %v1369, %v1376
        %v1379 = vunpack.c.l.s4 1966171168
        %v1380 = vunpack.c.0.s8 %v1379
        %v1381 = vlaneseq
        %v1382 = vshrl.u32 %v1381, 7
        %v1383 = vsub.s32 %v1380, %v1382
        %v1384 = vrot.slane %v1370, %v1383
        %v1385 = vcombine.high %v1377, %v1384
        %s1387 = scalar_lea.vmem [#allocation2], 70
        %1388 = vst [vmem:[%s1387] ss:$8 sm:$0xf] %v1385
        %1389 = vst [vmem:[%s1387] ss:$8 sm:$0xf0] %v1385
        %v1390 = vmul.f32 %v370, 0.5900436
        %v1391 = vmul.f32 %v371, 0.5900436
        %v1392 = vmul.f32 %v372, 0.5900436
        %v1393 = vmul.f32 %v373, 0.5900436
        %v1394 = vsub.f32 0.0, %v458
        %v1395 = vsub.f32 0.0, %v459
        %v1396 = vsub.f32 0.0, %v460
        %v1397 = vsub.f32 0.0, %v461
        %v1398 = vmul.f32 %v462, 3.0
        %v1399 = vmul.f32 %v463, 3.0
        %v1400 = vmul.f32 %v464, 3.0
        %v1401 = vmul.f32 %v465, 3.0
        %v1406 = vrot.slane %v1398, 5
        %v1407 = vrot.slane %v1406, 4
        %v1408 = vrot.slane %v1399, 5
        %v1409 = vrot.slane %v1408, 4
        %v1410 = vrot.slane %v1400, 5
        %v1411 = vrot.slane %v1410, 4
        %v1412 = vrot.slane %v1401, 5
        %v1413 = vrot.slane %v1412, 4
        %v1418 = vadd.f32 %v1394, %v1407
        %v1419 = vadd.f32 %v1395, %v1409
        %v1420 = vadd.f32 %v1396, %v1411
        %v1421 = vadd.f32 %v1397, %v1413
        %v1422 = vmul.f32 %v1390, %v1418
        %v1423 = vmul.f32 %v1391, %v1419
        %v1424 = vmul.f32 %v1392, %v1420
        %v1425 = vmul.f32 %v1393, %v1421
        %v1431 = vunpack.c.l.s4 1966171168
        %v1432 = vunpack.c.0.s8 %v1431
        %v1433 = vlaneseq
        %v1434 = vshrl.u32 %v1433, 7
        %v1435 = vsub.s32 %v1432, %v1434
        %v1436 = vrot.slane %v1422, %v1435
        %v1438 = vunpack.c.l.s4 1966171168
        %v1439 = vunpack.c.0.s8 %v1438
        %v1440 = vlaneseq
        %v1441 = vshrl.u32 %v1440, 7
        %v1442 = vsub.s32 %v1439, %v1441
        %v1443 = vrot.slane %v1423, %v1442
        %v1445 = vunpack.c.l.s4 1966171168
        %v1446 = vunpack.c.0.s8 %v1445
        %v1447 = vlaneseq
        %v1448 = vshrl.u32 %v1447, 7
        %v1449 = vsub.s32 %v1446, %v1448
        %v1450 = vrot.slane %v1424, %v1449
        %v1452 = vunpack.c.l.s4 1966171168
        %v1453 = vunpack.c.0.s8 %v1452
        %v1454 = vlaneseq
        %v1455 = vshrl.u32 %v1454, 7
        %v1456 = vsub.s32 %v1453, %v1455
        %v1457 = vrot.slane %v1425, %v1456
        %v1458 = vcombine.low %v1436, %v1443
        %v1459 = vcombine.low %v1450, %v1457
        %v1461 = vunpack.c.l.s4 1966171168
        %v1462 = vunpack.c.0.s8 %v1461
        %v1463 = vlaneseq
        %v1464 = vshrl.u32 %v1463, 7
        %v1465 = vsub.s32 %v1462, %v1464
        %v1466 = vrot.slane %v1458, %v1465
        %v1468 = vunpack.c.l.s4 1966171168
        %v1469 = vunpack.c.0.s8 %v1468
        %v1470 = vlaneseq
        %v1471 = vshrl.u32 %v1470, 7
        %v1472 = vsub.s32 %v1469, %v1471
        %v1473 = vrot.slane %v1459, %v1472
        %v1474 = vcombine.low %v1466, %v1473
        %s1476 = scalar_lea.vmem [#allocation2], 71
        %1477 = vst [vmem:[%s1476] ss:$8 sm:$0xf] %v1474
        %1478 = vst [vmem:[%s1476] ss:$8 sm:$0xf0] %v1474
        %v1479 = vld [vmem:[%s277] sm:$0xff]
        %v1480 = vld [vmem:[%s277 + $0x8] sm:$0xff]
        %v1481 = vld [vmem:[%s277 + $0x10] sm:$0xff]
        %v1482 = vld [vmem:[%s277 + $0x18] sm:$0xff]
        %v1483 = vld [vmem:[%s277 + $0x20] sm:$0xff]
        %v1484 = vld [vmem:[%s277 + $0x28] sm:$0xff]
        %v1485 = vld [vmem:[%s277 + $0x30] sm:$0xff]
        %v1486 = vld [vmem:[%s277 + $0x38] sm:$0xff]
        %v1487 = vld [vmem:[%s277 + $0x40] sm:$0xff]
        %v1488 = vld [vmem:[%s277 + $0x48] sm:$0xff]
        %v1489 = vld [vmem:[%s277 + $0x50] sm:$0xff]
        %v1490 = vld [vmem:[%s277 + $0x58] sm:$0xff]
        %v1491 = vld [vmem:[%s277 + $0x60] sm:$0xff]
        %v1492 = vld [vmem:[%s277 + $0x68] sm:$0xff]
        %v1493 = vld [vmem:[%s277 + $0x70] sm:$0xff]
        %v1494 = vld [vmem:[%s277 + $0x78] sm:$0xff]
        %v1495 = vld [vmem:[%s2] sm:$0xf]
        %v1496 = vld [vmem:[%s2 + $0x4] sm:$0xf]
        %v1497 = vld [vmem:[%s2 + $0x8] sm:$0xf]
        %v1498 = vld [vmem:[%s2 + $0xc] sm:$0xf]
        %v1499 = vld [vmem:[%s2 + $0x10] sm:$0xf]
        %v1500 = vld [vmem:[%s2 + $0x14] sm:$0xf]
        %v1501 = vld [vmem:[%s2 + $0x18] sm:$0xf]
        %v1502 = vld [vmem:[%s2 + $0x1c] sm:$0xf]
        %v1511 = vunpack.c.l.b16 %v1495
        %v1512 = vunpack.c.l.b16 %v1496
        %v1513 = vunpack.c.l.b16 %v1497
        %v1514 = vunpack.c.l.b16 %v1498
        %v1515 = vunpack.c.l.b16 %v1499
        %v1516 = vunpack.c.l.b16 %v1500
        %v1517 = vunpack.c.l.b16 %v1501
        %v1518 = vunpack.c.l.b16 %v1502
        %v1519 = vpack.c.b16 %v1512, %v1511
        %v1520 = vpack.c.b16 %v1514, %v1513
        %v1521 = vpack.c.b16 %v1516, %v1515
        %v1522 = vpack.c.b16 %v1518, %v1517
        %v1539 = vunpack.c.l.b16 %v1479
        %v1540 = vunpack.c.h.b16 %v1479
        %v1541 = vunpack.c.l.b16 %v1480
        %v1542 = vunpack.c.h.b16 %v1480
        %v1543 = vunpack.c.l.b16 %v1481
        %v1544 = vunpack.c.h.b16 %v1481
        %v1545 = vunpack.c.l.b16 %v1482
        %v1546 = vunpack.c.h.b16 %v1482
        %v1547 = vunpack.c.l.b16 %v1483
        %v1548 = vunpack.c.h.b16 %v1483
        %v1549 = vunpack.c.l.b16 %v1484
        %v1550 = vunpack.c.h.b16 %v1484
        %v1551 = vunpack.c.l.b16 %v1485
        %v1552 = vunpack.c.h.b16 %v1485
        %v1553 = vunpack.c.l.b16 %v1486
        %v1554 = vunpack.c.h.b16 %v1486
        %v1555 = vunpack.c.l.b16 %v1487
        %v1556 = vunpack.c.h.b16 %v1487
        %v1557 = vunpack.c.l.b16 %v1488
        %v1558 = vunpack.c.h.b16 %v1488
        %v1559 = vunpack.c.l.b16 %v1489
        %v1560 = vunpack.c.h.b16 %v1489
        %v1561 = vunpack.c.l.b16 %v1490
        %v1562 = vunpack.c.h.b16 %v1490
        %v1563 = vunpack.c.l.b16 %v1491
        %v1564 = vunpack.c.h.b16 %v1491
        %v1565 = vunpack.c.l.b16 %v1492
        %v1566 = vunpack.c.h.b16 %v1492
        %v1567 = vunpack.c.l.b16 %v1493
        %v1568 = vunpack.c.h.b16 %v1493
        %v1569 = vunpack.c.l.b16 %v1494
        %v1570 = vunpack.c.h.b16 %v1494
        %v1571 = vpack.c.b16 %v1547, %v1539
        %v1572 = vpack.c.b16 %v1548, %v1540
        %v1573 = vpack.c.b16 %v1549, %v1541
        %v1574 = vpack.c.b16 %v1550, %v1542
        %v1575 = vpack.c.b16 %v1551, %v1543
        %v1576 = vpack.c.b16 %v1552, %v1544
        %v1577 = vpack.c.b16 %v1553, %v1545
        %v1578 = vpack.c.b16 %v1554, %v1546
        %v1579 = vpack.c.b16 %v1563, %v1555
        %v1580 = vpack.c.b16 %v1564, %v1556
        %v1581 = vpack.c.b16 %v1565, %v1557
        %v1582 = vpack.c.b16 %v1566, %v1558
        %v1583 = vpack.c.b16 %v1567, %v1559
        %v1584 = vpack.c.b16 %v1568, %v1560
        %v1585 = vpack.c.b16 %v1569, %v1561
        %v1586 = vpack.c.b16 %v1570, %v1562
        %vm1603 = vcmask 261120
        %v1605 = vsel %vm1603, %v1519, 0
        %v1608 = vsel %vm1603, %v1520, 0
        %v1611 = vsel %vm1603, %v1521, 0
        %v1614 = vsel %vm1603, %v1522, 0
        %1616 = vmatprep.subr.bf16.mxu0 %v1572
        %1617 = vmatpush1.bf16.msra.mxu0 %v1571
        %1618 = vmatprep.subr.bf16.mxu0 %v1580
        %1619 = vmatpush1.bf16.msra.mxu0 %v1579
        %1620 = vmatprep.subr.bf16.mxu0 0
        %1621 = vmatpush1.bf16.msra.mxu0 0
        %1622 = vmatprep.subr.bf16.mxu0 0
        %1623 = vmatpush1.bf16.msra.mxu0 0
        %1624 = vmatprep.subr.bf16.mxu0 0
        %1625 = vmatpush1.bf16.msra.mxu0 0
        %1626 = vmatprep.subr.bf16.mxu0 0
        %1627 = vmatpush1.bf16.msra.mxu0 0
        %1628 = vmatprep.subr.bf16.mxu0 0
        %1629 = vmatpush1.bf16.msra.mxu0 0
        %1630 = vmatprep.subr.bf16.mxu0 0
        %1631 = vmatpush1.bf16.msra.mxu0 0
        %1632 = vmatprep.subr.bf16.mxu0 0
        %1633 = vmatpush1.bf16.msra.mxu0 0
        %1634 = vmatprep.subr.bf16.mxu0 0
        %1635 = vmatpush1.bf16.msra.mxu0 0
        %1636 = vmatprep.subr.bf16.mxu0 0
        %1637 = vmatpush1.bf16.msra.mxu0 0
        %1638 = vmatprep.subr.bf16.mxu0 0
        %1639 = vmatpush1.bf16.msra.mxu0 0
        %1640 = vmatprep.subr.bf16.mxu0 0
        %1641 = vmatpush1.bf16.msra.mxu0 0
        %1642 = vmatprep.subr.bf16.mxu0 0
        %1643 = vmatpush1.bf16.msra.mxu0 0
        %1644 = vmatprep.subr.bf16.mxu0 0
        %1645 = vmatpush1.bf16.msra.mxu0 0
        %1646 = vmatprep.subr.bf16.mxu0 0
        %1647 = vmatpush1.bf16.msra.mxu0 0
        %1648 = vmatprep.mubr.bf16.mxu0 0
        %1649 = vmatmul.mubr.bf16.gmra.mrb[0].mxu0 %v1605
        %v1650 = vpop.f32.mrb[0].mxu0
        %v1651 = vadd.f32 0.0, %v1650
        %v1652 = vpop.f32.mrb[0].mxu0
        %v1653 = vadd.f32 0.0, %v1652
        %v1654 = vpop.f32.mrb[0].mxu0
        %v1655 = vadd.f32 0.0, %v1654
        %v1656 = vpop.f32.mrb[0].mxu0
        %v1657 = vadd.f32 0.0, %v1656
        %1658 = vmatprep.mubr.bf16.mxu0 0
        %1659 = vmatmul.mubr.bf16.gmra.mrb[0].mxu0 %v1608
        %v1660 = vpop.f32.mrb[0].mxu0
        %v1661 = vadd.f32 0.0, %v1660
        %v1662 = vpop.f32.mrb[0].mxu0
        %v1663 = vadd.f32 0.0, %v1662
        %v1664 = vpop.f32.mrb[0].mxu0
        %v1665 = vadd.f32 0.0, %v1664
        %v1666 = vpop.f32.mrb[0].mxu0
        %v1667 = vadd.f32 0.0, %v1666
        %1668 = vmatprep.mubr.bf16.mxu0 0
        %1669 = vmatmul.mubr.bf16.gmra.mrb[0].mxu0 %v1611
        %v1670 = vpop.f32.mrb[0].mxu0
        %v1671 = vadd.f32 0.0, %v1670
        %v1672 = vpop.f32.mrb[0].mxu0
        %v1673 = vadd.f32 0.0, %v1672
        %v1674 = vpop.f32.mrb[0].mxu0
        %v1675 = vadd.f32 0.0, %v1674
        %v1676 = vpop.f32.mrb[0].mxu0
        %v1677 = vadd.f32 0.0, %v1676
        %1678 = vmatprep.mubr.bf16.mxu0 0
        %1679 = vmatmul.mubr.bf16.gmra.mrb[0].mxu0 %v1614
        %v1680 = vpop.f32.mrb[0].mxu0
        %v1681 = vadd.f32 0.0, %v1680
        %v1682 = vpop.f32.mrb[0].mxu0
        %v1683 = vadd.f32 0.0, %v1682
        %v1684 = vpop.f32.mrb[0].mxu0
        %v1685 = vadd.f32 0.0, %v1684
        %v1686 = vpop.f32.mrb[0].mxu0
        %v1687 = vadd.f32 0.0, %v1686
        %1688 = vdwg.mxu0
        %1689 = vmatprep.subr.bf16.mxu0 %v1574
        %1690 = vmatpush1.bf16.msra.mxu0 %v1573
        %1691 = vmatprep.subr.bf16.mxu0 %v1582
        %1692 = vmatpush1.bf16.msra.mxu0 %v1581
        %1693 = vmatprep.subr.bf16.mxu0 0
        %1694 = vmatpush1.bf16.msra.mxu0 0
        %1695 = vmatprep.subr.bf16.mxu0 0
        %1696 = vmatpush1.bf16.msra.mxu0 0
        %1697 = vmatprep.subr.bf16.mxu0 0
        %1698 = vmatpush1.bf16.msra.mxu0 0
        %1699 = vmatprep.subr.bf16.mxu0 0
        %1700 = vmatpush1.bf16.msra.mxu0 0
        %1701 = vmatprep.subr.bf16.mxu0 0
        %1702 = vmatpush1.bf16.msra.mxu0 0
        %1703 = vmatprep.subr.bf16.mxu0 0
        %1704 = vmatpush1.bf16.msra.mxu0 0
        %1705 = vmatprep.subr.bf16.mxu0 0
        %1706 = vmatpush1.bf16.msra.mxu0 0
        %1707 = vmatprep.subr.bf16.mxu0 0
        %1708 = vmatpush1.bf16.msra.mxu0 0
        %1709 = vmatprep.subr.bf16.mxu0 0
        %1710 = vmatpush1.bf16.msra.mxu0 0
        %1711 = vmatprep.subr.bf16.mxu0 0
        %1712 = vmatpush1.bf16.msra.mxu0 0
        %1713 = vmatprep.subr.bf16.mxu0 0
        %1714 = vmatpush1.bf16.msra.mxu0 0
        %1715 = vmatprep.subr.bf16.mxu0 0
        %1716 = vmatpush1.bf16.msra.mxu0 0
        %1717 = vmatprep.subr.bf16.mxu0 0
        %1718 = vmatpush1.bf16.msra.mxu0 0
        %1719 = vmatprep.subr.bf16.mxu0 0
        %1720 = vmatpush1.bf16.msra.mxu0 0
        %1721 = vmatprep.mubr.bf16.mxu0 0
        %1722 = vmatmul.mubr.bf16.gmra.mrb[0].mxu0 %v1605
        %v1723 = vpop.f32.mrb[0].mxu0
        %v1724 = vadd.f32 0.0, %v1723
        %v1725 = vpop.f32.mrb[0].mxu0
        %v1726 = vadd.f32 0.0, %v1725
        %v1727 = vpop.f32.mrb[0].mxu0
        %v1728 = vadd.f32 0.0, %v1727
        %v1729 = vpop.f32.mrb[0].mxu0
        %v1730 = vadd.f32 0.0, %v1729
        %1731 = vmatprep.mubr.bf16.mxu0 0
        %1732 = vmatmul.mubr.bf16.gmra.mrb[0].mxu0 %v1608
        %v1733 = vpop.f32.mrb[0].mxu0
        %v1734 = vadd.f32 0.0, %v1733
        %v1735 = vpop.f32.mrb[0].mxu0
        %v1736 = vadd.f32 0.0, %v1735
        %v1737 = vpop.f32.mrb[0].mxu0
        %v1738 = vadd.f32 0.0, %v1737
        %v1739 = vpop.f32.mrb[0].mxu0
        %v1740 = vadd.f32 0.0, %v1739
        %1741 = vmatprep.mubr.bf16.mxu0 0
        %1742 = vmatmul.mubr.bf16.gmra.mrb[0].mxu0 %v1611
        %v1743 = vpop.f32.mrb[0].mxu0
        %v1744 = vadd.f32 0.0, %v1743
        %v1745 = vpop.f32.mrb[0].mxu0
        %v1746 = vadd.f32 0.0, %v1745
        %v1747 = vpop.f32.mrb[0].mxu0
        %v1748 = vadd.f32 0.0, %v1747
        %v1749 = vpop.f32.mrb[0].mxu0
        %v1750 = vadd.f32 0.0, %v1749
        %1751 = vmatprep.mubr.bf16.mxu0 0
        %1752 = vmatmul.mubr.bf16.gmra.mrb[0].mxu0 %v1614
        %v1753 = vpop.f32.mrb[0].mxu0
        %v1754 = vadd.f32 0.0, %v1753
        %v1755 = vpop.f32.mrb[0].mxu0
        %v1756 = vadd.f32 0.0, %v1755
        %v1757 = vpop.f32.mrb[0].mxu0
        %v1758 = vadd.f32 0.0, %v1757
        %v1759 = vpop.f32.mrb[0].mxu0
        %v1760 = vadd.f32 0.0, %v1759
        %1761 = vdwg.mxu0
        %1762 = vmatprep.subr.bf16.mxu0 %v1576
        %1763 = vmatpush1.bf16.msra.mxu0 %v1575
        %1764 = vmatprep.subr.bf16.mxu0 %v1584
        %1765 = vmatpush1.bf16.msra.mxu0 %v1583
        %1766 = vmatprep.subr.bf16.mxu0 0
        %1767 = vmatpush1.bf16.msra.mxu0 0
        %1768 = vmatprep.subr.bf16.mxu0 0
        %1769 = vmatpush1.bf16.msra.mxu0 0
        %1770 = vmatprep.subr.bf16.mxu0 0
        %1771 = vmatpush1.bf16.msra.mxu0 0
        %1772 = vmatprep.subr.bf16.mxu0 0
        %1773 = vmatpush1.bf16.msra.mxu0 0
        %1774 = vmatprep.subr.bf16.mxu0 0
        %1775 = vmatpush1.bf16.msra.mxu0 0
        %1776 = vmatprep.subr.bf16.mxu0 0
        %1777 = vmatpush1.bf16.msra.mxu0 0
        %1778 = vmatprep.subr.bf16.mxu0 0
        %1779 = vmatpush1.bf16.msra.mxu0 0
        %1780 = vmatprep.subr.bf16.mxu0 0
        %1781 = vmatpush1.bf16.msra.mxu0 0
        %1782 = vmatprep.subr.bf16.mxu0 0
        %1783 = vmatpush1.bf16.msra.mxu0 0
        %1784 = vmatprep.subr.bf16.mxu0 0
        %1785 = vmatpush1.bf16.msra.mxu0 0
        %1786 = vmatprep.subr.bf16.mxu0 0
        %1787 = vmatpush1.bf16.msra.mxu0 0
        %1788 = vmatprep.subr.bf16.mxu0 0
        %1789 = vmatpush1.bf16.msra.mxu0 0
        %1790 = vmatprep.subr.bf16.mxu0 0
        %1791 = vmatpush1.bf16.msra.mxu0 0
        %1792 = vmatprep.subr.bf16.mxu0 0
        %1793 = vmatpush1.bf16.msra.mxu0 0
        %1794 = vmatprep.mubr.bf16.mxu0 0
        %1795 = vmatmul.mubr.bf16.gmra.mrb[0].mxu0 %v1605
        %v1796 = vpop.f32.mrb[0].mxu0
        %v1797 = vadd.f32 0.0, %v1796
        %v1798 = vpop.f32.mrb[0].mxu0
        %v1799 = vadd.f32 0.0, %v1798
        %v1800 = vpop.f32.mrb[0].mxu0
        %v1801 = vadd.f32 0.0, %v1800
        %v1802 = vpop.f32.mrb[0].mxu0
        %v1803 = vadd.f32 0.0, %v1802
        %1804 = vmatprep.mubr.bf16.mxu0 0
        %1805 = vmatmul.mubr.bf16.gmra.mrb[0].mxu0 %v1608
        %v1806 = vpop.f32.mrb[0].mxu0
        %v1807 = vadd.f32 0.0, %v1806
        %v1808 = vpop.f32.mrb[0].mxu0
        %v1809 = vadd.f32 0.0, %v1808
        %v1810 = vpop.f32.mrb[0].mxu0
        %v1811 = vadd.f32 0.0, %v1810
        %v1812 = vpop.f32.mrb[0].mxu0
        %v1813 = vadd.f32 0.0, %v1812
        %1814 = vmatprep.mubr.bf16.mxu0 0
        %1815 = vmatmul.mubr.bf16.gmra.mrb[0].mxu0 %v1611
        %v1816 = vpop.f32.mrb[0].mxu0
        %v1817 = vadd.f32 0.0, %v1816
        %v1818 = vpop.f32.mrb[0].mxu0
        %v1819 = vadd.f32 0.0, %v1818
        %v1820 = vpop.f32.mrb[0].mxu0
        %v1821 = vadd.f32 0.0, %v1820
        %v1822 = vpop.f32.mrb[0].mxu0
        %v1823 = vadd.f32 0.0, %v1822
        %1824 = vmatprep.mubr.bf16.mxu0 0
        %1825 = vmatmul.mubr.bf16.gmra.mrb[0].mxu0 %v1614
        %v1826 = vpop.f32.mrb[0].mxu0
        %v1827 = vadd.f32 0.0, %v1826
        %v1828 = vpop.f32.mrb[0].mxu0
        %v1829 = vadd.f32 0.0, %v1828
        %v1830 = vpop.f32.mrb[0].mxu0
        %v1831 = vadd.f32 0.0, %v1830
        %v1832 = vpop.f32.mrb[0].mxu0
        %v1833 = vadd.f32 0.0, %v1832
        %1834 = vdwg.mxu0
        %1835 = vmatprep.subr.bf16.mxu0 %v1578
        %1836 = vmatpush1.bf16.msra.mxu0 %v1577
        %1837 = vmatprep.subr.bf16.mxu0 %v1586
        %1838 = vmatpush1.bf16.msra.mxu0 %v1585
        %1839 = vmatprep.subr.bf16.mxu0 0
        %1840 = vmatpush1.bf16.msra.mxu0 0
        %1841 = vmatprep.subr.bf16.mxu0 0
        %1842 = vmatpush1.bf16.msra.mxu0 0
        %1843 = vmatprep.subr.bf16.mxu0 0
        %1844 = vmatpush1.bf16.msra.mxu0 0
        %1845 = vmatprep.subr.bf16.mxu0 0
        %1846 = vmatpush1.bf16.msra.mxu0 0
        %1847 = vmatprep.subr.bf16.mxu0 0
        %1848 = vmatpush1.bf16.msra.mxu0 0
        %1849 = vmatprep.subr.bf16.mxu0 0
        %1850 = vmatpush1.bf16.msra.mxu0 0
        %1851 = vmatprep.subr.bf16.mxu0 0
        %1852 = vmatpush1.bf16.msra.mxu0 0
        %1853 = vmatprep.subr.bf16.mxu0 0
        %1854 = vmatpush1.bf16.msra.mxu0 0
        %1855 = vmatprep.subr.bf16.mxu0 0
        %1856 = vmatpush1.bf16.msra.mxu0 0
        %1857 = vmatprep.subr.bf16.mxu0 0
        %1858 = vmatpush1.bf16.msra.mxu0 0
        %1859 = vmatprep.subr.bf16.mxu0 0
        %1860 = vmatpush1.bf16.msra.mxu0 0
        %1861 = vmatprep.subr.bf16.mxu0 0
        %1862 = vmatpush1.bf16.msra.mxu0 0
        %1863 = vmatprep.subr.bf16.mxu0 0
        %1864 = vmatpush1.bf16.msra.mxu0 0
        %1865 = vmatprep.subr.bf16.mxu0 0
        %1866 = vmatpush1.bf16.msra.mxu0 0
        %1867 = vmatprep.mubr.bf16.mxu0 0
        %1868 = vmatmul.mubr.bf16.gmra.mrb[0].mxu0 %v1605
        %v1869 = vpop.f32.mrb[0].mxu0
        %v1870 = vadd.f32 0.0, %v1869
        %v1871 = vpop.f32.mrb[0].mxu0
        %v1872 = vadd.f32 0.0, %v1871
        %v1873 = vpop.f32.mrb[0].mxu0
        %v1874 = vadd.f32 0.0, %v1873
        %v1875 = vpop.f32.mrb[0].mxu0
        %v1876 = vadd.f32 0.0, %v1875
        %1877 = vmatprep.mubr.bf16.mxu0 0
        %1878 = vmatmul.mubr.bf16.gmra.mrb[0].mxu0 %v1608
        %v1879 = vpop.f32.mrb[0].mxu0
        %v1880 = vadd.f32 0.0, %v1879
        %v1881 = vpop.f32.mrb[0].mxu0
        %v1882 = vadd.f32 0.0, %v1881
        %v1883 = vpop.f32.mrb[0].mxu0
        %v1884 = vadd.f32 0.0, %v1883
        %v1885 = vpop.f32.mrb[0].mxu0
        %v1886 = vadd.f32 0.0, %v1885
        %1887 = vmatprep.mubr.bf16.mxu0 0
        %1888 = vmatmul.mubr.bf16.gmra.mrb[0].mxu0 %v1611
        %v1889 = vpop.f32.mrb[0].mxu0
        %v1890 = vadd.f32 0.0, %v1889
        %v1891 = vpop.f32.mrb[0].mxu0
        %v1892 = vadd.f32 0.0, %v1891
        %v1893 = vpop.f32.mrb[0].mxu0
        %v1894 = vadd.f32 0.0, %v1893
        %v1895 = vpop.f32.mrb[0].mxu0
        %v1896 = vadd.f32 0.0, %v1895
        %1897 = vmatprep.mubr.bf16.mxu0 0
        %1898 = vmatmul.mubr.bf16.gmra.mrb[0].mxu0 %v1614
        %v1899 = vpop.f32.mrb[0].mxu0
        %v1900 = vadd.f32 0.0, %v1899
        %v1901 = vpop.f32.mrb[0].mxu0
        %v1902 = vadd.f32 0.0, %v1901
        %v1903 = vpop.f32.mrb[0].mxu0
        %v1904 = vadd.f32 0.0, %v1903
        %v1905 = vpop.f32.mrb[0].mxu0
        %v1906 = vadd.f32 0.0, %v1905
        %1907 = vdwg.mxu0
        %v1908 = vmax.f32 %v1651, 0.0
        %v1909 = vmax.f32 %v1653, 0.0
        %v1910 = vmax.f32 %v1724, 0.0
        %v1911 = vmax.f32 %v1726, 0.0
        %v1912 = vmax.f32 %v1797, 0.0
        %v1913 = vmax.f32 %v1799, 0.0
        %v1914 = vmax.f32 %v1870, 0.0
        %v1915 = vmax.f32 %v1872, 0.0
        %v1916 = vmax.f32 %v1655, 0.0
        %v1917 = vmax.f32 %v1657, 0.0
        %v1918 = vmax.f32 %v1728, 0.0
        %v1919 = vmax.f32 %v1730, 0.0
        %v1920 = vmax.f32 %v1801, 0.0
        %v1921 = vmax.f32 %v1803, 0.0
        %v1922 = vmax.f32 %v1874, 0.0
        %v1923 = vmax.f32 %v1876, 0.0
        %v1924 = vmax.f32 %v1661, 0.0
        %v1925 = vmax.f32 %v1663, 0.0
        %v1926 = vmax.f32 %v1734, 0.0
        %v1927 = vmax.f32 %v1736, 0.0
        %v1928 = vmax.f32 %v1807, 0.0
        %v1929 = vmax.f32 %v1809, 0.0
        %v1930 = vmax.f32 %v1880, 0.0
        %v1931 = vmax.f32 %v1882, 0.0
        %v1932 = vmax.f32 %v1665, 0.0
        %v1933 = vmax.f32 %v1667, 0.0
        %v1934 = vmax.f32 %v1738, 0.0
        %v1935 = vmax.f32 %v1740, 0.0
        %v1936 = vmax.f32 %v1811, 0.0
        %v1937 = vmax.f32 %v1813, 0.0
        %v1938 = vmax.f32 %v1884, 0.0
        %v1939 = vmax.f32 %v1886, 0.0
        %v1940 = vmax.f32 %v1671, 0.0
        %v1941 = vmax.f32 %v1673, 0.0
        %v1942 = vmax.f32 %v1744, 0.0
        %v1943 = vmax.f32 %v1746, 0.0
        %v1944 = vmax.f32 %v1817, 0.0
        %v1945 = vmax.f32 %v1819, 0.0
        %v1946 = vmax.f32 %v1890, 0.0
        %v1947 = vmax.f32 %v1892, 0.0
        %v1948 = vmax.f32 %v1675, 0.0
        %v1949 = vmax.f32 %v1677, 0.0
        %v1950 = vmax.f32 %v1748, 0.0
        %v1951 = vmax.f32 %v1750, 0.0
        %v1952 = vmax.f32 %v1821, 0.0
        %v1953 = vmax.f32 %v1823, 0.0
        %v1954 = vmax.f32 %v1894, 0.0
        %v1955 = vmax.f32 %v1896, 0.0
        %v1956 = vmax.f32 %v1681, 0.0
        %v1957 = vmax.f32 %v1683, 0.0
        %v1958 = vmax.f32 %v1754, 0.0
        %v1959 = vmax.f32 %v1756, 0.0
        %v1960 = vmax.f32 %v1827, 0.0
        %v1961 = vmax.f32 %v1829, 0.0
        %v1962 = vmax.f32 %v1900, 0.0
        %v1963 = vmax.f32 %v1902, 0.0
        %v1964 = vmax.f32 %v1685, 0.0
        %v1965 = vmax.f32 %v1687, 0.0
        %v1966 = vmax.f32 %v1758, 0.0
        %v1967 = vmax.f32 %v1760, 0.0
        %v1968 = vmax.f32 %v1831, 0.0
        %v1969 = vmax.f32 %v1833, 0.0
        %v1970 = vmax.f32 %v1904, 0.0
        %v1971 = vmax.f32 %v1906, 0.0
        %v1972 = vld [vmem:[%s3] sm:$0xf]
        %v1973 = vld [vmem:[%s3 + $0x4] sm:$0xf]
        %v1974 = vpack.c.bf16 %v1916, %v1908
        %v1975 = vpack.c.bf16 %v1917, %v1909
        %v1976 = vpack.c.bf16 %v1918, %v1910
        %v1977 = vpack.c.bf16 %v1919, %v1911
        %v1978 = vpack.c.bf16 %v1920, %v1912
        %v1979 = vpack.c.bf16 %v1921, %v1913
        %v1980 = vpack.c.bf16 %v1922, %v1914
        %v1981 = vpack.c.bf16 %v1923, %v1915
        %v1982 = vpack.c.bf16 %v1932, %v1924
        %v1983 = vpack.c.bf16 %v1933, %v1925
        %v1984 = vpack.c.bf16 %v1934, %v1926
        %v1985 = vpack.c.bf16 %v1935, %v1927
        %v1986 = vpack.c.bf16 %v1936, %v1928
        %v1987 = vpack.c.bf16 %v1937, %v1929
        %v1988 = vpack.c.bf16 %v1938, %v1930
        %v1989 = vpack.c.bf16 %v1939, %v1931
        %v1990 = vpack.c.bf16 %v1948, %v1940
        %v1991 = vpack.c.bf16 %v1949, %v1941
        %v1992 = vpack.c.bf16 %v1950, %v1942
        %v1993 = vpack.c.bf16 %v1951, %v1943
        %v1994 = vpack.c.bf16 %v1952, %v1944
        %v1995 = vpack.c.bf16 %v1953, %v1945
        %v1996 = vpack.c.bf16 %v1954, %v1946
        %v1997 = vpack.c.bf16 %v1955, %v1947
        %v1998 = vpack.c.bf16 %v1964, %v1956
        %v1999 = vpack.c.bf16 %v1965, %v1957
        %v2000 = vpack.c.bf16 %v1966, %v1958
        %v2001 = vpack.c.bf16 %v1967, %v1959
        %v2002 = vpack.c.bf16 %v1968, %v1960
        %v2003 = vpack.c.bf16 %v1969, %v1961
        %v2004 = vpack.c.bf16 %v1970, %v1962
        %v2005 = vpack.c.bf16 %v1971, %v1963
        %v2008 = vunpack.c.l.b16 %v1972
        %v2009 = vunpack.c.l.b16 %v1973
        %v2010 = vpack.c.b16 %v2009, %v2008
        %vm2011 = vcmask 523264
        %v2013 = vsel %vm2011, %v2010, 0
        %2015 = vmatprep.subr.bf16.mxu0 %v1975
        %2016 = vmatpush1.bf16.msra.mxu0 %v1974
        %2017 = vmatprep.subr.bf16.mxu0 %v1983
        %2018 = vmatpush1.bf16.msra.mxu0 %v1982
        %2019 = vmatprep.subr.bf16.mxu0 %v1991
        %2020 = vmatpush1.bf16.msra.mxu0 %v1990
        %2021 = vmatprep.subr.bf16.mxu0 %v1999
        %2022 = vmatpush1.bf16.msra.mxu0 %v1998
        %2023 = vmatprep.subr.bf16.mxu0 0
        %2024 = vmatpush1.bf16.msra.mxu0 0
        %2025 = vmatprep.subr.bf16.mxu0 0
        %2026 = vmatpush1.bf16.msra.mxu0 0
        %2027 = vmatprep.subr.bf16.mxu0 0
        %2028 = vmatpush1.bf16.msra.mxu0 0
        %2029 = vmatprep.subr.bf16.mxu0 0
        %2030 = vmatpush1.bf16.msra.mxu0 0
        %2031 = vmatprep.subr.bf16.mxu0 0
        %2032 = vmatpush1.bf16.msra.mxu0 0
        %2033 = vmatprep.subr.bf16.mxu0 0
        %2034 = vmatpush1.bf16.msra.mxu0 0
        %2035 = vmatprep.subr.bf16.mxu0 0
        %2036 = vmatpush1.bf16.msra.mxu0 0
        %2037 = vmatprep.subr.bf16.mxu0 0
        %2038 = vmatpush1.bf16.msra.mxu0 0
        %2039 = vmatprep.subr.bf16.mxu0 0
        %2040 = vmatpush1.bf16.msra.mxu0 0
        %2041 = vmatprep.subr.bf16.mxu0 0
        %2042 = vmatpush1.bf16.msra.mxu0 0
        %2043 = vmatprep.subr.bf16.mxu0 0
        %2044 = vmatpush1.bf16.msra.mxu0 0
        %2045 = vmatprep.subr.bf16.mxu0 0
        %2046 = vmatpush1.bf16.msra.mxu0 0
        %2047 = vmatprep.mubr.bf16.mxu0 0
        %2048 = vmatmul.mubr.bf16.gmra.mrb[0].mxu0 %v2013
        %v2049 = vpop.f32.mrb[0].mxu0
        %v2050 = vadd.f32 0.0, %v2049
        %v2051 = vpop.f32.mrb[0].mxu0
        %v2052 = vadd.f32 0.0, %v2051
        %v2053 = vpop.f32.mrb[0].mxu0
        %v2054 = vadd.f32 0.0, %v2053
        %v2055 = vpop.f32.mrb[0].mxu0
        %v2056 = vadd.f32 0.0, %v2055
        %2057 = vdwg.mxu0
        %2058 = vmatprep.subr.bf16.mxu0 %v1977
        %2059 = vmatpush1.bf16.msra.mxu0 %v1976
        %2060 = vmatprep.subr.bf16.mxu0 %v1985
        %2061 = vmatpush1.bf16.msra.mxu0 %v1984
        %2062 = vmatprep.subr.bf16.mxu0 %v1993
        %2063 = vmatpush1.bf16.msra.mxu0 %v1992
        %2064 = vmatprep.subr.bf16.mxu0 %v2001
        %2065 = vmatpush1.bf16.msra.mxu0 %v2000
        %2066 = vmatprep.subr.bf16.mxu0 0
        %2067 = vmatpush1.bf16.msra.mxu0 0
        %2068 = vmatprep.subr.bf16.mxu0 0
        %2069 = vmatpush1.bf16.msra.mxu0 0
        %2070 = vmatprep.subr.bf16.mxu0 0
        %2071 = vmatpush1.bf16.msra.mxu0 0
        %2072 = vmatprep.subr.bf16.mxu0 0
        %2073 = vmatpush1.bf16.msra.mxu0 0
        %2074 = vmatprep.subr.bf16.mxu0 0
        %2075 = vmatpush1.bf16.msra.mxu0 0
        %2076 = vmatprep.subr.bf16.mxu0 0
        %2077 = vmatpush1.bf16.msra.mxu0 0
        %2078 = vmatprep.subr.bf16.mxu0 0
        %2079 = vmatpush1.bf16.msra.mxu0 0
        %2080 = vmatprep.subr.bf16.mxu0 0
        %2081 = vmatpush1.bf16.msra.mxu0 0
        %2082 = vmatprep.subr.bf16.mxu0 0
        %2083 = vmatpush1.bf16.msra.mxu0 0
        %2084 = vmatprep.subr.bf16.mxu0 0
        %2085 = vmatpush1.bf16.msra.mxu0 0
        %2086 = vmatprep.subr.bf16.mxu0 0
        %2087 = vmatpush1.bf16.msra.mxu0 0
        %2088 = vmatprep.subr.bf16.mxu0 0
        %2089 = vmatpush1.bf16.msra.mxu0 0
        %2090 = vmatprep.mubr.bf16.mxu0 0
        %2091 = vmatmul.mubr.bf16.gmra.mrb[0].mxu0 %v2013
        %v2092 = vpop.f32.mrb[0].mxu0
        %v2093 = vadd.f32 0.0, %v2092
        %v2094 = vpop.f32.mrb[0].mxu0
        %v2095 = vadd.f32 0.0, %v2094
        %v2096 = vpop.f32.mrb[0].mxu0
        %v2097 = vadd.f32 0.0, %v2096
        %v2098 = vpop.f32.mrb[0].mxu0
        %v2099 = vadd.f32 0.0, %v2098
        %2100 = vdwg.mxu0
        %2101 = vmatprep.subr.bf16.mxu0 %v1979
        %2102 = vmatpush1.bf16.msra.mxu0 %v1978
        %2103 = vmatprep.subr.bf16.mxu0 %v1987
        %2104 = vmatpush1.bf16.msra.mxu0 %v1986
        %2105 = vmatprep.subr.bf16.mxu0 %v1995
        %2106 = vmatpush1.bf16.msra.mxu0 %v1994
        %2107 = vmatprep.subr.bf16.mxu0 %v2003
        %2108 = vmatpush1.bf16.msra.mxu0 %v2002
        %2109 = vmatprep.subr.bf16.mxu0 0
        %2110 = vmatpush1.bf16.msra.mxu0 0
        %2111 = vmatprep.subr.bf16.mxu0 0
        %2112 = vmatpush1.bf16.msra.mxu0 0
        %2113 = vmatprep.subr.bf16.mxu0 0
        %2114 = vmatpush1.bf16.msra.mxu0 0
        %2115 = vmatprep.subr.bf16.mxu0 0
        %2116 = vmatpush1.bf16.msra.mxu0 0
        %2117 = vmatprep.subr.bf16.mxu0 0
        %2118 = vmatpush1.bf16.msra.mxu0 0
        %2119 = vmatprep.subr.bf16.mxu0 0
        %2120 = vmatpush1.bf16.msra.mxu0 0
        %2121 = vmatprep.subr.bf16.mxu0 0
        %2122 = vmatpush1.bf16.msra.mxu0 0
        %2123 = vmatprep.subr.bf16.mxu0 0
        %2124 = vmatpush1.bf16.msra.mxu0 0
        %2125 = vmatprep.subr.bf16.mxu0 0
        %2126 = vmatpush1.bf16.msra.mxu0 0
        %2127 = vmatprep.subr.bf16.mxu0 0
        %2128 = vmatpush1.bf16.msra.mxu0 0
        %2129 = vmatprep.subr.bf16.mxu0 0
        %2130 = vmatpush1.bf16.msra.mxu0 0
        %2131 = vmatprep.subr.bf16.mxu0 0
        %2132 = vmatpush1.bf16.msra.mxu0 0
        %2133 = vmatprep.mubr.bf16.mxu0 0
        %2134 = vmatmul.mubr.bf16.gmra.mrb[0].mxu0 %v2013
        %v2135 = vpop.f32.mrb[0].mxu0
        %v2136 = vadd.f32 0.0, %v2135
        %v2137 = vpop.f32.mrb[0].mxu0
        %v2138 = vadd.f32 0.0, %v2137
        %v2139 = vpop.f32.mrb[0].mxu0
        %v2140 = vadd.f32 0.0, %v2139
        %v2141 = vpop.f32.mrb[0].mxu0
        %v2142 = vadd.f32 0.0, %v2141
        %2143 = vdwg.mxu0
        %2144 = vmatprep.subr.bf16.mxu0 %v1981
        %2145 = vmatpush1.bf16.msra.mxu0 %v1980
        %2146 = vmatprep.subr.bf16.mxu0 %v1989
        %2147 = vmatpush1.bf16.msra.mxu0 %v1988
        %2148 = vmatprep.subr.bf16.mxu0 %v1997
        %2149 = vmatpush1.bf16.msra.mxu0 %v1996
        %2150 = vmatprep.subr.bf16.mxu0 %v2005
        %2151 = vmatpush1.bf16.msra.mxu0 %v2004
        %2152 = vmatprep.subr.bf16.mxu0 0
        %2153 = vmatpush1.bf16.msra.mxu0 0
        %2154 = vmatprep.subr.bf16.mxu0 0
        %2155 = vmatpush1.bf16.msra.mxu0 0
        %2156 = vmatprep.subr.bf16.mxu0 0
        %2157 = vmatpush1.bf16.msra.mxu0 0
        %2158 = vmatprep.subr.bf16.mxu0 0
        %2159 = vmatpush1.bf16.msra.mxu0 0
        %2160 = vmatprep.subr.bf16.mxu0 0
        %2161 = vmatpush1.bf16.msra.mxu0 0
        %2162 = vmatprep.subr.bf16.mxu0 0
        %2163 = vmatpush1.bf16.msra.mxu0 0
        %2164 = vmatprep.subr.bf16.mxu0 0
        %2165 = vmatpush1.bf16.msra.mxu0 0
        %2166 = vmatprep.subr.bf16.mxu0 0
        %2167 = vmatpush1.bf16.msra.mxu0 0
        %2168 = vmatprep.subr.bf16.mxu0 0
        %2169 = vmatpush1.bf16.msra.mxu0 0
        %2170 = vmatprep.subr.bf16.mxu0 0
        %2171 = vmatpush1.bf16.msra.mxu0 0
        %2172 = vmatprep.subr.bf16.mxu0 0
        %2173 = vmatpush1.bf16.msra.mxu0 0
        %2174 = vmatprep.subr.bf16.mxu0 0
        %2175 = vmatpush1.bf16.msra.mxu0 0
        %2176 = vmatprep.mubr.bf16.mxu0 0
        %2177 = vmatmul.mubr.bf16.gmra.mrb[0].mxu0 %v2013
        %v2178 = vpop.f32.mrb[0].mxu0
        %v2179 = vadd.f32 0.0, %v2178
        %v2180 = vpop.f32.mrb[0].mxu0
        %v2181 = vadd.f32 0.0, %v2180
        %v2182 = vpop.f32.mrb[0].mxu0
        %v2183 = vadd.f32 0.0, %v2182
        %v2184 = vpop.f32.mrb[0].mxu0
        %v2185 = vadd.f32 0.0, %v2184
        %2186 = vdwg.mxu0
        %v2187 = vmul.f32 %v2050, 1.442695
        %v2188 = vpow.pop %v2187
        %v2189 = vmul.f32 %v2052, 1.442695
        %v2190 = vpow.pop %v2189
        %v2191 = vmul.f32 %v2093, 1.442695
        %v2192 = vpow.pop %v2191
        %v2193 = vmul.f32 %v2095, 1.442695
        %v2194 = vpow.pop %v2193
        %v2195 = vmul.f32 %v2136, 1.442695
        %v2196 = vpow.pop %v2195
        %v2197 = vmul.f32 %v2138, 1.442695
        %v2198 = vpow.pop %v2197
        %v2199 = vmul.f32 %v2179, 1.442695
        %v2200 = vpow.pop %v2199
        %v2201 = vmul.f32 %v2181, 1.442695
        %v2202 = vpow.pop %v2201
        %v2211 = vcombine.low %v2188, %v2190
        %v2212 = vcombine.low %v2192, %v2194
        %v2213 = vcombine.low %v2196, %v2198
        %v2214 = vcombine.low %v2200, %v2202
        %v2216 = vunpack.c.l.s4 1966171168
        %v2217 = vunpack.c.0.s8 %v2216
        %v2218 = vlaneseq
        %v2219 = vshrl.u32 %v2218, 7
        %v2220 = vsub.s32 %v2217, %v2219
        %v2221 = vrot.slane %v2211, %v2220
        %v2223 = vunpack.c.l.s4 1966171168
        %v2224 = vunpack.c.0.s8 %v2223
        %v2225 = vlaneseq
        %v2226 = vshrl.u32 %v2225, 7
        %v2227 = vsub.s32 %v2224, %v2226
        %v2228 = vrot.slane %v2212, %v2227
        %v2230 = vunpack.c.l.s4 1966171168
        %v2231 = vunpack.c.0.s8 %v2230
        %v2232 = vlaneseq
        %v2233 = vshrl.u32 %v2232, 7
        %v2234 = vsub.s32 %v2231, %v2233
        %v2235 = vrot.slane %v2213, %v2234
        %v2237 = vunpack.c.l.s4 1966171168
        %v2238 = vunpack.c.0.s8 %v2237
        %v2239 = vlaneseq
        %v2240 = vshrl.u32 %v2239, 7
        %v2241 = vsub.s32 %v2238, %v2240
        %v2242 = vrot.slane %v2214, %v2241
        %v2243 = vcombine.low %v2221, %v2228
        %v2244 = vcombine.low %v2235, %v2242
        %v2246 = vunpack.c.l.s4 1966171168
        %v2247 = vunpack.c.0.s8 %v2246
        %v2248 = vlaneseq
        %v2249 = vshrl.u32 %v2248, 7
        %v2250 = vsub.s32 %v2247, %v2249
        %v2251 = vrot.slane %v2243, %v2250
        %v2253 = vunpack.c.l.s4 1966171168
        %v2254 = vunpack.c.0.s8 %v2253
        %v2255 = vlaneseq
        %v2256 = vshrl.u32 %v2255, 7
        %v2257 = vsub.s32 %v2254, %v2256
        %v2258 = vrot.slane %v2244, %v2257
        %v2259 = vcombine.low %v2251, %v2258
        %2261 = vst [vmem:[%s312] ss:$4 sm:$0xff] %v2259
        %2262 = vst [vmem:[#allocation2 + $0x80] sm:$0xff] %v2050
        %2263 = vst [vmem:[#allocation2 + $0x88] sm:$0xff] %v2052
        %2264 = vst [vmem:[#allocation2 + $0x90] sm:$0xff] %v2093
        %2265 = vst [vmem:[#allocation2 + $0x98] sm:$0xff] %v2095
        %2266 = vst [vmem:[#allocation2 + $0xa0] sm:$0xff] %v2136
        %2267 = vst [vmem:[#allocation2 + $0xa8] sm:$0xff] %v2138
        %2268 = vst [vmem:[#allocation2 + $0xb0] sm:$0xff] %v2179
        %2269 = vst [vmem:[#allocation2 + $0xb8] sm:$0xff] %v2181
        %2270 = vst [vmem:[#allocation2 + $0xc0] sm:$0xff] %v2054
        %2271 = vst [vmem:[#allocation2 + $0xc8] sm:$0xff] %v2056
        %2272 = vst [vmem:[#allocation2 + $0xd0] sm:$0xff] %v2097
        %2273 = vst [vmem:[#allocation2 + $0xd8] sm:$0xff] %v2099
        %2274 = vst [vmem:[#allocation2 + $0xe0] sm:$0xff] %v2140
        %2275 = vst [vmem:[#allocation2 + $0xe8] sm:$0xff] %v2142
        %2276 = vst [vmem:[#allocation2 + $0xf0] sm:$0xff] %v2183
        %2277 = vst [vmem:[#allocation2 + $0xf8] sm:$0xff] %v2185
        %v2278 = vld [vmem:[#allocation2] sm:$0xff]
        %v2279 = vld [vmem:[#allocation2 + $0x8] sm:$0xff]
        %v2280 = vld [vmem:[#allocation2 + $0x10] sm:$0xff]
        %v2281 = vld [vmem:[#allocation2 + $0x18] sm:$0xff]
        %v2282 = vld [vmem:[#allocation2 + $0x20] sm:$0xff]
        %v2283 = vld [vmem:[#allocation2 + $0x28] sm:$0xff]
        %v2284 = vld [vmem:[#allocation2 + $0x30] sm:$0xff]
        %v2285 = vld [vmem:[#allocation2 + $0x38] sm:$0xff]
        %v2286 = vld [vmem:[#allocation2 + $0x40] sm:$0xff]
        %v2287 = vld [vmem:[#allocation2 + $0x48] sm:$0xff]
        %v2288 = vld [vmem:[#allocation2 + $0x50] sm:$0xff]
        %v2289 = vld [vmem:[#allocation2 + $0x58] sm:$0xff]
        %v2290 = vld [vmem:[#allocation2 + $0x60] sm:$0xff]
        %v2291 = vld [vmem:[#allocation2 + $0x68] sm:$0xff]
        %v2292 = vld [vmem:[#allocation2 + $0x70] sm:$0xff]
        %v2293 = vld [vmem:[#allocation2 + $0x78] sm:$0xff]
        %v2294 = vld [vmem:[#allocation2 + $0x80] sm:$0xff]
        %v2295 = vld [vmem:[#allocation2 + $0x88] sm:$0xff]
        %v2296 = vld [vmem:[#allocation2 + $0x90] sm:$0xff]
        %v2297 = vld [vmem:[#allocation2 + $0x98] sm:$0xff]
        %v2298 = vld [vmem:[#allocation2 + $0xa0] sm:$0xff]
        %v2299 = vld [vmem:[#allocation2 + $0xa8] sm:$0xff]
        %v2300 = vld [vmem:[#allocation2 + $0xb0] sm:$0xff]
        %v2301 = vld [vmem:[#allocation2 + $0xb8] sm:$0xff]
        %v2302 = vld [vmem:[#allocation2 + $0xc0] sm:$0xff]
        %v2303 = vld [vmem:[#allocation2 + $0xc8] sm:$0xff]
        %v2304 = vld [vmem:[#allocation2 + $0xd0] sm:$0xff]
        %v2305 = vld [vmem:[#allocation2 + $0xd8] sm:$0xff]
        %v2306 = vld [vmem:[#allocation2 + $0xe0] sm:$0xff]
        %v2307 = vld [vmem:[#allocation2 + $0xe8] sm:$0xff]
        %v2308 = vld [vmem:[#allocation2 + $0xf0] sm:$0xff]
        %v2309 = vld [vmem:[#allocation2 + $0xf8] sm:$0xff]
        %v2310 = vpack.c.bf16 %v2286, %v2278
        %v2311 = vpack.c.bf16 %v2287, %v2279
        %v2312 = vpack.c.bf16 %v2288, %v2280
        %v2313 = vpack.c.bf16 %v2289, %v2281
        %v2314 = vpack.c.bf16 %v2290, %v2282
        %v2315 = vpack.c.bf16 %v2291, %v2283
        %v2316 = vpack.c.bf16 %v2292, %v2284
        %v2317 = vpack.c.bf16 %v2293, %v2285
        %v2318 = vpack.c.bf16 %v2302, %v2294
        %v2319 = vpack.c.bf16 %v2303, %v2295
        %v2320 = vpack.c.bf16 %v2304, %v2296
        %v2321 = vpack.c.bf16 %v2305, %v2297
        %v2322 = vpack.c.bf16 %v2306, %v2298
        %v2323 = vpack.c.bf16 %v2307, %v2299
        %v2324 = vpack.c.bf16 %v2308, %v2300
        %v2325 = vpack.c.bf16 %v2309, %v2301
        %v2326 = vld [vmem:[%s4] sm:$0xf]
        %v2327 = vld [vmem:[%s4 + $0x4] sm:$0xf]
        %v2328 = vld [vmem:[%s4 + $0x8] sm:$0xf]
        %v2329 = vld [vmem:[%s4 + $0xc] sm:$0xf]
        %v2330 = vld [vmem:[%s4 + $0x10] sm:$0xf]
        %v2331 = vld [vmem:[%s4 + $0x14] sm:$0xf]
        %v2332 = vld [vmem:[%s4 + $0x18] sm:$0xf]
        %v2333 = vld [vmem:[%s4 + $0x1c] sm:$0xf]
        %v2342 = vunpack.c.l.b16 %v2326
        %v2343 = vunpack.c.l.b16 %v2327
        %v2344 = vunpack.c.l.b16 %v2328
        %v2345 = vunpack.c.l.b16 %v2329
        %v2346 = vunpack.c.l.b16 %v2330
        %v2347 = vunpack.c.l.b16 %v2331
        %v2348 = vunpack.c.l.b16 %v2332
        %v2349 = vunpack.c.l.b16 %v2333
        %v2350 = vpack.c.b16 %v2343, %v2342
        %v2351 = vpack.c.b16 %v2345, %v2344
        %v2352 = vpack.c.b16 %v2347, %v2346
        %v2353 = vpack.c.b16 %v2349, %v2348
        %v2355 = vsel %vm1603, %v2350, 0
        %v2358 = vsel %vm1603, %v2351, 0
        %v2361 = vsel %vm1603, %v2352, 0
        %v2364 = vsel %vm1603, %v2353, 0
        %2366 = vmatprep.subr.bf16.mxu0 %v2311
        %2367 = vmatpush1.bf16.msra.mxu0 %v2310
        %2368 = vmatprep.subr.bf16.mxu0 %v2319
        %2369 = vmatpush1.bf16.msra.mxu0 %v2318
        %2370 = vmatprep.subr.bf16.mxu0 0
        %2371 = vmatpush1.bf16.msra.mxu0 0
        %2372 = vmatprep.subr.bf16.mxu0 0
        %2373 = vmatpush1.bf16.msra.mxu0 0
        %2374 = vmatprep.subr.bf16.mxu0 0
        %2375 = vmatpush1.bf16.msra.mxu0 0
        %2376 = vmatprep.subr.bf16.mxu0 0
        %2377 = vmatpush1.bf16.msra.mxu0 0
        %2378 = vmatprep.subr.bf16.mxu0 0
        %2379 = vmatpush1.bf16.msra.mxu0 0
        %2380 = vmatprep.subr.bf16.mxu0 0
        %2381 = vmatpush1.bf16.msra.mxu0 0
        %2382 = vmatprep.subr.bf16.mxu0 0
        %2383 = vmatpush1.bf16.msra.mxu0 0
        %2384 = vmatprep.subr.bf16.mxu0 0
        %2385 = vmatpush1.bf16.msra.mxu0 0
        %2386 = vmatprep.subr.bf16.mxu0 0
        %2387 = vmatpush1.bf16.msra.mxu0 0
        %2388 = vmatprep.subr.bf16.mxu0 0
        %2389 = vmatpush1.bf16.msra.mxu0 0
        %2390 = vmatprep.subr.bf16.mxu0 0
        %2391 = vmatpush1.bf16.msra.mxu0 0
        %2392 = vmatprep.subr.bf16.mxu0 0
        %2393 = vmatpush1.bf16.msra.mxu0 0
        %2394 = vmatprep.subr.bf16.mxu0 0
        %2395 = vmatpush1.bf16.msra.mxu0 0
        %2396 = vmatprep.subr.bf16.mxu0 0
        %2397 = vmatpush1.bf16.msra.mxu0 0
        %2398 = vmatprep.mubr.bf16.mxu0 0
        %2399 = vmatmul.mubr.bf16.gmra.mrb[0].mxu0 %v2355
        %v2400 = vpop.f32.mrb[0].mxu0
        %v2401 = vadd.f32 0.0, %v2400
        %v2402 = vpop.f32.mrb[0].mxu0
        %v2403 = vadd.f32 0.0, %v2402
        %v2404 = vpop.f32.mrb[0].mxu0
        %v2405 = vadd.f32 0.0, %v2404
        %v2406 = vpop.f32.mrb[0].mxu0
        %v2407 = vadd.f32 0.0, %v2406
        %2408 = vmatprep.mubr.bf16.mxu0 0
        %2409 = vmatmul.mubr.bf16.gmra.mrb[0].mxu0 %v2358
        %v2410 = vpop.f32.mrb[0].mxu0
        %v2411 = vadd.f32 0.0, %v2410
        %v2412 = vpop.f32.mrb[0].mxu0
        %v2413 = vadd.f32 0.0, %v2412
        %v2414 = vpop.f32.mrb[0].mxu0
        %v2415 = vadd.f32 0.0, %v2414
        %v2416 = vpop.f32.mrb[0].mxu0
        %v2417 = vadd.f32 0.0, %v2416
        %2418 = vmatprep.mubr.bf16.mxu0 0
        %2419 = vmatmul.mubr.bf16.gmra.mrb[0].mxu0 %v2361
        %v2420 = vpop.f32.mrb[0].mxu0
        %v2421 = vadd.f32 0.0, %v2420
        %v2422 = vpop.f32.mrb[0].mxu0
        %v2423 = vadd.f32 0.0, %v2422
        %v2424 = vpop.f32.mrb[0].mxu0
        %v2425 = vadd.f32 0.0, %v2424
        %v2426 = vpop.f32.mrb[0].mxu0
        %v2427 = vadd.f32 0.0, %v2426
        %2428 = vmatprep.mubr.bf16.mxu0 0
        %2429 = vmatmul.mubr.bf16.gmra.mrb[0].mxu0 %v2364
        %v2430 = vpop.f32.mrb[0].mxu0
        %v2431 = vadd.f32 0.0, %v2430
        %v2432 = vpop.f32.mrb[0].mxu0
        %v2433 = vadd.f32 0.0, %v2432
        %v2434 = vpop.f32.mrb[0].mxu0
        %v2435 = vadd.f32 0.0, %v2434
        %v2436 = vpop.f32.mrb[0].mxu0
        %v2437 = vadd.f32 0.0, %v2436
        %2438 = vdwg.mxu0
        %2439 = vmatprep.subr.bf16.mxu0 %v2313
        %2440 = vmatpush1.bf16.msra.mxu0 %v2312
        %2441 = vmatprep.subr.bf16.mxu0 %v2321
        %2442 = vmatpush1.bf16.msra.mxu0 %v2320
        %2443 = vmatprep.subr.bf16.mxu0 0
        %2444 = vmatpush1.bf16.msra.mxu0 0
        %2445 = vmatprep.subr.bf16.mxu0 0
        %2446 = vmatpush1.bf16.msra.mxu0 0
        %2447 = vmatprep.subr.bf16.mxu0 0
        %2448 = vmatpush1.bf16.msra.mxu0 0
        %2449 = vmatprep.subr.bf16.mxu0 0
        %2450 = vmatpush1.bf16.msra.mxu0 0
        %2451 = vmatprep.subr.bf16.mxu0 0
        %2452 = vmatpush1.bf16.msra.mxu0 0
        %2453 = vmatprep.subr.bf16.mxu0 0
        %2454 = vmatpush1.bf16.msra.mxu0 0
        %2455 = vmatprep.subr.bf16.mxu0 0
        %2456 = vmatpush1.bf16.msra.mxu0 0
        %2457 = vmatprep.subr.bf16.mxu0 0
        %2458 = vmatpush1.bf16.msra.mxu0 0
        %2459 = vmatprep.subr.bf16.mxu0 0
        %2460 = vmatpush1.bf16.msra.mxu0 0
        %2461 = vmatprep.subr.bf16.mxu0 0
        %2462 = vmatpush1.bf16.msra.mxu0 0
        %2463 = vmatprep.subr.bf16.mxu0 0
        %2464 = vmatpush1.bf16.msra.mxu0 0
        %2465 = vmatprep.subr.bf16.mxu0 0
        %2466 = vmatpush1.bf16.msra.mxu0 0
        %2467 = vmatprep.subr.bf16.mxu0 0
        %2468 = vmatpush1.bf16.msra.mxu0 0
        %2469 = vmatprep.subr.bf16.mxu0 0
        %2470 = vmatpush1.bf16.msra.mxu0 0
        %2471 = vmatprep.mubr.bf16.mxu0 0
        %2472 = vmatmul.mubr.bf16.gmra.mrb[0].mxu0 %v2355
        %v2473 = vpop.f32.mrb[0].mxu0
        %v2474 = vadd.f32 0.0, %v2473
        %v2475 = vpop.f32.mrb[0].mxu0
        %v2476 = vadd.f32 0.0, %v2475
        %v2477 = vpop.f32.mrb[0].mxu0
        %v2478 = vadd.f32 0.0, %v2477
        %v2479 = vpop.f32.mrb[0].mxu0
        %v2480 = vadd.f32 0.0, %v2479
        %2481 = vmatprep.mubr.bf16.mxu0 0
        %2482 = vmatmul.mubr.bf16.gmra.mrb[0].mxu0 %v2358
        %v2483 = vpop.f32.mrb[0].mxu0
        %v2484 = vadd.f32 0.0, %v2483
        %v2485 = vpop.f32.mrb[0].mxu0
        %v2486 = vadd.f32 0.0, %v2485
        %v2487 = vpop.f32.mrb[0].mxu0
        %v2488 = vadd.f32 0.0, %v2487
        %v2489 = vpop.f32.mrb[0].mxu0
        %v2490 = vadd.f32 0.0, %v2489
        %2491 = vmatprep.mubr.bf16.mxu0 0
        %2492 = vmatmul.mubr.bf16.gmra.mrb[0].mxu0 %v2361
        %v2493 = vpop.f32.mrb[0].mxu0
        %v2494 = vadd.f32 0.0, %v2493
        %v2495 = vpop.f32.mrb[0].mxu0
        %v2496 = vadd.f32 0.0, %v2495
        %v2497 = vpop.f32.mrb[0].mxu0
        %v2498 = vadd.f32 0.0, %v2497
        %v2499 = vpop.f32.mrb[0].mxu0
        %v2500 = vadd.f32 0.0, %v2499
        %2501 = vmatprep.mubr.bf16.mxu0 0
        %2502 = vmatmul.mubr.bf16.gmra.mrb[0].mxu0 %v2364
        %v2503 = vpop.f32.mrb[0].mxu0
        %v2504 = vadd.f32 0.0, %v2503
        %v2505 = vpop.f32.mrb[0].mxu0
        %v2506 = vadd.f32 0.0, %v2505
        %v2507 = vpop.f32.mrb[0].mxu0
        %v2508 = vadd.f32 0.0, %v2507
        %v2509 = vpop.f32.mrb[0].mxu0
        %v2510 = vadd.f32 0.0, %v2509
        %2511 = vdwg.mxu0
        %2512 = vmatprep.subr.bf16.mxu0 %v2315
        %2513 = vmatpush1.bf16.msra.mxu0 %v2314
        %2514 = vmatprep.subr.bf16.mxu0 %v2323
        %2515 = vmatpush1.bf16.msra.mxu0 %v2322
        %2516 = vmatprep.subr.bf16.mxu0 0
        %2517 = vmatpush1.bf16.msra.mxu0 0
        %2518 = vmatprep.subr.bf16.mxu0 0
        %2519 = vmatpush1.bf16.msra.mxu0 0
        %2520 = vmatprep.subr.bf16.mxu0 0
        %2521 = vmatpush1.bf16.msra.mxu0 0
        %2522 = vmatprep.subr.bf16.mxu0 0
        %2523 = vmatpush1.bf16.msra.mxu0 0
        %2524 = vmatprep.subr.bf16.mxu0 0
        %2525 = vmatpush1.bf16.msra.mxu0 0
        %2526 = vmatprep.subr.bf16.mxu0 0
        %2527 = vmatpush1.bf16.msra.mxu0 0
        %2528 = vmatprep.subr.bf16.mxu0 0
        %2529 = vmatpush1.bf16.msra.mxu0 0
        %2530 = vmatprep.subr.bf16.mxu0 0
        %2531 = vmatpush1.bf16.msra.mxu0 0
        %2532 = vmatprep.subr.bf16.mxu0 0
        %2533 = vmatpush1.bf16.msra.mxu0 0
        %2534 = vmatprep.subr.bf16.mxu0 0
        %2535 = vmatpush1.bf16.msra.mxu0 0
        %2536 = vmatprep.subr.bf16.mxu0 0
        %2537 = vmatpush1.bf16.msra.mxu0 0
        %2538 = vmatprep.subr.bf16.mxu0 0
        %2539 = vmatpush1.bf16.msra.mxu0 0
        %2540 = vmatprep.subr.bf16.mxu0 0
        %2541 = vmatpush1.bf16.msra.mxu0 0
        %2542 = vmatprep.subr.bf16.mxu0 0
        %2543 = vmatpush1.bf16.msra.mxu0 0
        %2544 = vmatprep.mubr.bf16.mxu0 0
        %2545 = vmatmul.mubr.bf16.gmra.mrb[0].mxu0 %v2355
        %v2546 = vpop.f32.mrb[0].mxu0
        %v2547 = vadd.f32 0.0, %v2546
        %v2548 = vpop.f32.mrb[0].mxu0
        %v2549 = vadd.f32 0.0, %v2548
        %v2550 = vpop.f32.mrb[0].mxu0
        %v2551 = vadd.f32 0.0, %v2550
        %v2552 = vpop.f32.mrb[0].mxu0
        %v2553 = vadd.f32 0.0, %v2552
        %2554 = vmatprep.mubr.bf16.mxu0 0
        %2555 = vmatmul.mubr.bf16.gmra.mrb[0].mxu0 %v2358
        %v2556 = vpop.f32.mrb[0].mxu0
        %v2557 = vadd.f32 0.0, %v2556
        %v2558 = vpop.f32.mrb[0].mxu0
        %v2559 = vadd.f32 0.0, %v2558
        %v2560 = vpop.f32.mrb[0].mxu0
        %v2561 = vadd.f32 0.0, %v2560
        %v2562 = vpop.f32.mrb[0].mxu0
        %v2563 = vadd.f32 0.0, %v2562
        %2564 = vmatprep.mubr.bf16.mxu0 0
        %2565 = vmatmul.mubr.bf16.gmra.mrb[0].mxu0 %v2361
        %v2566 = vpop.f32.mrb[0].mxu0
        %v2567 = vadd.f32 0.0, %v2566
        %v2568 = vpop.f32.mrb[0].mxu0
        %v2569 = vadd.f32 0.0, %v2568
        %v2570 = vpop.f32.mrb[0].mxu0
        %v2571 = vadd.f32 0.0, %v2570
        %v2572 = vpop.f32.mrb[0].mxu0
        %v2573 = vadd.f32 0.0, %v2572
        %2574 = vmatprep.mubr.bf16.mxu0 0
        %2575 = vmatmul.mubr.bf16.gmra.mrb[0].mxu0 %v2364
        %v2576 = vpop.f32.mrb[0].mxu0
        %v2577 = vadd.f32 0.0, %v2576
        %v2578 = vpop.f32.mrb[0].mxu0
        %v2579 = vadd.f32 0.0, %v2578
        %v2580 = vpop.f32.mrb[0].mxu0
        %v2581 = vadd.f32 0.0, %v2580
        %v2582 = vpop.f32.mrb[0].mxu0
        %v2583 = vadd.f32 0.0, %v2582
        %2584 = vdwg.mxu0
        %2585 = vmatprep.subr.bf16.mxu0 %v2317
        %2586 = vmatpush1.bf16.msra.mxu0 %v2316
        %2587 = vmatprep.subr.bf16.mxu0 %v2325
        %2588 = vmatpush1.bf16.msra.mxu0 %v2324
        %2589 = vmatprep.subr.bf16.mxu0 0
        %2590 = vmatpush1.bf16.msra.mxu0 0
        %2591 = vmatprep.subr.bf16.mxu0 0
        %2592 = vmatpush1.bf16.msra.mxu0 0
        %2593 = vmatprep.subr.bf16.mxu0 0
        %2594 = vmatpush1.bf16.msra.mxu0 0
        %2595 = vmatprep.subr.bf16.mxu0 0
        %2596 = vmatpush1.bf16.msra.mxu0 0
        %2597 = vmatprep.subr.bf16.mxu0 0
        %2598 = vmatpush1.bf16.msra.mxu0 0
        %2599 = vmatprep.subr.bf16.mxu0 0
        %2600 = vmatpush1.bf16.msra.mxu0 0
        %2601 = vmatprep.subr.bf16.mxu0 0
        %2602 = vmatpush1.bf16.msra.mxu0 0
        %2603 = vmatprep.subr.bf16.mxu0 0
        %2604 = vmatpush1.bf16.msra.mxu0 0
        %2605 = vmatprep.subr.bf16.mxu0 0
        %2606 = vmatpush1.bf16.msra.mxu0 0
        %2607 = vmatprep.subr.bf16.mxu0 0
        %2608 = vmatpush1.bf16.msra.mxu0 0
        %2609 = vmatprep.subr.bf16.mxu0 0
        %2610 = vmatpush1.bf16.msra.mxu0 0
        %2611 = vmatprep.subr.bf16.mxu0 0
        %2612 = vmatpush1.bf16.msra.mxu0 0
        %2613 = vmatprep.subr.bf16.mxu0 0
        %2614 = vmatpush1.bf16.msra.mxu0 0
        %2615 = vmatprep.subr.bf16.mxu0 0
        %2616 = vmatpush1.bf16.msra.mxu0 0
        %2617 = vmatprep.mubr.bf16.mxu0 0
        %2618 = vmatmul.mubr.bf16.gmra.mrb[0].mxu0 %v2355
        %v2619 = vpop.f32.mrb[0].mxu0
        %v2620 = vadd.f32 0.0, %v2619
        %v2621 = vpop.f32.mrb[0].mxu0
        %v2622 = vadd.f32 0.0, %v2621
        %v2623 = vpop.f32.mrb[0].mxu0
        %v2624 = vadd.f32 0.0, %v2623
        %v2625 = vpop.f32.mrb[0].mxu0
        %v2626 = vadd.f32 0.0, %v2625
        %2627 = vmatprep.mubr.bf16.mxu0 0
        %2628 = vmatmul.mubr.bf16.gmra.mrb[0].mxu0 %v2358
        %v2629 = vpop.f32.mrb[0].mxu0
        %v2630 = vadd.f32 0.0, %v2629
        %v2631 = vpop.f32.mrb[0].mxu0
        %v2632 = vadd.f32 0.0, %v2631
        %v2633 = vpop.f32.mrb[0].mxu0
        %v2634 = vadd.f32 0.0, %v2633
        %v2635 = vpop.f32.mrb[0].mxu0
        %v2636 = vadd.f32 0.0, %v2635
        %2637 = vmatprep.mubr.bf16.mxu0 0
        %2638 = vmatmul.mubr.bf16.gmra.mrb[0].mxu0 %v2361
        %v2639 = vpop.f32.mrb[0].mxu0
        %v2640 = vadd.f32 0.0, %v2639
        %v2641 = vpop.f32.mrb[0].mxu0
        %v2642 = vadd.f32 0.0, %v2641
        %v2643 = vpop.f32.mrb[0].mxu0
        %v2644 = vadd.f32 0.0, %v2643
        %v2645 = vpop.f32.mrb[0].mxu0
        %v2646 = vadd.f32 0.0, %v2645
        %2647 = vmatprep.mubr.bf16.mxu0 0
        %2648 = vmatmul.mubr.bf16.gmra.mrb[0].mxu0 %v2364
        %v2649 = vpop.f32.mrb[0].mxu0
        %v2650 = vadd.f32 0.0, %v2649
        %v2651 = vpop.f32.mrb[0].mxu0
        %v2652 = vadd.f32 0.0, %v2651
        %v2653 = vpop.f32.mrb[0].mxu0
        %v2654 = vadd.f32 0.0, %v2653
        %v2655 = vpop.f32.mrb[0].mxu0
        %v2656 = vadd.f32 0.0, %v2655
        %2657 = vdwg.mxu0
        %v2658 = vmax.f32 %v2401, 0.0
        %v2659 = vmax.f32 %v2403, 0.0
        %v2660 = vmax.f32 %v2474, 0.0
        %v2661 = vmax.f32 %v2476, 0.0
        %v2662 = vmax.f32 %v2547, 0.0
        %v2663 = vmax.f32 %v2549, 0.0
        %v2664 = vmax.f32 %v2620, 0.0
        %v2665 = vmax.f32 %v2622, 0.0
        %v2666 = vmax.f32 %v2405, 0.0
        %v2667 = vmax.f32 %v2407, 0.0
        %v2668 = vmax.f32 %v2478, 0.0
        %v2669 = vmax.f32 %v2480, 0.0
        %v2670 = vmax.f32 %v2551, 0.0
        %v2671 = vmax.f32 %v2553, 0.0
        %v2672 = vmax.f32 %v2624, 0.0
        %v2673 = vmax.f32 %v2626, 0.0
        %v2674 = vmax.f32 %v2411, 0.0
        %v2675 = vmax.f32 %v2413, 0.0
        %v2676 = vmax.f32 %v2484, 0.0
        %v2677 = vmax.f32 %v2486, 0.0
        %v2678 = vmax.f32 %v2557, 0.0
        %v2679 = vmax.f32 %v2559, 0.0
        %v2680 = vmax.f32 %v2630, 0.0
        %v2681 = vmax.f32 %v2632, 0.0
        %v2682 = vmax.f32 %v2415, 0.0
        %v2683 = vmax.f32 %v2417, 0.0
        %v2684 = vmax.f32 %v2488, 0.0
        %v2685 = vmax.f32 %v2490, 0.0
        %v2686 = vmax.f32 %v2561, 0.0
        %v2687 = vmax.f32 %v2563, 0.0
        %v2688 = vmax.f32 %v2634, 0.0
        %v2689 = vmax.f32 %v2636, 0.0
        %v2690 = vmax.f32 %v2421, 0.0
        %v2691 = vmax.f32 %v2423, 0.0
        %v2692 = vmax.f32 %v2494, 0.0
        %v2693 = vmax.f32 %v2496, 0.0
        %v2694 = vmax.f32 %v2567, 0.0
        %v2695 = vmax.f32 %v2569, 0.0
        %v2696 = vmax.f32 %v2640, 0.0
        %v2697 = vmax.f32 %v2642, 0.0
        %v2698 = vmax.f32 %v2425, 0.0
        %v2699 = vmax.f32 %v2427, 0.0
        %v2700 = vmax.f32 %v2498, 0.0
        %v2701 = vmax.f32 %v2500, 0.0
        %v2702 = vmax.f32 %v2571, 0.0
        %v2703 = vmax.f32 %v2573, 0.0
        %v2704 = vmax.f32 %v2644, 0.0
        %v2705 = vmax.f32 %v2646, 0.0
        %v2706 = vmax.f32 %v2431, 0.0
        %v2707 = vmax.f32 %v2433, 0.0
        %v2708 = vmax.f32 %v2504, 0.0
        %v2709 = vmax.f32 %v2506, 0.0
        %v2710 = vmax.f32 %v2577, 0.0
        %v2711 = vmax.f32 %v2579, 0.0
        %v2712 = vmax.f32 %v2650, 0.0
        %v2713 = vmax.f32 %v2652, 0.0
        %v2714 = vmax.f32 %v2435, 0.0
        %v2715 = vmax.f32 %v2437, 0.0
        %v2716 = vmax.f32 %v2508, 0.0
        %v2717 = vmax.f32 %v2510, 0.0
        %v2718 = vmax.f32 %v2581, 0.0
        %v2719 = vmax.f32 %v2583, 0.0
        %v2720 = vmax.f32 %v2654, 0.0
        %v2721 = vmax.f32 %v2656, 0.0
        %v2722 = vld [vmem:[%s5] sm:$0xf]
        %v2723 = vld [vmem:[%s5 + $0x4] sm:$0xf]
        %v2724 = vld [vmem:[%s5 + $0x8] sm:$0xf]
        %v2725 = vld [vmem:[%s5 + $0xc] sm:$0xf]
        %v2726 = vld [vmem:[%s5 + $0x10] sm:$0xf]
        %v2727 = vld [vmem:[%s5 + $0x14] sm:$0xf]
        %v2728 = vld [vmem:[%s5 + $0x18] sm:$0xf]
        %v2729 = vld [vmem:[%s5 + $0x1c] sm:$0xf]
        %v2730 = vpack.c.bf16 %v2666, %v2658
        %v2731 = vpack.c.bf16 %v2667, %v2659
        %v2732 = vpack.c.bf16 %v2668, %v2660
        %v2733 = vpack.c.bf16 %v2669, %v2661
        %v2734 = vpack.c.bf16 %v2670, %v2662
        %v2735 = vpack.c.bf16 %v2671, %v2663
        %v2736 = vpack.c.bf16 %v2672, %v2664
        %v2737 = vpack.c.bf16 %v2673, %v2665
        %v2738 = vpack.c.bf16 %v2682, %v2674
        %v2739 = vpack.c.bf16 %v2683, %v2675
        %v2740 = vpack.c.bf16 %v2684, %v2676
        %v2741 = vpack.c.bf16 %v2685, %v2677
        %v2742 = vpack.c.bf16 %v2686, %v2678
        %v2743 = vpack.c.bf16 %v2687, %v2679
        %v2744 = vpack.c.bf16 %v2688, %v2680
        %v2745 = vpack.c.bf16 %v2689, %v2681
        %v2746 = vpack.c.bf16 %v2698, %v2690
        %v2747 = vpack.c.bf16 %v2699, %v2691
        %v2748 = vpack.c.bf16 %v2700, %v2692
        %v2749 = vpack.c.bf16 %v2701, %v2693
        %v2750 = vpack.c.bf16 %v2702, %v2694
        %v2751 = vpack.c.bf16 %v2703, %v2695
        %v2752 = vpack.c.bf16 %v2704, %v2696
        %v2753 = vpack.c.bf16 %v2705, %v2697
        %v2754 = vpack.c.bf16 %v2714, %v2706
        %v2755 = vpack.c.bf16 %v2715, %v2707
        %v2756 = vpack.c.bf16 %v2716, %v2708
        %v2757 = vpack.c.bf16 %v2717, %v2709
        %v2758 = vpack.c.bf16 %v2718, %v2710
        %v2759 = vpack.c.bf16 %v2719, %v2711
        %v2760 = vpack.c.bf16 %v2720, %v2712
        %v2761 = vpack.c.bf16 %v2721, %v2713
        %v2770 = vunpack.c.l.b16 %v2722
        %v2771 = vunpack.c.l.b16 %v2723
        %v2772 = vunpack.c.l.b16 %v2724
        %v2773 = vunpack.c.l.b16 %v2725
        %v2774 = vunpack.c.l.b16 %v2726
        %v2775 = vunpack.c.l.b16 %v2727
        %v2776 = vunpack.c.l.b16 %v2728
        %v2777 = vunpack.c.l.b16 %v2729
        %v2778 = vpack.c.b16 %v2771, %v2770
        %v2779 = vpack.c.b16 %v2773, %v2772
        %v2780 = vpack.c.b16 %v2775, %v2774
        %v2781 = vpack.c.b16 %v2777, %v2776
        %v2783 = vsel %vm2011, %v2778, 0
        %v2786 = vsel %vm2011, %v2779, 0
        %v2789 = vsel %vm2011, %v2780, 0
        %v2792 = vsel %vm2011, %v2781, 0
        %2794 = vmatprep.subr.bf16.mxu0 %v2731
        %2795 = vmatpush1.bf16.msra.mxu0 %v2730
        %2796 = vmatprep.subr.bf16.mxu0 %v2739
        %2797 = vmatpush1.bf16.msra.mxu0 %v2738
        %2798 = vmatprep.subr.bf16.mxu0 %v2747
        %2799 = vmatpush1.bf16.msra.mxu0 %v2746
        %2800 = vmatprep.subr.bf16.mxu0 %v2755
        %2801 = vmatpush1.bf16.msra.mxu0 %v2754
        %2802 = vmatprep.subr.bf16.mxu0 0
        %2803 = vmatpush1.bf16.msra.mxu0 0
        %2804 = vmatprep.subr.bf16.mxu0 0
        %2805 = vmatpush1.bf16.msra.mxu0 0
        %2806 = vmatprep.subr.bf16.mxu0 0
        %2807 = vmatpush1.bf16.msra.mxu0 0
        %2808 = vmatprep.subr.bf16.mxu0 0
        %2809 = vmatpush1.bf16.msra.mxu0 0
        %2810 = vmatprep.subr.bf16.mxu0 0
        %2811 = vmatpush1.bf16.msra.mxu0 0
        %2812 = vmatprep.subr.bf16.mxu0 0
        %2813 = vmatpush1.bf16.msra.mxu0 0
        %2814 = vmatprep.subr.bf16.mxu0 0
        %2815 = vmatpush1.bf16.msra.mxu0 0
        %2816 = vmatprep.subr.bf16.mxu0 0
        %2817 = vmatpush1.bf16.msra.mxu0 0
        %2818 = vmatprep.subr.bf16.mxu0 0
        %2819 = vmatpush1.bf16.msra.mxu0 0
        %2820 = vmatprep.subr.bf16.mxu0 0
        %2821 = vmatpush1.bf16.msra.mxu0 0
        %2822 = vmatprep.subr.bf16.mxu0 0
        %2823 = vmatpush1.bf16.msra.mxu0 0
        %2824 = vmatprep.subr.bf16.mxu0 0
        %2825 = vmatpush1.bf16.msra.mxu0 0
        %2826 = vmatprep.mubr.bf16.mxu0 0
        %2827 = vmatmul.mubr.bf16.gmra.mrb[0].mxu0 %v2783
        %v2828 = vpop.f32.mrb[0].mxu0
        %v2829 = vadd.f32 0.0, %v2828
        %v2830 = vpop.f32.mrb[0].mxu0
        %v2831 = vadd.f32 0.0, %v2830
        %v2832 = vpop.f32.mrb[0].mxu0
        %v2833 = vadd.f32 0.0, %v2832
        %v2834 = vpop.f32.mrb[0].mxu0
        %v2835 = vadd.f32 0.0, %v2834
        %2836 = vmatprep.mubr.bf16.mxu0 0
        %2837 = vmatmul.mubr.bf16.gmra.mrb[0].mxu0 %v2786
        %v2838 = vpop.f32.mrb[0].mxu0
        %v2839 = vadd.f32 0.0, %v2838
        %v2840 = vpop.f32.mrb[0].mxu0
        %v2841 = vadd.f32 0.0, %v2840
        %v2842 = vpop.f32.mrb[0].mxu0
        %v2843 = vadd.f32 0.0, %v2842
        %v2844 = vpop.f32.mrb[0].mxu0
        %v2845 = vadd.f32 0.0, %v2844
        %2846 = vmatprep.mubr.bf16.mxu0 0
        %2847 = vmatmul.mubr.bf16.gmra.mrb[0].mxu0 %v2789
        %v2848 = vpop.f32.mrb[0].mxu0
        %v2849 = vadd.f32 0.0, %v2848
        %v2850 = vpop.f32.mrb[0].mxu0
        %v2851 = vadd.f32 0.0, %v2850
        %v2852 = vpop.f32.mrb[0].mxu0
        %v2853 = vadd.f32 0.0, %v2852
        %v2854 = vpop.f32.mrb[0].mxu0
        %v2855 = vadd.f32 0.0, %v2854
        %2856 = vmatprep.mubr.bf16.mxu0 0
        %2857 = vmatmul.mubr.bf16.gmra.mrb[0].mxu0 %v2792
        %v2858 = vpop.f32.mrb[0].mxu0
        %v2859 = vadd.f32 0.0, %v2858
        %v2860 = vpop.f32.mrb[0].mxu0
        %v2861 = vadd.f32 0.0, %v2860
        %v2862 = vpop.f32.mrb[0].mxu0
        %v2863 = vadd.f32 0.0, %v2862
        %v2864 = vpop.f32.mrb[0].mxu0
        %v2865 = vadd.f32 0.0, %v2864
        %2866 = vdwg.mxu0
        %2867 = vmatprep.subr.bf16.mxu0 %v2733
        %2868 = vmatpush1.bf16.msra.mxu0 %v2732
        %2869 = vmatprep.subr.bf16.mxu0 %v2741
        %2870 = vmatpush1.bf16.msra.mxu0 %v2740
        %2871 = vmatprep.subr.bf16.mxu0 %v2749
        %2872 = vmatpush1.bf16.msra.mxu0 %v2748
        %2873 = vmatprep.subr.bf16.mxu0 %v2757
        %2874 = vmatpush1.bf16.msra.mxu0 %v2756
        %2875 = vmatprep.subr.bf16.mxu0 0
        %2876 = vmatpush1.bf16.msra.mxu0 0
        %2877 = vmatprep.subr.bf16.mxu0 0
        %2878 = vmatpush1.bf16.msra.mxu0 0
        %2879 = vmatprep.subr.bf16.mxu0 0
        %2880 = vmatpush1.bf16.msra.mxu0 0
        %2881 = vmatprep.subr.bf16.mxu0 0
        %2882 = vmatpush1.bf16.msra.mxu0 0
        %2883 = vmatprep.subr.bf16.mxu0 0
        %2884 = vmatpush1.bf16.msra.mxu0 0
        %2885 = vmatprep.subr.bf16.mxu0 0
        %2886 = vmatpush1.bf16.msra.mxu0 0
        %2887 = vmatprep.subr.bf16.mxu0 0
        %2888 = vmatpush1.bf16.msra.mxu0 0
        %2889 = vmatprep.subr.bf16.mxu0 0
        %2890 = vmatpush1.bf16.msra.mxu0 0
        %2891 = vmatprep.subr.bf16.mxu0 0
        %2892 = vmatpush1.bf16.msra.mxu0 0
        %2893 = vmatprep.subr.bf16.mxu0 0
        %2894 = vmatpush1.bf16.msra.mxu0 0
        %2895 = vmatprep.subr.bf16.mxu0 0
        %2896 = vmatpush1.bf16.msra.mxu0 0
        %2897 = vmatprep.subr.bf16.mxu0 0
        %2898 = vmatpush1.bf16.msra.mxu0 0
        %2899 = vmatprep.mubr.bf16.mxu0 0
        %2900 = vmatmul.mubr.bf16.gmra.mrb[0].mxu0 %v2783
        %v2901 = vpop.f32.mrb[0].mxu0
        %v2902 = vadd.f32 0.0, %v2901
        %v2903 = vpop.f32.mrb[0].mxu0
        %v2904 = vadd.f32 0.0, %v2903
        %v2905 = vpop.f32.mrb[0].mxu0
        %v2906 = vadd.f32 0.0, %v2905
        %v2907 = vpop.f32.mrb[0].mxu0
        %v2908 = vadd.f32 0.0, %v2907
        %2909 = vmatprep.mubr.bf16.mxu0 0
        %2910 = vmatmul.mubr.bf16.gmra.mrb[0].mxu0 %v2786
        %v2911 = vpop.f32.mrb[0].mxu0
        %v2912 = vadd.f32 0.0, %v2911
        %v2913 = vpop.f32.mrb[0].mxu0
        %v2914 = vadd.f32 0.0, %v2913
        %v2915 = vpop.f32.mrb[0].mxu0
        %v2916 = vadd.f32 0.0, %v2915
        %v2917 = vpop.f32.mrb[0].mxu0
        %v2918 = vadd.f32 0.0, %v2917
        %2919 = vmatprep.mubr.bf16.mxu0 0
        %2920 = vmatmul.mubr.bf16.gmra.mrb[0].mxu0 %v2789
        %v2921 = vpop.f32.mrb[0].mxu0
        %v2922 = vadd.f32 0.0, %v2921
        %v2923 = vpop.f32.mrb[0].mxu0
        %v2924 = vadd.f32 0.0, %v2923
        %v2925 = vpop.f32.mrb[0].mxu0
        %v2926 = vadd.f32 0.0, %v2925
        %v2927 = vpop.f32.mrb[0].mxu0
        %v2928 = vadd.f32 0.0, %v2927
        %2929 = vmatprep.mubr.bf16.mxu0 0
        %2930 = vmatmul.mubr.bf16.gmra.mrb[0].mxu0 %v2792
        %v2931 = vpop.f32.mrb[0].mxu0
        %v2932 = vadd.f32 0.0, %v2931
        %v2933 = vpop.f32.mrb[0].mxu0
        %v2934 = vadd.f32 0.0, %v2933
        %v2935 = vpop.f32.mrb[0].mxu0
        %v2936 = vadd.f32 0.0, %v2935
        %v2937 = vpop.f32.mrb[0].mxu0
        %v2938 = vadd.f32 0.0, %v2937
        %2939 = vdwg.mxu0
        %2940 = vmatprep.subr.bf16.mxu0 %v2735
        %2941 = vmatpush1.bf16.msra.mxu0 %v2734
        %2942 = vmatprep.subr.bf16.mxu0 %v2743
        %2943 = vmatpush1.bf16.msra.mxu0 %v2742
        %2944 = vmatprep.subr.bf16.mxu0 %v2751
        %2945 = vmatpush1.bf16.msra.mxu0 %v2750
        %2946 = vmatprep.subr.bf16.mxu0 %v2759
        %2947 = vmatpush1.bf16.msra.mxu0 %v2758
        %2948 = vmatprep.subr.bf16.mxu0 0
        %2949 = vmatpush1.bf16.msra.mxu0 0
        %2950 = vmatprep.subr.bf16.mxu0 0
        %2951 = vmatpush1.bf16.msra.mxu0 0
        %2952 = vmatprep.subr.bf16.mxu0 0
        %2953 = vmatpush1.bf16.msra.mxu0 0
        %2954 = vmatprep.subr.bf16.mxu0 0
        %2955 = vmatpush1.bf16.msra.mxu0 0
        %2956 = vmatprep.subr.bf16.mxu0 0
        %2957 = vmatpush1.bf16.msra.mxu0 0
        %2958 = vmatprep.subr.bf16.mxu0 0
        %2959 = vmatpush1.bf16.msra.mxu0 0
        %2960 = vmatprep.subr.bf16.mxu0 0
        %2961 = vmatpush1.bf16.msra.mxu0 0
        %2962 = vmatprep.subr.bf16.mxu0 0
        %2963 = vmatpush1.bf16.msra.mxu0 0
        %2964 = vmatprep.subr.bf16.mxu0 0
        %2965 = vmatpush1.bf16.msra.mxu0 0
        %2966 = vmatprep.subr.bf16.mxu0 0
        %2967 = vmatpush1.bf16.msra.mxu0 0
        %2968 = vmatprep.subr.bf16.mxu0 0
        %2969 = vmatpush1.bf16.msra.mxu0 0
        %2970 = vmatprep.subr.bf16.mxu0 0
        %2971 = vmatpush1.bf16.msra.mxu0 0
        %2972 = vmatprep.mubr.bf16.mxu0 0
        %2973 = vmatmul.mubr.bf16.gmra.mrb[0].mxu0 %v2783
        %v2974 = vpop.f32.mrb[0].mxu0
        %v2975 = vadd.f32 0.0, %v2974
        %v2976 = vpop.f32.mrb[0].mxu0
        %v2977 = vadd.f32 0.0, %v2976
        %v2978 = vpop.f32.mrb[0].mxu0
        %v2979 = vadd.f32 0.0, %v2978
        %v2980 = vpop.f32.mrb[0].mxu0
        %v2981 = vadd.f32 0.0, %v2980
        %2982 = vmatprep.mubr.bf16.mxu0 0
        %2983 = vmatmul.mubr.bf16.gmra.mrb[0].mxu0 %v2786
        %v2984 = vpop.f32.mrb[0].mxu0
        %v2985 = vadd.f32 0.0, %v2984
        %v2986 = vpop.f32.mrb[0].mxu0
        %v2987 = vadd.f32 0.0, %v2986
        %v2988 = vpop.f32.mrb[0].mxu0
        %v2989 = vadd.f32 0.0, %v2988
        %v2990 = vpop.f32.mrb[0].mxu0
        %v2991 = vadd.f32 0.0, %v2990
        %2992 = vmatprep.mubr.bf16.mxu0 0
        %2993 = vmatmul.mubr.bf16.gmra.mrb[0].mxu0 %v2789
        %v2994 = vpop.f32.mrb[0].mxu0
        %v2995 = vadd.f32 0.0, %v2994
        %v2996 = vpop.f32.mrb[0].mxu0
        %v2997 = vadd.f32 0.0, %v2996
        %v2998 = vpop.f32.mrb[0].mxu0
        %v2999 = vadd.f32 0.0, %v2998
        %v3000 = vpop.f32.mrb[0].mxu0
        %v3001 = vadd.f32 0.0, %v3000
        %3002 = vmatprep.mubr.bf16.mxu0 0
        %3003 = vmatmul.mubr.bf16.gmra.mrb[0].mxu0 %v2792
        %v3004 = vpop.f32.mrb[0].mxu0
        %v3005 = vadd.f32 0.0, %v3004
        %v3006 = vpop.f32.mrb[0].mxu0
        %v3007 = vadd.f32 0.0, %v3006
        %v3008 = vpop.f32.mrb[0].mxu0
        %v3009 = vadd.f32 0.0, %v3008
        %v3010 = vpop.f32.mrb[0].mxu0
        %v3011 = vadd.f32 0.0, %v3010
        %3012 = vdwg.mxu0
        %3013 = vmatprep.subr.bf16.mxu0 %v2737
        %3014 = vmatpush1.bf16.msra.mxu0 %v2736
        %3015 = vmatprep.subr.bf16.mxu0 %v2745
        %3016 = vmatpush1.bf16.msra.mxu0 %v2744
        %3017 = vmatprep.subr.bf16.mxu0 %v2753
        %3018 = vmatpush1.bf16.msra.mxu0 %v2752
        %3019 = vmatprep.subr.bf16.mxu0 %v2761
        %3020 = vmatpush1.bf16.msra.mxu0 %v2760
        %3021 = vmatprep.subr.bf16.mxu0 0
        %3022 = vmatpush1.bf16.msra.mxu0 0
        %3023 = vmatprep.subr.bf16.mxu0 0
        %3024 = vmatpush1.bf16.msra.mxu0 0
        %3025 = vmatprep.subr.bf16.mxu0 0
        %3026 = vmatpush1.bf16.msra.mxu0 0
        %3027 = vmatprep.subr.bf16.mxu0 0
        %3028 = vmatpush1.bf16.msra.mxu0 0
        %3029 = vmatprep.subr.bf16.mxu0 0
        %3030 = vmatpush1.bf16.msra.mxu0 0
        %3031 = vmatprep.subr.bf16.mxu0 0
        %3032 = vmatpush1.bf16.msra.mxu0 0
        %3033 = vmatprep.subr.bf16.mxu0 0
        %3034 = vmatpush1.bf16.msra.mxu0 0
        %3035 = vmatprep.subr.bf16.mxu0 0
        %3036 = vmatpush1.bf16.msra.mxu0 0
        %3037 = vmatprep.subr.bf16.mxu0 0
        %3038 = vmatpush1.bf16.msra.mxu0 0
        %3039 = vmatprep.subr.bf16.mxu0 0
        %3040 = vmatpush1.bf16.msra.mxu0 0
        %3041 = vmatprep.subr.bf16.mxu0 0
        %3042 = vmatpush1.bf16.msra.mxu0 0
        %3043 = vmatprep.subr.bf16.mxu0 0
        %3044 = vmatpush1.bf16.msra.mxu0 0
        %3045 = vmatprep.mubr.bf16.mxu0 0
        %3046 = vmatmul.mubr.bf16.gmra.mrb[0].mxu0 %v2783
        %v3047 = vpop.f32.mrb[0].mxu0
        %v3048 = vadd.f32 0.0, %v3047
        %v3049 = vpop.f32.mrb[0].mxu0
        %v3050 = vadd.f32 0.0, %v3049
        %v3051 = vpop.f32.mrb[0].mxu0
        %v3052 = vadd.f32 0.0, %v3051
        %v3053 = vpop.f32.mrb[0].mxu0
        %v3054 = vadd.f32 0.0, %v3053
        %3055 = vmatprep.mubr.bf16.mxu0 0
        %3056 = vmatmul.mubr.bf16.gmra.mrb[0].mxu0 %v2786
        %v3057 = vpop.f32.mrb[0].mxu0
        %v3058 = vadd.f32 0.0, %v3057
        %v3059 = vpop.f32.mrb[0].mxu0
        %v3060 = vadd.f32 0.0, %v3059
        %v3061 = vpop.f32.mrb[0].mxu0
        %v3062 = vadd.f32 0.0, %v3061
        %v3063 = vpop.f32.mrb[0].mxu0
        %v3064 = vadd.f32 0.0, %v3063
        %3065 = vmatprep.mubr.bf16.mxu0 0
        %3066 = vmatmul.mubr.bf16.gmra.mrb[0].mxu0 %v2789
        %v3067 = vpop.f32.mrb[0].mxu0
        %v3068 = vadd.f32 0.0, %v3067
        %v3069 = vpop.f32.mrb[0].mxu0
        %v3070 = vadd.f32 0.0, %v3069
        %v3071 = vpop.f32.mrb[0].mxu0
        %v3072 = vadd.f32 0.0, %v3071
        %v3073 = vpop.f32.mrb[0].mxu0
        %v3074 = vadd.f32 0.0, %v3073
        %3075 = vmatprep.mubr.bf16.mxu0 0
        %3076 = vmatmul.mubr.bf16.gmra.mrb[0].mxu0 %v2792
        %v3077 = vpop.f32.mrb[0].mxu0
        %v3078 = vadd.f32 0.0, %v3077
        %v3079 = vpop.f32.mrb[0].mxu0
        %v3080 = vadd.f32 0.0, %v3079
        %v3081 = vpop.f32.mrb[0].mxu0
        %v3082 = vadd.f32 0.0, %v3081
        %v3083 = vpop.f32.mrb[0].mxu0
        %v3084 = vadd.f32 0.0, %v3083
        %3085 = vdwg.mxu0
        %v3086 = vmax.f32 %v2829, 0.0
        %v3087 = vmax.f32 %v2831, 0.0
        %v3088 = vmax.f32 %v2902, 0.0
        %v3089 = vmax.f32 %v2904, 0.0
        %v3090 = vmax.f32 %v2975, 0.0
        %v3091 = vmax.f32 %v2977, 0.0
        %v3092 = vmax.f32 %v3048, 0.0
        %v3093 = vmax.f32 %v3050, 0.0
        %v3094 = vmax.f32 %v2833, 0.0
        %v3095 = vmax.f32 %v2835, 0.0
        %v3096 = vmax.f32 %v2906, 0.0
        %v3097 = vmax.f32 %v2908, 0.0
        %v3098 = vmax.f32 %v2979, 0.0
        %v3099 = vmax.f32 %v2981, 0.0
        %v3100 = vmax.f32 %v3052, 0.0
        %v3101 = vmax.f32 %v3054, 0.0
        %v3102 = vmax.f32 %v2839, 0.0
        %v3103 = vmax.f32 %v2841, 0.0
        %v3104 = vmax.f32 %v2912, 0.0
        %v3105 = vmax.f32 %v2914, 0.0
        %v3106 = vmax.f32 %v2985, 0.0
        %v3107 = vmax.f32 %v2987, 0.0
        %v3108 = vmax.f32 %v3058, 0.0
        %v3109 = vmax.f32 %v3060, 0.0
        %v3110 = vmax.f32 %v2843, 0.0
        %v3111 = vmax.f32 %v2845, 0.0
        %v3112 = vmax.f32 %v2916, 0.0
        %v3113 = vmax.f32 %v2918, 0.0
        %v3114 = vmax.f32 %v2989, 0.0
        %v3115 = vmax.f32 %v2991, 0.0
        %v3116 = vmax.f32 %v3062, 0.0
        %v3117 = vmax.f32 %v3064, 0.0
        %v3118 = vmax.f32 %v2849, 0.0
        %v3119 = vmax.f32 %v2851, 0.0
        %v3120 = vmax.f32 %v2922, 0.0
        %v3121 = vmax.f32 %v2924, 0.0
        %v3122 = vmax.f32 %v2995, 0.0
        %v3123 = vmax.f32 %v2997, 0.0
        %v3124 = vmax.f32 %v3068, 0.0
        %v3125 = vmax.f32 %v3070, 0.0
        %v3126 = vmax.f32 %v2853, 0.0
        %v3127 = vmax.f32 %v2855, 0.0
        %v3128 = vmax.f32 %v2926, 0.0
        %v3129 = vmax.f32 %v2928, 0.0
        %v3130 = vmax.f32 %v2999, 0.0
        %v3131 = vmax.f32 %v3001, 0.0
        %v3132 = vmax.f32 %v3072, 0.0
        %v3133 = vmax.f32 %v3074, 0.0
        %v3134 = vmax.f32 %v2859, 0.0
        %v3135 = vmax.f32 %v2861, 0.0
        %v3136 = vmax.f32 %v2932, 0.0
        %v3137 = vmax.f32 %v2934, 0.0
        %v3138 = vmax.f32 %v3005, 0.0
        %v3139 = vmax.f32 %v3007, 0.0
        %v3140 = vmax.f32 %v3078, 0.0
        %v3141 = vmax.f32 %v3080, 0.0
        %v3142 = vmax.f32 %v2863, 0.0
        %v3143 = vmax.f32 %v2865, 0.0
        %v3144 = vmax.f32 %v2936, 0.0
        %v3145 = vmax.f32 %v2938, 0.0
        %v3146 = vmax.f32 %v3009, 0.0
        %v3147 = vmax.f32 %v3011, 0.0
        %v3148 = vmax.f32 %v3082, 0.0
        %v3149 = vmax.f32 %v3084, 0.0
        %v3150 = vld [vmem:[%s6] sm:$0xf]
        %v3151 = vpack.c.bf16 %v3094, %v3086
        %v3152 = vpack.c.bf16 %v3095, %v3087
        %v3153 = vpack.c.bf16 %v3096, %v3088
        %v3154 = vpack.c.bf16 %v3097, %v3089
        %v3155 = vpack.c.bf16 %v3098, %v3090
        %v3156 = vpack.c.bf16 %v3099, %v3091
        %v3157 = vpack.c.bf16 %v3100, %v3092
        %v3158 = vpack.c.bf16 %v3101, %v3093
        %v3159 = vpack.c.bf16 %v3110, %v3102
        %v3160 = vpack.c.bf16 %v3111, %v3103
        %v3161 = vpack.c.bf16 %v3112, %v3104
        %v3162 = vpack.c.bf16 %v3113, %v3105
        %v3163 = vpack.c.bf16 %v3114, %v3106
        %v3164 = vpack.c.bf16 %v3115, %v3107
        %v3165 = vpack.c.bf16 %v3116, %v3108
        %v3166 = vpack.c.bf16 %v3117, %v3109
        %v3167 = vpack.c.bf16 %v3126, %v3118
        %v3168 = vpack.c.bf16 %v3127, %v3119
        %v3169 = vpack.c.bf16 %v3128, %v3120
        %v3170 = vpack.c.bf16 %v3129, %v3121
        %v3171 = vpack.c.bf16 %v3130, %v3122
        %v3172 = vpack.c.bf16 %v3131, %v3123
        %v3173 = vpack.c.bf16 %v3132, %v3124
        %v3174 = vpack.c.bf16 %v3133, %v3125
        %v3175 = vpack.c.bf16 %v3142, %v3134
        %v3176 = vpack.c.bf16 %v3143, %v3135
        %v3177 = vpack.c.bf16 %v3144, %v3136
        %v3178 = vpack.c.bf16 %v3145, %v3137
        %v3179 = vpack.c.bf16 %v3146, %v3138
        %v3180 = vpack.c.bf16 %v3147, %v3139
        %v3181 = vpack.c.bf16 %v3148, %v3140
        %v3182 = vpack.c.bf16 %v3149, %v3141
        %v3184 = vsel %vm2011, %v3150, 0
        %3186 = vmatprep.subr.bf16.mxu0 %v3152
        %3187 = vmatpush1.bf16.msra.mxu0 %v3151
        %3188 = vmatprep.subr.bf16.mxu0 %v3160
        %3189 = vmatpush1.bf16.msra.mxu0 %v3159
        %3190 = vmatprep.subr.bf16.mxu0 %v3168
        %3191 = vmatpush1.bf16.msra.mxu0 %v3167
        %3192 = vmatprep.subr.bf16.mxu0 %v3176
        %3193 = vmatpush1.bf16.msra.mxu0 %v3175
        %3194 = vmatprep.subr.bf16.mxu0 0
        %3195 = vmatpush1.bf16.msra.mxu0 0
        %3196 = vmatprep.subr.bf16.mxu0 0
        %3197 = vmatpush1.bf16.msra.mxu0 0
        %3198 = vmatprep.subr.bf16.mxu0 0
        %3199 = vmatpush1.bf16.msra.mxu0 0
        %3200 = vmatprep.subr.bf16.mxu0 0
        %3201 = vmatpush1.bf16.msra.mxu0 0
        %3202 = vmatprep.subr.bf16.mxu0 0
        %3203 = vmatpush1.bf16.msra.mxu0 0
        %3204 = vmatprep.subr.bf16.mxu0 0
        %3205 = vmatpush1.bf16.msra.mxu0 0
        %3206 = vmatprep.subr.bf16.mxu0 0
        %3207 = vmatpush1.bf16.msra.mxu0 0
        %3208 = vmatprep.subr.bf16.mxu0 0
        %3209 = vmatpush1.bf16.msra.mxu0 0
        %3210 = vmatprep.subr.bf16.mxu0 0
        %3211 = vmatpush1.bf16.msra.mxu0 0
        %3212 = vmatprep.subr.bf16.mxu0 0
        %3213 = vmatpush1.bf16.msra.mxu0 0
        %3214 = vmatprep.subr.bf16.mxu0 0
        %3215 = vmatpush1.bf16.msra.mxu0 0
        %3216 = vmatprep.subr.bf16.mxu0 0
        %3217 = vmatpush1.bf16.msra.mxu0 0
        %3218 = vmatprep.mubr.bf16.mxu0 0
        %3219 = vmatmul.mubr.bf16.gmra.mrb[0].mxu0 %v3184
        %v3220 = vpop.f32.mrb[0].mxu0
        %v3221 = vadd.f32 0.0, %v3220
        %v3222 = vpop.f32.mrb[0].mxu0
        %v3223 = vadd.f32 0.0, %v3222
        %v3224 = vpop.f32.mrb[0].mxu0
        %v3225 = vpop.f32.mrb[0].mxu0
        %3226 = vdwg.mxu0
        %3227 = vmatprep.subr.bf16.mxu0 %v3154
        %3228 = vmatpush1.bf16.msra.mxu0 %v3153
        %3229 = vmatprep.subr.bf16.mxu0 %v3162
        %3230 = vmatpush1.bf16.msra.mxu0 %v3161
        %3231 = vmatprep.subr.bf16.mxu0 %v3170
        %3232 = vmatpush1.bf16.msra.mxu0 %v3169
        %3233 = vmatprep.subr.bf16.mxu0 %v3178
        %3234 = vmatpush1.bf16.msra.mxu0 %v3177
        %3235 = vmatprep.subr.bf16.mxu0 0
        %3236 = vmatpush1.bf16.msra.mxu0 0
        %3237 = vmatprep.subr.bf16.mxu0 0
        %3238 = vmatpush1.bf16.msra.mxu0 0
        %3239 = vmatprep.subr.bf16.mxu0 0
        %3240 = vmatpush1.bf16.msra.mxu0 0
        %3241 = vmatprep.subr.bf16.mxu0 0
        %3242 = vmatpush1.bf16.msra.mxu0 0
        %3243 = vmatprep.subr.bf16.mxu0 0
        %3244 = vmatpush1.bf16.msra.mxu0 0
        %3245 = vmatprep.subr.bf16.mxu0 0
        %3246 = vmatpush1.bf16.msra.mxu0 0
        %3247 = vmatprep.subr.bf16.mxu0 0
        %3248 = vmatpush1.bf16.msra.mxu0 0
        %3249 = vmatprep.subr.bf16.mxu0 0
        %3250 = vmatpush1.bf16.msra.mxu0 0
        %3251 = vmatprep.subr.bf16.mxu0 0
        %3252 = vmatpush1.bf16.msra.mxu0 0
        %3253 = vmatprep.subr.bf16.mxu0 0
        %3254 = vmatpush1.bf16.msra.mxu0 0
        %3255 = vmatprep.subr.bf16.mxu0 0
        %3256 = vmatpush1.bf16.msra.mxu0 0
        %3257 = vmatprep.subr.bf16.mxu0 0
        %3258 = vmatpush1.bf16.msra.mxu0 0
        %3259 = vmatprep.mubr.bf16.mxu0 0
        %3260 = vmatmul.mubr.bf16.gmra.mrb[0].mxu0 %v3184
        %v3261 = vpop.f32.mrb[0].mxu0
        %v3262 = vadd.f32 0.0, %v3261
        %v3263 = vpop.f32.mrb[0].mxu0
        %v3264 = vadd.f32 0.0, %v3263
        %v3265 = vpop.f32.mrb[0].mxu0
        %v3266 = vpop.f32.mrb[0].mxu0
        %3267 = vdwg.mxu0
        %3268 = vmatprep.subr.bf16.mxu0 %v3156
        %3269 = vmatpush1.bf16.msra.mxu0 %v3155
        %3270 = vmatprep.subr.bf16.mxu0 %v3164
        %3271 = vmatpush1.bf16.msra.mxu0 %v3163
        %3272 = vmatprep.subr.bf16.mxu0 %v3172
        %3273 = vmatpush1.bf16.msra.mxu0 %v3171
        %3274 = vmatprep.subr.bf16.mxu0 %v3180
        %3275 = vmatpush1.bf16.msra.mxu0 %v3179
        %3276 = vmatprep.subr.bf16.mxu0 0
        %3277 = vmatpush1.bf16.msra.mxu0 0
        %3278 = vmatprep.subr.bf16.mxu0 0
        %3279 = vmatpush1.bf16.msra.mxu0 0
        %3280 = vmatprep.subr.bf16.mxu0 0
        %3281 = vmatpush1.bf16.msra.mxu0 0
        %3282 = vmatprep.subr.bf16.mxu0 0
        %3283 = vmatpush1.bf16.msra.mxu0 0
        %3284 = vmatprep.subr.bf16.mxu0 0
        %3285 = vmatpush1.bf16.msra.mxu0 0
        %3286 = vmatprep.subr.bf16.mxu0 0
        %3287 = vmatpush1.bf16.msra.mxu0 0
        %3288 = vmatprep.subr.bf16.mxu0 0
        %3289 = vmatpush1.bf16.msra.mxu0 0
        %3290 = vmatprep.subr.bf16.mxu0 0
        %3291 = vmatpush1.bf16.msra.mxu0 0
        %3292 = vmatprep.subr.bf16.mxu0 0
        %3293 = vmatpush1.bf16.msra.mxu0 0
        %3294 = vmatprep.subr.bf16.mxu0 0
        %3295 = vmatpush1.bf16.msra.mxu0 0
        %3296 = vmatprep.subr.bf16.mxu0 0
        %3297 = vmatpush1.bf16.msra.mxu0 0
        %3298 = vmatprep.subr.bf16.mxu0 0
        %3299 = vmatpush1.bf16.msra.mxu0 0
        %3300 = vmatprep.mubr.bf16.mxu0 0
        %3301 = vmatmul.mubr.bf16.gmra.mrb[0].mxu0 %v3184
        %v3302 = vpop.f32.mrb[0].mxu0
        %v3303 = vadd.f32 0.0, %v3302
        %v3304 = vpop.f32.mrb[0].mxu0
        %v3305 = vadd.f32 0.0, %v3304
        %v3306 = vpop.f32.mrb[0].mxu0
        %v3307 = vpop.f32.mrb[0].mxu0
        %3308 = vdwg.mxu0
        %3309 = vmatprep.subr.bf16.mxu0 %v3158
        %3310 = vmatpush1.bf16.msra.mxu0 %v3157
        %3311 = vmatprep.subr.bf16.mxu0 %v3166
        %3312 = vmatpush1.bf16.msra.mxu0 %v3165
        %3313 = vmatprep.subr.bf16.mxu0 %v3174
        %3314 = vmatpush1.bf16.msra.mxu0 %v3173
        %3315 = vmatprep.subr.bf16.mxu0 %v3182
        %3316 = vmatpush1.bf16.msra.mxu0 %v3181
        %3317 = vmatprep.subr.bf16.mxu0 0
        %3318 = vmatpush1.bf16.msra.mxu0 0
        %3319 = vmatprep.subr.bf16.mxu0 0
        %3320 = vmatpush1.bf16.msra.mxu0 0
        %3321 = vmatprep.subr.bf16.mxu0 0
        %3322 = vmatpush1.bf16.msra.mxu0 0
        %3323 = vmatprep.subr.bf16.mxu0 0
        %3324 = vmatpush1.bf16.msra.mxu0 0
        %3325 = vmatprep.subr.bf16.mxu0 0
        %3326 = vmatpush1.bf16.msra.mxu0 0
        %3327 = vmatprep.subr.bf16.mxu0 0
        %3328 = vmatpush1.bf16.msra.mxu0 0
        %3329 = vmatprep.subr.bf16.mxu0 0
        %3330 = vmatpush1.bf16.msra.mxu0 0
        %3331 = vmatprep.subr.bf16.mxu0 0
        %3332 = vmatpush1.bf16.msra.mxu0 0
        %3333 = vmatprep.subr.bf16.mxu0 0
        %3334 = vmatpush1.bf16.msra.mxu0 0
        %3335 = vmatprep.subr.bf16.mxu0 0
        %3336 = vmatpush1.bf16.msra.mxu0 0
        %3337 = vmatprep.subr.bf16.mxu0 0
        %3338 = vmatpush1.bf16.msra.mxu0 0
        %3339 = vmatprep.subr.bf16.mxu0 0
        %3340 = vmatpush1.bf16.msra.mxu0 0
        %3341 = vmatprep.mubr.bf16.mxu0 0
        %3342 = vmatmul.mubr.bf16.gmra.mrb[0].mxu0 %v3184
        %v3343 = vpop.f32.mrb[0].mxu0
        %v3344 = vadd.f32 0.0, %v3343
        %v3345 = vpop.f32.mrb[0].mxu0
        %v3346 = vadd.f32 0.0, %v3345
        %v3347 = vpop.f32.mrb[0].mxu0
        %v3348 = vpop.f32.mrb[0].mxu0
        %3349 = vdwg.mxu0
        %v3350 = vxor.u32 %v3221, 2147483648
        %v3351 = vxor.u32 %v3223, 2147483648
        %v3352 = vxor.u32 %v3262, 2147483648
        %v3353 = vxor.u32 %v3264, 2147483648
        %v3354 = vxor.u32 %v3303, 2147483648
        %v3355 = vxor.u32 %v3305, 2147483648
        %v3356 = vxor.u32 %v3344, 2147483648
        %v3357 = vxor.u32 %v3346, 2147483648
        %v3358 = vmul.f32 %v3350, 1.442695
        %v3359 = vpow.pop %v3358
        %v3360 = vmul.f32 %v3351, 1.442695
        %v3361 = vpow.pop %v3360
        %v3362 = vmul.f32 %v3352, 1.442695
        %v3363 = vpow.pop %v3362
        %v3364 = vmul.f32 %v3353, 1.442695
        %v3365 = vpow.pop %v3364
        %v3366 = vmul.f32 %v3354, 1.442695
        %v3367 = vpow.pop %v3366
        %v3368 = vmul.f32 %v3355, 1.442695
        %v3369 = vpow.pop %v3368
        %v3370 = vmul.f32 %v3356, 1.442695
        %v3371 = vpow.pop %v3370
        %v3372 = vmul.f32 %v3357, 1.442695
        %v3373 = vpow.pop %v3372
        %v3374 = vadd.f32 %v3359, 1.0
        %v3375 = vadd.f32 %v3361, 1.0
        %v3376 = vadd.f32 %v3363, 1.0
        %v3377 = vadd.f32 %v3365, 1.0
        %v3378 = vadd.f32 %v3367, 1.0
        %v3379 = vadd.f32 %v3369, 1.0
        %v3380 = vadd.f32 %v3371, 1.0
        %v3381 = vadd.f32 %v3373, 1.0
        %v3382 = vrcp.pop %v3374
        %v3383 = vmul.f32 1.0, %v3382
        %v3384 = vrcp.pop %v3375
        %v3385 = vmul.f32 1.0, %v3384
        %v3386 = vrcp.pop %v3376
        %v3387 = vmul.f32 1.0, %v3386
        %v3388 = vrcp.pop %v3377
        %v3389 = vmul.f32 1.0, %v3388
        %v3390 = vrcp.pop %v3378
        %v3391 = vmul.f32 1.0, %v3390
        %v3392 = vrcp.pop %v3379
        %v3393 = vmul.f32 1.0, %v3392
        %v3394 = vrcp.pop %v3380
        %v3395 = vmul.f32 1.0, %v3394
        %v3396 = vrcp.pop %v3381
        %v3397 = vmul.f32 1.0, %v3396
        %v3406 = vcombine.low %v3383, %v3385
        %v3407 = vcombine.low %v3387, %v3389
        %v3408 = vcombine.low %v3391, %v3393
        %v3409 = vcombine.low %v3395, %v3397
        %v3410 = vrot.slane %v3406, 7
        %v3411 = vrot.slane %v3407, 7
        %v3412 = vrot.slane %v3408, 7
        %v3413 = vrot.slane %v3409, 7
        %3418 = vst [vmem:[%s312] sm:$0xee] %v3410
        %3419 = vst [vmem:[%s312 + $0x8] sm:$0xee] %v3411
        %3420 = vst [vmem:[%s312 + $0x10] sm:$0xee] %v3412
        %3421 = vst [vmem:[%s312 + $0x18] sm:$0xee] %v3413
        %s3422 = sand.u32 %s189, 1
        %s3423 = scalar_lea.sflag [#allocation5], %s3422
        %s3424 = sand.u32 %s189, 1
        %s3425 = smul.addr %s3424, 32
        %s3426 = scalar_lea.vmem [#allocation6], %s3425
        // Predicated region
        $region53: #{tpu_custom_call.1} parent=47 // pred_check
          %p3427 = pneg %p199
        $region54: #{tpu_custom_call.1} parent=47 // pred_check_branch
          %3429 = sbr.rel (%p3427) target = $region56
        $region55: #{tpu_custom_call.1} parent=47 // pred_region
          %s3430 = smul.u32 8, %s24
          %s3432 = ssub.s32 512, 512
          %3433 = vsyncadd %s3423, %s3432
          %s3434 = smul.addr %s3430, 64
          %s3435 = scalar_lea.hbm %s7, %s3434
          %s3437 = sshll.u32 %s3426, 4
          %s3438 = int_to_ptr.vmem [resolvable:$true] %s3437
          %3440 = dma.vmem_to_hbm [thread:$0]  %s3438, 512, %s3435, %s3423
        $region56: #{tpu_custom_call.1} parent=47 // pred_fallthru
          _
      $region48: #{tpu_custom_call.1} parent=5 // pred_fallthru
        _
      %p3441 = scmp.le.s32.totalorder 2, %s19
      // Predicated region
      $region57: #{tpu_custom_call.1} parent=5 // pred_check
        %p3442 = pneg %p3441
      $region58: #{tpu_custom_call.1} parent=5 // pred_check_branch
        %3444 = sbr.rel (%p3442) target = $region60
      $region59: #{tpu_custom_call.1} parent=5 // pred_region
        %s3445 = ssub.s32 %s19, 2
        // Predicated region
        $region61: #{tpu_custom_call.1} parent=59 // pred_check
          %p3446 = pneg %p205
        $region62: #{tpu_custom_call.1} parent=59 // pred_check_branch
          %3448 = sbr.rel (%p3446) target = $region64
        $region63: #{tpu_custom_call.1} parent=59 // pred_region
          %s3449 = sand.u32 %s190, 1
          %s3450 = scalar_lea.sflag [#allocation5], %s3449
          %s3451 = sand.u32 %s190, 1
          %s3452 = smul.addr %s3451, 32
          %s3453 = scalar_lea.vmem [#allocation6], %s3452
          %3454 = dma.done %s3450, 512
        $region64: #{tpu_custom_call.1} parent=59 // pred_fallthru
          _
      $region60: #{tpu_custom_call.1} parent=5 // pred_fallthru
        _
    $region6: #{tpu_custom_call.1} parent=1 // loop_footer
      %s23 = sadd.s32 1, %s19
    $region7: #{tpu_custom_call.1} parent=1 // loop_footer_branch
      %18 = sbr.rel target = $region3
    $region8: #{tpu_custom_call.1} parent=1 // loop_exit
      _
    %3455 = vsyncpa [#allocation4], 1
    %s3456 = scalar_lea.sflag [#allocation4], 1
    %3457 = vsyncpa %s3456, 1
    %3458 = vsyncpa [#allocation5], 1
    %s3459 = scalar_lea.sflag [#allocation5], 1
    %3460 = vsyncpa %s3459, 1

</llo_original>
